<compile_context>
chip_gen: v7x
topology: tpu7x:2x2x1
jax: 0.10.0
libtpu: 0.0.40
codegen_flags: <defaults>
</compile_context>

<pallas_src>
import functools

import jax
import jax.numpy as jnp
from jax import lax
from jax.experimental import pallas as pl
from jax.experimental.pallas import tpu as pltpu

KS = 3            # conv kernel size
NEG_SLOPE = 0.01  # nn.LeakyReLU default negative_slope


def _shift_hw(p, oy, ox):
    """p: (nb, H, W, C).  result[:, y, x, :] = p[:, y+oy, x+ox, :], zero outside.

    Implements SAME zero-padding taps in-register (cheap slice + concat on the
    outer/sublane axes) -- no padded scratch buffer, no halo refresh.
    """
    nb, H, W, C = p.shape
    if oy > 0:
        p = jnp.concatenate([p[:, oy:], jnp.zeros((nb, oy, W, C), p.dtype)], axis=1)
    elif oy < 0:
        p = jnp.concatenate([jnp.zeros((nb, -oy, W, C), p.dtype), p[:, :oy]], axis=1)
    if ox > 0:
        p = jnp.concatenate([p[:, :, ox:], jnp.zeros((nb, H, ox, C), p.dtype)], axis=2)
    elif ox < 0:
        p = jnp.concatenate([jnp.zeros((nb, H, -ox, C), p.dtype), p[:, :, :ox]], axis=2)
    return p


def trans_guide_kernel(x_ref, w1_ref, b1_ref, wa_ref, w2_ref, b2_ref, out_ref,
                       *, lane_dense_out):
    nb, H, W, cin = x_ref.shape
    cint = w1_ref.shape[1]        # ch
    cout = w2_ref.shape[1]        # 3
    M = nb * H * W

    x = x_ref[...]                                                 # (nb,H,W,6) bf16

    # ---- conv1 (6 -> ch): 9 shifted taps -> ONE fat im2col matmul on the MXU
    patch1 = jnp.concatenate(
        [_shift_hw(x, dy - 1, dx - 1).reshape(M, cin)
         for dy in range(KS) for dx in range(KS)], axis=-1)        # (M, 9*cin) bf16
    y1 = jnp.dot(patch1, w1_ref[...], preferred_element_type=jnp.float32)
    y1 = y1 + b1_ref[...]                                          # (M, ch) f32
    y1 = jnp.where(y1 > 0, y1, NEG_SLOPE * y1)                     # LeakyReLU
    y1 = y1.reshape(nb, H, W, cint)

    # ---- SpatialAttention(kernel_size=3): f32 VPU taps, weights from SMEM ----
    # (no MXU, no scratch, no halo; zero taps at the border == SAME padding)
    avg = jnp.mean(y1, axis=-1, keepdims=True)                     # (nb,H,W,1) f32
    mx = jnp.max(y1, axis=-1, keepdims=True)                       # (nb,H,W,1) f32
    att = jnp.zeros_like(avg)
    for dy in range(KS):
        for dx in range(KS):
            k = dy * KS + dx
            att = att + (wa_ref[k, 0] * _shift_hw(avg, dy - 1, dx - 1) +
                         wa_ref[k, 1] * _shift_hw(mx, dy - 1, dx - 1))
    gate = 1.0 / (1.0 + jnp.exp(-att))                             # sigmoid, f32
    y2 = (y1 * gate).astype(jnp.bfloat16)                          # (nb,H,W,ch)

    # ---- conv2 (ch -> 3): 9 shifted taps -> ONE fat im2col matmul on the MXU
    patch2 = jnp.concatenate(
        [_shift_hw(y2, dy - 1, dx - 1).reshape(M, cint)
         for dy in range(KS) for dx in range(KS)], axis=-1)        # (M, 9*ch) bf16
    out = jnp.dot(patch2, w2_ref[...], preferred_element_type=jnp.float32)
    out = out + b2_ref[...]                                        # (M, 3) f32

    if lane_dense_out:
        # One wide lane-dense row per image (channel-last element order):
        # unmasked vst instead of per-pixel masked stores on a 3-wide minor.
        out_ref[...] = out.reshape(nb, 1, H * W * cout)
    else:
        out_ref[...] = out.reshape(nb, H, W, cout)


def _pick_batch_block(n, h, w, target_rows=2048, min_steps=2):
    """Largest divisor of n with block*h*w <= target_rows, keeping >= min_steps
    grid steps so the 'parallel' axis can shard across TensorCores (v7x)."""
    cap = max(1, target_rows // (h * w))
    if n >= min_steps:
        cap = min(cap, n // min_steps)
    cap = max(1, cap)
    for d in range(min(n, cap), 0, -1):
        if n % d == 0:
            return d
    return 1


def _vmem_limit_bytes(nb, H, W, cin, cint, cout):
    """Rough per-step VMEM budget (raw bytes, 2x headroom for relayouts and
    spills; I/O blocks double-buffered).  Floor at the common 32 MiB default,
    cap at 64 MiB so the request is valid on every generation (v7x)."""
    bf16, f32 = 2, 4
    in_blk = nb * H * W * cin * bf16
    out_blk = nb * H * W * cout * f32
    patches = nb * H * W * 9 * (cin + cint) * bf16      # im2col temporaries
    acts = nb * H * W * (3 * cint + 8) * f32            # y1 / y2 / attention
    need = 2 * (in_blk + out_blk) + patches + acts
    return int(min(64 << 20, max(32 << 20, 2 * need)))


def _forward_impl(x_nchw, params, lane_dense_out):
    N, cin, H, W = x_nchw.shape
    cint = params["w1"].shape[-1]
    cout = params["w2"].shape[-1]

    # NCHW -> NHWC fused with the bf16 cast (one XLA pass; halves input HBM
    # traffic + input double-buffer VMEM with no extra precision loss, since
    # the conv matmuls run with bf16 inputs anyway).  No pre-padding needed:
    # SAME-padding taps are built in-register inside the kernel.
    x = jnp.transpose(x_nchw, (0, 2, 3, 1)).astype(jnp.bfloat16)

    # 3x3 weights flattened to (9*Cin, Cout) for the im2col matmuls (bf16);
    # biases f32; spatial-attention weights stay f32 and go to SMEM as scalars.
    # NOTE: real PyTorch Conv2d weights are (Cout, Cin, 3, 3); here params are
    # already provided as (9, Cin, Cout).
    w1 = params["w1"].reshape(KS * KS * cin, cint).astype(jnp.bfloat16)
    w2 = params["w2"].reshape(KS * KS * cint, cout).astype(jnp.bfloat16)
    wa = params["wa"].reshape(KS * KS, 2).astype(jnp.float32)
    b1 = params["b1"].astype(jnp.float32)
    b2 = params["b2"].astype(jnp.float32)

    nb = _pick_batch_block(N, H, W)      # images packed per grid step
    grid = (N // nb,)                    # >= 2 steps whenever N >= 2

    def full(shape):
        nd = len(shape)
        return pl.BlockSpec(shape, lambda b: (0,) * nd)

    if lane_dense_out:
        out_sds = jax.ShapeDtypeStruct((N, 1, H * W * cout), jnp.float32)
        out_spec = pl.BlockSpec((nb, 1, H * W * cout), lambda b: (b, 0, 0))
    else:
        out_sds = jax.ShapeDtypeStruct((N, H, W, cout), jnp.float32)
        out_spec = pl.BlockSpec((nb, H, W, cout), lambda b: (b, 0, 0, 0))

    grid_spec = pltpu.PrefetchScalarGridSpec(
        num_scalar_prefetch=0,
        grid=grid,
        in_specs=[
            pl.BlockSpec((nb, H, W, cin), lambda b: (b, 0, 0, 0)),   # input block
            full(w1.shape), full(b1.shape),                          # conv1
            pl.BlockSpec(memory_space=pltpu.MemorySpace.SMEM),       # wa (9,2) f32
            full(w2.shape), full(b2.shape),                          # conv2
        ],
        out_specs=out_spec,
    )

    out = pl.pallas_call(
        functools.partial(trans_guide_kernel, lane_dense_out=lane_dense_out),
        out_shape=out_sds,
        grid_spec=grid_spec,
        compiler_params=pltpu.CompilerParams(
            dimension_semantics=("parallel",),
            vmem_limit_bytes=_vmem_limit_bytes(nb, H, W, cin, cint, cout)),
    )(x, w1, b1, wa, w2, b2)

    if lane_dense_out:
        out = out.reshape(N, H, W, cout)       # free (element order preserved)
    return jnp.transpose(out, (0, 3, 1, 2))    # single interface NCHW transpose


def trans_guide_forward(x_nchw, params):
    """Trans_guide forward.  x_nchw: (N, 6, H, W) f32 -> (N, 3, H, W) f32."""
    try:
        out = _forward_impl(x_nchw, params, lane_dense_out=True)
        return jax.block_until_ready(out)
    except Exception:
        # TODO(synk): drop this compatibility fallback once the lane-dense
        #             (M,3) -> (nb,1,H*W*3) relayout is confirmed on all
        #             deployed Mosaic versions; semantics are identical.
        return _forward_impl(x_nchw, params, lane_dense_out=False)


# ------------------------- pure-JAX reference (f32) -------------------------
def _conv3x3_ref(x, w9, b=None):
    kk, cin, cout = w9.shape
    w = w9.reshape(KS, KS, cin, cout)
    y = lax.conv_general_dilated(
        x, w, window_strides=(1, 1), padding="SAME",
        dimension_numbers=("NHWC", "HWIO", "NHWC"),
        precision=lax.Precision.HIGHEST)
    return y if b is None else y + b


def trans_guide_ref(x_nchw, p):
    x = jnp.transpose(x_nchw, (0, 2, 3, 1))
    y1 = _conv3x3_ref(x, p["w1"], p["b1"])
    y1 = jnp.where(y1 > 0, y1, NEG_SLOPE * y1)
    avg = jnp.mean(y1, axis=-1, keepdims=True)
    mx = jnp.max(y1, axis=-1, keepdims=True)
    att = _conv3x3_ref(jnp.concatenate([avg, mx], axis=-1), p["wa"])
    y2 = jax.nn.sigmoid(att) * y1
    out = _conv3x3_ref(y2, p["w2"], p["b2"])
    return jnp.transpose(out, (0, 3, 1, 2))


# ------------------------------- main ---------------------------------------
if __name__ == "__main__":
    N, H, W = 2, 16, 16
    in_ch, ch, out_ch = 6, 16, 3     # Trans_guide: Conv2d(6, ch) ... Conv2d(ch, 3)

    key = jax.random.PRNGKey(0)
    keys = jax.random.split(key, 6)

    def winit(k, shape, scale=0.1):
        return (scale * jax.random.normal(k, shape)).astype(jnp.float32)

    params = {
        "w1": winit(keys[0], (KS * KS, in_ch, ch)),   # conv1 weight (9, 6, ch)
        "b1": winit(keys[1], (1, ch)),                # conv1 bias
        "wa": winit(keys[2], (KS * KS, 2, 1)),        # spatial-attn conv (no bias)
        "w2": winit(keys[3], (KS * KS, ch, out_ch)),  # conv2 weight (9, ch, 3)
        "b2": winit(keys[4], (1, out_ch)),            # conv2 bias
    }

    x = jax.random.normal(keys[5], (N, in_ch, H, W), dtype=jnp.float32)

    out = jax.block_until_ready(trans_guide_forward(x, params))
    ref = jax.block_until_ready(trans_guide_ref(x, params))

    assert out.shape == (N, out_ch, H, W)
    # Conv matmuls use bf16 inputs (f32 accumulate); the attention gate is now
    # full f32, so this tolerance is a conservative guard for the bf16 convs.
    assert jnp.allclose(out, ref, atol=5e-2, rtol=5e-2), "mismatch vs reference"

    print("KERNEL_OK")
</pallas_src>

<mosaic_0001>
module attributes {stable_mosaic.version = 11 : i64} {
  func.func @trans_guide_kernel(%arg0: i32, %arg1: memref<1x16x16x6xbf16, #tpu.memory_space<vmem>>, %arg2: memref<54x16xbf16, #tpu.memory_space<vmem>>, %arg3: memref<1x16xf32, #tpu.memory_space<vmem>>, %arg4: memref<9x2xf32, #tpu.memory_space<smem>>, %arg5: memref<144x3xbf16, #tpu.memory_space<vmem>>, %arg6: memref<1x3xf32, #tpu.memory_space<vmem>>, %arg7: memref<1x1x768xf32, #tpu.memory_space<vmem>>) attributes {dimension_semantics = [#tpu.dimension_semantics<parallel>], iteration_bounds = array<i64: 2>, scalar_prefetch = 0 : i64, scratch_operands = 0 : i64, tpu.core_type = #tpu.core_type<tc>, window_params = [{transform_indices = @transform_0, window_bounds = array<i64: 1, 16, 16, 6>}, {pipeline_mode = #tpu.pipeline_mode<synchronous>, transform_indices = @transform_1, window_bounds = array<i64: 54, 16>}, {pipeline_mode = #tpu.pipeline_mode<synchronous>, transform_indices = @transform_2, window_bounds = array<i64: 1, 16>}, {transform_indices = @transform_3, window_bounds = array<i64: 9, 2>}, {pipeline_mode = #tpu.pipeline_mode<synchronous>, transform_indices = @transform_4, window_bounds = array<i64: 144, 3>}, {pipeline_mode = #tpu.pipeline_mode<synchronous>, transform_indices = @transform_5, window_bounds = array<i64: 1, 3>}, {transform_indices = @transform_6, window_bounds = array<i64: 1, 1, 768>}]} {
    %c0 = arith.constant 0 : index
    %c0_0 = arith.constant 0 : index
    %c0_1 = arith.constant 0 : index
    %c0_2 = arith.constant 0 : index
    %0 = vector.load %arg1[%c0, %c0_0, %c0_1, %c0_2] : memref<1x16x16x6xbf16, #tpu.memory_space<vmem>>, vector<1x16x16x6xbf16>
    %cst = arith.constant 0.000000e+00 : bf16
    %1 = vector.broadcast %cst : bf16 to vector<1x1x16x6xbf16>
    %2 = vector.extract_strided_slice %0 {offsets = [0, 0, 0, 0], sizes = [1, 15, 16, 6], strides = [1, 1, 1, 1]} : vector<1x16x16x6xbf16> to vector<1x15x16x6xbf16>
    %3 = tpu.concatenate %1, %2 in 1 : vector<1x1x16x6xbf16>, vector<1x15x16x6xbf16> -> vector<1x16x16x6xbf16>
    %cst_3 = arith.constant 0.000000e+00 : bf16
    %4 = vector.broadcast %cst_3 : bf16 to vector<1x16x1x6xbf16>
    %5 = vector.extract_strided_slice %3 {offsets = [0, 0, 0, 0], sizes = [1, 16, 15, 6], strides = [1, 1, 1, 1]} : vector<1x16x16x6xbf16> to vector<1x16x15x6xbf16>
    %6 = tpu.concatenate %4, %5 in 2 : vector<1x16x1x6xbf16>, vector<1x16x15x6xbf16> -> vector<1x16x16x6xbf16>
    %7 = vector.shape_cast %6 : vector<1x16x16x6xbf16> to vector<256x6xbf16>
    %cst_4 = arith.constant 0.000000e+00 : bf16
    %8 = vector.broadcast %cst_4 : bf16 to vector<1x1x16x6xbf16>
    %9 = vector.extract_strided_slice %0 {offsets = [0, 0, 0, 0], sizes = [1, 15, 16, 6], strides = [1, 1, 1, 1]} : vector<1x16x16x6xbf16> to vector<1x15x16x6xbf16>
    %10 = tpu.concatenate %8, %9 in 1 : vector<1x1x16x6xbf16>, vector<1x15x16x6xbf16> -> vector<1x16x16x6xbf16>
    %11 = vector.shape_cast %10 : vector<1x16x16x6xbf16> to vector<256x6xbf16>
    %cst_5 = arith.constant 0.000000e+00 : bf16
    %12 = vector.broadcast %cst_5 : bf16 to vector<1x1x16x6xbf16>
    %13 = vector.extract_strided_slice %0 {offsets = [0, 0, 0, 0], sizes = [1, 15, 16, 6], strides = [1, 1, 1, 1]} : vector<1x16x16x6xbf16> to vector<1x15x16x6xbf16>
    %14 = tpu.concatenate %12, %13 in 1 : vector<1x1x16x6xbf16>, vector<1x15x16x6xbf16> -> vector<1x16x16x6xbf16>
    %15 = vector.extract_strided_slice %14 {offsets = [0, 0, 1, 0], sizes = [1, 16, 15, 6], strides = [1, 1, 1, 1]} : vector<1x16x16x6xbf16> to vector<1x16x15x6xbf16>
    %cst_6 = arith.constant 0.000000e+00 : bf16
    %16 = vector.broadcast %cst_6 : bf16 to vector<1x16x1x6xbf16>
    %17 = tpu.concatenate %15, %16 in 2 : vector<1x16x15x6xbf16>, vector<1x16x1x6xbf16> -> vector<1x16x16x6xbf16>
    %18 = vector.shape_cast %17 : vector<1x16x16x6xbf16> to vector<256x6xbf16>
    %cst_7 = arith.constant 0.000000e+00 : bf16
    %19 = vector.broadcast %cst_7 : bf16 to vector<1x16x1x6xbf16>
    %20 = vector.extract_strided_slice %0 {offsets = [0, 0, 0, 0], sizes = [1, 16, 15, 6], strides = [1, 1, 1, 1]} : vector<1x16x16x6xbf16> to vector<1x16x15x6xbf16>
    %21 = tpu.concatenate %19, %20 in 2 : vector<1x16x1x6xbf16>, vector<1x16x15x6xbf16> -> vector<1x16x16x6xbf16>
    %22 = vector.shape_cast %21 : vector<1x16x16x6xbf16> to vector<256x6xbf16>
    %23 = vector.shape_cast %0 : vector<1x16x16x6xbf16> to vector<256x6xbf16>
    %24 = vector.extract_strided_slice %0 {offsets = [0, 0, 1, 0], sizes = [1, 16, 15, 6], strides = [1, 1, 1, 1]} : vector<1x16x16x6xbf16> to vector<1x16x15x6xbf16>
    %cst_8 = arith.constant 0.000000e+00 : bf16
    %25 = vector.broadcast %cst_8 : bf16 to vector<1x16x1x6xbf16>
    %26 = tpu.concatenate %24, %25 in 2 : vector<1x16x15x6xbf16>, vector<1x16x1x6xbf16> -> vector<1x16x16x6xbf16>
    %27 = vector.shape_cast %26 : vector<1x16x16x6xbf16> to vector<256x6xbf16>
    %28 = vector.extract_strided_slice %0 {offsets = [0, 1, 0, 0], sizes = [1, 15, 16, 6], strides = [1, 1, 1, 1]} : vector<1x16x16x6xbf16> to vector<1x15x16x6xbf16>
    %cst_9 = arith.constant 0.000000e+00 : bf16
    %29 = vector.broadcast %cst_9 : bf16 to vector<1x1x16x6xbf16>
    %30 = tpu.concatenate %28, %29 in 1 : vector<1x15x16x6xbf16>, vector<1x1x16x6xbf16> -> vector<1x16x16x6xbf16>
    %cst_10 = arith.constant 0.000000e+00 : bf16
    %31 = vector.broadcast %cst_10 : bf16 to vector<1x16x1x6xbf16>
    %32 = vector.extract_strided_slice %30 {offsets = [0, 0, 0, 0], sizes = [1, 16, 15, 6], strides = [1, 1, 1, 1]} : vector<1x16x16x6xbf16> to vector<1x16x15x6xbf16>
    %33 = tpu.concatenate %31, %32 in 2 : vector<1x16x1x6xbf16>, vector<1x16x15x6xbf16> -> vector<1x16x16x6xbf16>
    %34 = vector.shape_cast %33 : vector<1x16x16x6xbf16> to vector<256x6xbf16>
    %35 = vector.extract_strided_slice %0 {offsets = [0, 1, 0, 0], sizes = [1, 15, 16, 6], strides = [1, 1, 1, 1]} : vector<1x16x16x6xbf16> to vector<1x15x16x6xbf16>
    %cst_11 = arith.constant 0.000000e+00 : bf16
    %36 = vector.broadcast %cst_11 : bf16 to vector<1x1x16x6xbf16>
    %37 = tpu.concatenate %35, %36 in 1 : vector<1x15x16x6xbf16>, vector<1x1x16x6xbf16> -> vector<1x16x16x6xbf16>
    %38 = vector.shape_cast %37 : vector<1x16x16x6xbf16> to vector<256x6xbf16>
    %39 = vector.extract_strided_slice %0 {offsets = [0, 1, 0, 0], sizes = [1, 15, 16, 6], strides = [1, 1, 1, 1]} : vector<1x16x16x6xbf16> to vector<1x15x16x6xbf16>
    %cst_12 = arith.constant 0.000000e+00 : bf16
    %40 = vector.broadcast %cst_12 : bf16 to vector<1x1x16x6xbf16>
    %41 = tpu.concatenate %39, %40 in 1 : vector<1x15x16x6xbf16>, vector<1x1x16x6xbf16> -> vector<1x16x16x6xbf16>
    %42 = vector.extract_strided_slice %41 {offsets = [0, 0, 1, 0], sizes = [1, 16, 15, 6], strides = [1, 1, 1, 1]} : vector<1x16x16x6xbf16> to vector<1x16x15x6xbf16>
    %cst_13 = arith.constant 0.000000e+00 : bf16
    %43 = vector.broadcast %cst_13 : bf16 to vector<1x16x1x6xbf16>
    %44 = tpu.concatenate %42, %43 in 2 : vector<1x16x15x6xbf16>, vector<1x16x1x6xbf16> -> vector<1x16x16x6xbf16>
    %45 = vector.shape_cast %44 : vector<1x16x16x6xbf16> to vector<256x6xbf16>
    %46 = tpu.concatenate %7, %11, %18, %22, %23, %27, %34, %38, %45 in 1 : vector<256x6xbf16>, vector<256x6xbf16>, vector<256x6xbf16>, vector<256x6xbf16>, vector<256x6xbf16>, vector<256x6xbf16>, vector<256x6xbf16>, vector<256x6xbf16>, vector<256x6xbf16> -> vector<256x54xbf16>
    %c0_14 = arith.constant 0 : index
    %c0_15 = arith.constant 0 : index
    %47 = vector.load %arg2[%c0_14, %c0_15] : memref<54x16xbf16, #tpu.memory_space<vmem>>, vector<54x16xbf16>
    %cst_16 = arith.constant dense<0.000000e+00> : vector<256x16xf32>
    %48 = tpu.matmul %46, %47, %cst_16 {dimension_numbers = #tpu.dot_dimension_numbers<[1], [0], [0], [1], [0, 0, 1, 1], [], []>} : vector<256x54xbf16>, vector<54x16xbf16>, vector<256x16xf32> -> vector<256x16xf32>
    %c0_17 = arith.constant 0 : index
    %c0_18 = arith.constant 0 : index
    %49 = vector.load %arg3[%c0_17, %c0_18] : memref<1x16xf32, #tpu.memory_space<vmem>>, vector<1x16xf32>
    %50 = vector.broadcast %49 : vector<1x16xf32> to vector<256x16xf32>
    %51 = arith.addf %48, %50 : vector<256x16xf32>
    %cst_19 = arith.constant 0.000000e+00 : f32
    %52 = vector.broadcast %cst_19 : f32 to vector<256x16xf32>
    %53 = arith.cmpf ogt, %51, %52 : vector<256x16xf32>
    %cst_20 = arith.constant 0.00999999977 : f32
    %54 = vector.broadcast %cst_20 : f32 to vector<256x16xf32>
    %55 = arith.mulf %54, %51 : vector<256x16xf32>
    %56 = arith.select %53, %51, %55 : vector<256x16xi1>, vector<256x16xf32>
    %57 = vector.shape_cast %56 : vector<256x16xf32> to vector<1x16x16x16xf32>
    %cst_21 = arith.constant dense<0.000000e+00> : vector<1x16x16xf32>
    %58 = vector.multi_reduction <add>, %57, %cst_21 [3] : vector<1x16x16x16xf32> to vector<1x16x16xf32>
    %59 = vector.shape_cast %58 : vector<1x16x16xf32> to vector<1x16x16x1xf32>
    %cst_22 = arith.constant 1.600000e+01 : f32
    %60 = vector.broadcast %cst_22 : f32 to vector<1x16x16x1xf32>
    %61 = arith.divf %59, %60 : vector<1x16x16x1xf32>
    %cst_23 = arith.constant dense<0xFF800000> : vector<1x16x16xf32>
    %62 = vector.multi_reduction <maximumf>, %57, %cst_23 [3] : vector<1x16x16x16xf32> to vector<1x16x16xf32>
    %63 = vector.shape_cast %62 : vector<1x16x16xf32> to vector<1x16x16x1xf32>
    %cst_24 = arith.constant 0.000000e+00 : f32
    %64 = vector.broadcast %cst_24 : f32 to vector<1x16x16x1xf32>
    %c0_25 = arith.constant 0 : index
    %c0_26 = arith.constant 0 : index
    %65 = memref.load %arg4[%c0_25, %c0_26] : memref<9x2xf32, #tpu.memory_space<smem>>
    %cst_27 = arith.constant 0.000000e+00 : f32
    %66 = vector.broadcast %cst_27 : f32 to vector<1x1x16x1xf32>
    %67 = vector.extract_strided_slice %61 {offsets = [0, 0, 0, 0], sizes = [1, 15, 16, 1], strides = [1, 1, 1, 1]} : vector<1x16x16x1xf32> to vector<1x15x16x1xf32>
    %68 = tpu.concatenate %66, %67 in 1 : vector<1x1x16x1xf32>, vector<1x15x16x1xf32> -> vector<1x16x16x1xf32>
    %cst_28 = arith.constant 0.000000e+00 : f32
    %69 = vector.broadcast %cst_28 : f32 to vector<1x16x1x1xf32>
    %70 = vector.extract_strided_slice %68 {offsets = [0, 0, 0, 0], sizes = [1, 16, 15, 1], strides = [1, 1, 1, 1]} : vector<1x16x16x1xf32> to vector<1x16x15x1xf32>
    %71 = tpu.concatenate %69, %70 in 2 : vector<1x16x1x1xf32>, vector<1x16x15x1xf32> -> vector<1x16x16x1xf32>
    %72 = vector.broadcast %65 : f32 to vector<1x16x16x1xf32>
    %73 = arith.mulf %72, %71 : vector<1x16x16x1xf32>
    %c0_29 = arith.constant 0 : index
    %c1 = arith.constant 1 : index
    %74 = memref.load %arg4[%c0_29, %c1] : memref<9x2xf32, #tpu.memory_space<smem>>
    %cst_30 = arith.constant 0.000000e+00 : f32
    %75 = vector.broadcast %cst_30 : f32 to vector<1x1x16x1xf32>
    %76 = vector.extract_strided_slice %63 {offsets = [0, 0, 0, 0], sizes = [1, 15, 16, 1], strides = [1, 1, 1, 1]} : vector<1x16x16x1xf32> to vector<1x15x16x1xf32>
    %77 = tpu.concatenate %75, %76 in 1 : vector<1x1x16x1xf32>, vector<1x15x16x1xf32> -> vector<1x16x16x1xf32>
    %cst_31 = arith.constant 0.000000e+00 : f32
    %78 = vector.broadcast %cst_31 : f32 to vector<1x16x1x1xf32>
    %79 = vector.extract_strided_slice %77 {offsets = [0, 0, 0, 0], sizes = [1, 16, 15, 1], strides = [1, 1, 1, 1]} : vector<1x16x16x1xf32> to vector<1x16x15x1xf32>
    %80 = tpu.concatenate %78, %79 in 2 : vector<1x16x1x1xf32>, vector<1x16x15x1xf32> -> vector<1x16x16x1xf32>
    %81 = vector.broadcast %74 : f32 to vector<1x16x16x1xf32>
    %82 = arith.mulf %81, %80 : vector<1x16x16x1xf32>
    %83 = arith.addf %73, %82 : vector<1x16x16x1xf32>
    %84 = arith.addf %64, %83 : vector<1x16x16x1xf32>
    %c1_32 = arith.constant 1 : index
    %c0_33 = arith.constant 0 : index
    %85 = memref.load %arg4[%c1_32, %c0_33] : memref<9x2xf32, #tpu.memory_space<smem>>
    %cst_34 = arith.constant 0.000000e+00 : f32
    %86 = vector.broadcast %cst_34 : f32 to vector<1x1x16x1xf32>
    %87 = vector.extract_strided_slice %61 {offsets = [0, 0, 0, 0], sizes = [1, 15, 16, 1], strides = [1, 1, 1, 1]} : vector<1x16x16x1xf32> to vector<1x15x16x1xf32>
    %88 = tpu.concatenate %86, %87 in 1 : vector<1x1x16x1xf32>, vector<1x15x16x1xf32> -> vector<1x16x16x1xf32>
    %89 = vector.broadcast %85 : f32 to vector<1x16x16x1xf32>
    %90 = arith.mulf %89, %88 : vector<1x16x16x1xf32>
    %c1_35 = arith.constant 1 : index
    %c1_36 = arith.constant 1 : index
    %91 = memref.load %arg4[%c1_35, %c1_36] : memref<9x2xf32, #tpu.memory_space<smem>>
    %cst_37 = arith.constant 0.000000e+00 : f32
    %92 = vector.broadcast %cst_37 : f32 to vector<1x1x16x1xf32>
    %93 = vector.extract_strided_slice %63 {offsets = [0, 0, 0, 0], sizes = [1, 15, 16, 1], strides = [1, 1, 1, 1]} : vector<1x16x16x1xf32> to vector<1x15x16x1xf32>
    %94 = tpu.concatenate %92, %93 in 1 : vector<1x1x16x1xf32>, vector<1x15x16x1xf32> -> vector<1x16x16x1xf32>
    %95 = vector.broadcast %91 : f32 to vector<1x16x16x1xf32>
    %96 = arith.mulf %95, %94 : vector<1x16x16x1xf32>
    %97 = arith.addf %90, %96 : vector<1x16x16x1xf32>
    %98 = arith.addf %84, %97 : vector<1x16x16x1xf32>
    %c2 = arith.constant 2 : index
    %c0_38 = arith.constant 0 : index
    %99 = memref.load %arg4[%c2, %c0_38] : memref<9x2xf32, #tpu.memory_space<smem>>
    %cst_39 = arith.constant 0.000000e+00 : f32
    %100 = vector.broadcast %cst_39 : f32 to vector<1x1x16x1xf32>
    %101 = vector.extract_strided_slice %61 {offsets = [0, 0, 0, 0], sizes = [1, 15, 16, 1], strides = [1, 1, 1, 1]} : vector<1x16x16x1xf32> to vector<1x15x16x1xf32>
    %102 = tpu.concatenate %100, %101 in 1 : vector<1x1x16x1xf32>, vector<1x15x16x1xf32> -> vector<1x16x16x1xf32>
    %103 = vector.extract_strided_slice %102 {offsets = [0, 0, 1, 0], sizes = [1, 16, 15, 1], strides = [1, 1, 1, 1]} : vector<1x16x16x1xf32> to vector<1x16x15x1xf32>
    %cst_40 = arith.constant 0.000000e+00 : f32
    %104 = vector.broadcast %cst_40 : f32 to vector<1x16x1x1xf32>
    %105 = tpu.concatenate %103, %104 in 2 : vector<1x16x15x1xf32>, vector<1x16x1x1xf32> -> vector<1x16x16x1xf32>
    %106 = vector.broadcast %99 : f32 to vector<1x16x16x1xf32>
    %107 = arith.mulf %106, %105 : vector<1x16x16x1xf32>
    %c2_41 = arith.constant 2 : index
    %c1_42 = arith.constant 1 : index
    %108 = memref.load %arg4[%c2_41, %c1_42] : memref<9x2xf32, #tpu.memory_space<smem>>
    %cst_43 = arith.constant 0.000000e+00 : f32
    %109 = vector.broadcast %cst_43 : f32 to vector<1x1x16x1xf32>
    %110 = vector.extract_strided_slice %63 {offsets = [0, 0, 0, 0], sizes = [1, 15, 16, 1], strides = [1, 1, 1, 1]} : vector<1x16x16x1xf32> to vector<1x15x16x1xf32>
    %111 = tpu.concatenate %109, %110 in 1 : vector<1x1x16x1xf32>, vector<1x15x16x1xf32> -> vector<1x16x16x1xf32>
    %112 = vector.extract_strided_slice %111 {offsets = [0, 0, 1, 0], sizes = [1, 16, 15, 1], strides = [1, 1, 1, 1]} : vector<1x16x16x1xf32> to vector<1x16x15x1xf32>
    %cst_44 = arith.constant 0.000000e+00 : f32
    %113 = vector.broadcast %cst_44 : f32 to vector<1x16x1x1xf32>
    %114 = tpu.concatenate %112, %113 in 2 : vector<1x16x15x1xf32>, vector<1x16x1x1xf32> -> vector<1x16x16x1xf32>
    %115 = vector.broadcast %108 : f32 to vector<1x16x16x1xf32>
    %116 = arith.mulf %115, %114 : vector<1x16x16x1xf32>
    %117 = arith.addf %107, %116 : vector<1x16x16x1xf32>
    %118 = arith.addf %98, %117 : vector<1x16x16x1xf32>
    %c3 = arith.constant 3 : index
    %c0_45 = arith.constant 0 : index
    %119 = memref.load %arg4[%c3, %c0_45] : memref<9x2xf32, #tpu.memory_space<smem>>
    %cst_46 = arith.constant 0.000000e+00 : f32
    %120 = vector.broadcast %cst_46 : f32 to vector<1x16x1x1xf32>
    %121 = vector.extract_strided_slice %61 {offsets = [0, 0, 0, 0], sizes = [1, 16, 15, 1], strides = [1, 1, 1, 1]} : vector<1x16x16x1xf32> to vector<1x16x15x1xf32>
    %122 = tpu.concatenate %120, %121 in 2 : vector<1x16x1x1xf32>, vector<1x16x15x1xf32> -> vector<1x16x16x1xf32>
    %123 = vector.broadcast %119 : f32 to vector<1x16x16x1xf32>
    %124 = arith.mulf %123, %122 : vector<1x16x16x1xf32>
    %c3_47 = arith.constant 3 : index
    %c1_48 = arith.constant 1 : index
    %125 = memref.load %arg4[%c3_47, %c1_48] : memref<9x2xf32, #tpu.memory_space<smem>>
    %cst_49 = arith.constant 0.000000e+00 : f32
    %126 = vector.broadcast %cst_49 : f32 to vector<1x16x1x1xf32>
    %127 = vector.extract_strided_slice %63 {offsets = [0, 0, 0, 0], sizes = [1, 16, 15, 1], strides = [1, 1, 1, 1]} : vector<1x16x16x1xf32> to vector<1x16x15x1xf32>
    %128 = tpu.concatenate %126, %127 in 2 : vector<1x16x1x1xf32>, vector<1x16x15x1xf32> -> vector<1x16x16x1xf32>
    %129 = vector.broadcast %125 : f32 to vector<1x16x16x1xf32>
    %130 = arith.mulf %129, %128 : vector<1x16x16x1xf32>
    %131 = arith.addf %124, %130 : vector<1x16x16x1xf32>
    %132 = arith.addf %118, %131 : vector<1x16x16x1xf32>
    %c4 = arith.constant 4 : index
    %c0_50 = arith.constant 0 : index
    %133 = memref.load %arg4[%c4, %c0_50] : memref<9x2xf32, #tpu.memory_space<smem>>
    %134 = vector.broadcast %133 : f32 to vector<1x16x16x1xf32>
    %135 = arith.mulf %134, %61 : vector<1x16x16x1xf32>
    %c4_51 = arith.constant 4 : index
    %c1_52 = arith.constant 1 : index
    %136 = memref.load %arg4[%c4_51, %c1_52] : memref<9x2xf32, #tpu.memory_space<smem>>
    %137 = vector.broadcast %136 : f32 to vector<1x16x16x1xf32>
    %138 = arith.mulf %137, %63 : vector<1x16x16x1xf32>
    %139 = arith.addf %135, %138 : vector<1x16x16x1xf32>
    %140 = arith.addf %132, %139 : vector<1x16x16x1xf32>
    %c5 = arith.constant 5 : index
    %c0_53 = arith.constant 0 : index
    %141 = memref.load %arg4[%c5, %c0_53] : memref<9x2xf32, #tpu.memory_space<smem>>
    %142 = vector.extract_strided_slice %61 {offsets = [0, 0, 1, 0], sizes = [1, 16, 15, 1], strides = [1, 1, 1, 1]} : vector<1x16x16x1xf32> to vector<1x16x15x1xf32>
    %cst_54 = arith.constant 0.000000e+00 : f32
    %143 = vector.broadcast %cst_54 : f32 to vector<1x16x1x1xf32>
    %144 = tpu.concatenate %142, %143 in 2 : vector<1x16x15x1xf32>, vector<1x16x1x1xf32> -> vector<1x16x16x1xf32>
    %145 = vector.broadcast %141 : f32 to vector<1x16x16x1xf32>
    %146 = arith.mulf %145, %144 : vector<1x16x16x1xf32>
    %c5_55 = arith.constant 5 : index
    %c1_56 = arith.constant 1 : index
    %147 = memref.load %arg4[%c5_55, %c1_56] : memref<9x2xf32, #tpu.memory_space<smem>>
    %148 = vector.extract_strided_slice %63 {offsets = [0, 0, 1, 0], sizes = [1, 16, 15, 1], strides = [1, 1, 1, 1]} : vector<1x16x16x1xf32> to vector<1x16x15x1xf32>
    %cst_57 = arith.constant 0.000000e+00 : f32
    %149 = vector.broadcast %cst_57 : f32 to vector<1x16x1x1xf32>
    %150 = tpu.concatenate %148, %149 in 2 : vector<1x16x15x1xf32>, vector<1x16x1x1xf32> -> vector<1x16x16x1xf32>
    %151 = vector.broadcast %147 : f32 to vector<1x16x16x1xf32>
    %152 = arith.mulf %151, %150 : vector<1x16x16x1xf32>
    %153 = arith.addf %146, %152 : vector<1x16x16x1xf32>
    %154 = arith.addf %140, %153 : vector<1x16x16x1xf32>
    %c6 = arith.constant 6 : index
    %c0_58 = arith.constant 0 : index
    %155 = memref.load %arg4[%c6, %c0_58] : memref<9x2xf32, #tpu.memory_space<smem>>
    %156 = vector.extract_strided_slice %61 {offsets = [0, 1, 0, 0], sizes = [1, 15, 16, 1], strides = [1, 1, 1, 1]} : vector<1x16x16x1xf32> to vector<1x15x16x1xf32>
    %cst_59 = arith.constant 0.000000e+00 : f32
    %157 = vector.broadcast %cst_59 : f32 to vector<1x1x16x1xf32>
    %158 = tpu.concatenate %156, %157 in 1 : vector<1x15x16x1xf32>, vector<1x1x16x1xf32> -> vector<1x16x16x1xf32>
    %cst_60 = arith.constant 0.000000e+00 : f32
    %159 = vector.broadcast %cst_60 : f32 to vector<1x16x1x1xf32>
    %160 = vector.extract_strided_slice %158 {offsets = [0, 0, 0, 0], sizes = [1, 16, 15, 1], strides = [1, 1, 1, 1]} : vector<1x16x16x1xf32> to vector<1x16x15x1xf32>
    %161 = tpu.concatenate %159, %160 in 2 : vector<1x16x1x1xf32>, vector<1x16x15x1xf32> -> vector<1x16x16x1xf32>
    %162 = vector.broadcast %155 : f32 to vector<1x16x16x1xf32>
    %163 = arith.mulf %162, %161 : vector<1x16x16x1xf32>
    %c6_61 = arith.constant 6 : index
    %c1_62 = arith.constant 1 : index
    %164 = memref.load %arg4[%c6_61, %c1_62] : memref<9x2xf32, #tpu.memory_space<smem>>
    %165 = vector.extract_strided_slice %63 {offsets = [0, 1, 0, 0], sizes = [1, 15, 16, 1], strides = [1, 1, 1, 1]} : vector<1x16x16x1xf32> to vector<1x15x16x1xf32>
    %cst_63 = arith.constant 0.000000e+00 : f32
    %166 = vector.broadcast %cst_63 : f32 to vector<1x1x16x1xf32>
    %167 = tpu.concatenate %165, %166 in 1 : vector<1x15x16x1xf32>, vector<1x1x16x1xf32> -> vector<1x16x16x1xf32>
    %cst_64 = arith.constant 0.000000e+00 : f32
    %168 = vector.broadcast %cst_64 : f32 to vector<1x16x1x1xf32>
    %169 = vector.extract_strided_slice %167 {offsets = [0, 0, 0, 0], sizes = [1, 16, 15, 1], strides = [1, 1, 1, 1]} : vector<1x16x16x1xf32> to vector<1x16x15x1xf32>
    %170 = tpu.concatenate %168, %169 in 2 : vector<1x16x1x1xf32>, vector<1x16x15x1xf32> -> vector<1x16x16x1xf32>
    %171 = vector.broadcast %164 : f32 to vector<1x16x16x1xf32>
    %172 = arith.mulf %171, %170 : vector<1x16x16x1xf32>
    %173 = arith.addf %163, %172 : vector<1x16x16x1xf32>
    %174 = arith.addf %154, %173 : vector<1x16x16x1xf32>
    %c7 = arith.constant 7 : index
    %c0_65 = arith.constant 0 : index
    %175 = memref.load %arg4[%c7, %c0_65] : memref<9x2xf32, #tpu.memory_space<smem>>
    %176 = vector.extract_strided_slice %61 {offsets = [0, 1, 0, 0], sizes = [1, 15, 16, 1], strides = [1, 1, 1, 1]} : vector<1x16x16x1xf32> to vector<1x15x16x1xf32>
    %cst_66 = arith.constant 0.000000e+00 : f32
    %177 = vector.broadcast %cst_66 : f32 to vector<1x1x16x1xf32>
    %178 = tpu.concatenate %176, %177 in 1 : vector<1x15x16x1xf32>, vector<1x1x16x1xf32> -> vector<1x16x16x1xf32>
    %179 = vector.broadcast %175 : f32 to vector<1x16x16x1xf32>
    %180 = arith.mulf %179, %178 : vector<1x16x16x1xf32>
    %c7_67 = arith.constant 7 : index
    %c1_68 = arith.constant 1 : index
    %181 = memref.load %arg4[%c7_67, %c1_68] : memref<9x2xf32, #tpu.memory_space<smem>>
    %182 = vector.extract_strided_slice %63 {offsets = [0, 1, 0, 0], sizes = [1, 15, 16, 1], strides = [1, 1, 1, 1]} : vector<1x16x16x1xf32> to vector<1x15x16x1xf32>
    %cst_69 = arith.constant 0.000000e+00 : f32
    %183 = vector.broadcast %cst_69 : f32 to vector<1x1x16x1xf32>
    %184 = tpu.concatenate %182, %183 in 1 : vector<1x15x16x1xf32>, vector<1x1x16x1xf32> -> vector<1x16x16x1xf32>
    %185 = vector.broadcast %181 : f32 to vector<1x16x16x1xf32>
    %186 = arith.mulf %185, %184 : vector<1x16x16x1xf32>
    %187 = arith.addf %180, %186 : vector<1x16x16x1xf32>
    %188 = arith.addf %174, %187 : vector<1x16x16x1xf32>
    %c8 = arith.constant 8 : index
    %c0_70 = arith.constant 0 : index
    %189 = memref.load %arg4[%c8, %c0_70] : memref<9x2xf32, #tpu.memory_space<smem>>
    %190 = vector.extract_strided_slice %61 {offsets = [0, 1, 0, 0], sizes = [1, 15, 16, 1], strides = [1, 1, 1, 1]} : vector<1x16x16x1xf32> to vector<1x15x16x1xf32>
    %cst_71 = arith.constant 0.000000e+00 : f32
    %191 = vector.broadcast %cst_71 : f32 to vector<1x1x16x1xf32>
    %192 = tpu.concatenate %190, %191 in 1 : vector<1x15x16x1xf32>, vector<1x1x16x1xf32> -> vector<1x16x16x1xf32>
    %193 = vector.extract_strided_slice %192 {offsets = [0, 0, 1, 0], sizes = [1, 16, 15, 1], strides = [1, 1, 1, 1]} : vector<1x16x16x1xf32> to vector<1x16x15x1xf32>
    %cst_72 = arith.constant 0.000000e+00 : f32
    %194 = vector.broadcast %cst_72 : f32 to vector<1x16x1x1xf32>
    %195 = tpu.concatenate %193, %194 in 2 : vector<1x16x15x1xf32>, vector<1x16x1x1xf32> -> vector<1x16x16x1xf32>
    %196 = vector.broadcast %189 : f32 to vector<1x16x16x1xf32>
    %197 = arith.mulf %196, %195 : vector<1x16x16x1xf32>
    %c8_73 = arith.constant 8 : index
    %c1_74 = arith.constant 1 : index
    %198 = memref.load %arg4[%c8_73, %c1_74] : memref<9x2xf32, #tpu.memory_space<smem>>
    %199 = vector.extract_strided_slice %63 {offsets = [0, 1, 0, 0], sizes = [1, 15, 16, 1], strides = [1, 1, 1, 1]} : vector<1x16x16x1xf32> to vector<1x15x16x1xf32>
    %cst_75 = arith.constant 0.000000e+00 : f32
    %200 = vector.broadcast %cst_75 : f32 to vector<1x1x16x1xf32>
    %201 = tpu.concatenate %199, %200 in 1 : vector<1x15x16x1xf32>, vector<1x1x16x1xf32> -> vector<1x16x16x1xf32>
    %202 = vector.extract_strided_slice %201 {offsets = [0, 0, 1, 0], sizes = [1, 16, 15, 1], strides = [1, 1, 1, 1]} : vector<1x16x16x1xf32> to vector<1x16x15x1xf32>
    %cst_76 = arith.constant 0.000000e+00 : f32
    %203 = vector.broadcast %cst_76 : f32 to vector<1x16x1x1xf32>
    %204 = tpu.concatenate %202, %203 in 2 : vector<1x16x15x1xf32>, vector<1x16x1x1xf32> -> vector<1x16x16x1xf32>
    %205 = vector.broadcast %198 : f32 to vector<1x16x16x1xf32>
    %206 = arith.mulf %205, %204 : vector<1x16x16x1xf32>
    %207 = arith.addf %197, %206 : vector<1x16x16x1xf32>
    %208 = arith.addf %188, %207 : vector<1x16x16x1xf32>
    %cst_77 = arith.constant 0.000000e+00 : f32
    %209 = vector.broadcast %cst_77 : f32 to vector<1x16x16x1xf32>
    %210 = arith.subf %209, %208 : vector<1x16x16x1xf32>
    %211 = math.exp %210 : vector<1x16x16x1xf32>
    %cst_78 = arith.constant 1.000000e+00 : f32
    %212 = vector.broadcast %cst_78 : f32 to vector<1x16x16x1xf32>
    %213 = arith.addf %212, %211 : vector<1x16x16x1xf32>
    %cst_79 = arith.constant 1.000000e+00 : f32
    %214 = vector.broadcast %cst_79 : f32 to vector<1x16x16x1xf32>
    %215 = arith.divf %214, %213 : vector<1x16x16x1xf32>
    %216 = vector.broadcast %215 : vector<1x16x16x1xf32> to vector<1x16x16x16xf32>
    %217 = arith.mulf %57, %216 : vector<1x16x16x16xf32>
    %218 = arith.truncf %217 : vector<1x16x16x16xf32> to vector<1x16x16x16xbf16>
    %cst_80 = arith.constant 0.000000e+00 : bf16
    %219 = vector.broadcast %cst_80 : bf16 to vector<1x1x16x16xbf16>
    %220 = vector.extract_strided_slice %218 {offsets = [0, 0, 0, 0], sizes = [1, 15, 16, 16], strides = [1, 1, 1, 1]} : vector<1x16x16x16xbf16> to vector<1x15x16x16xbf16>
    %221 = tpu.concatenate %219, %220 in 1 : vector<1x1x16x16xbf16>, vector<1x15x16x16xbf16> -> vector<1x16x16x16xbf16>
    %cst_81 = arith.constant 0.000000e+00 : bf16
    %222 = vector.broadcast %cst_81 : bf16 to vector<1x16x1x16xbf16>
    %223 = vector.extract_strided_slice %221 {offsets = [0, 0, 0, 0], sizes = [1, 16, 15, 16], strides = [1, 1, 1, 1]} : vector<1x16x16x16xbf16> to vector<1x16x15x16xbf16>
    %224 = tpu.concatenate %222, %223 in 2 : vector<1x16x1x16xbf16>, vector<1x16x15x16xbf16> -> vector<1x16x16x16xbf16>
    %225 = vector.shape_cast %224 : vector<1x16x16x16xbf16> to vector<256x16xbf16>
    %cst_82 = arith.constant 0.000000e+00 : bf16
    %226 = vector.broadcast %cst_82 : bf16 to vector<1x1x16x16xbf16>
    %227 = vector.extract_strided_slice %218 {offsets = [0, 0, 0, 0], sizes = [1, 15, 16, 16], strides = [1, 1, 1, 1]} : vector<1x16x16x16xbf16> to vector<1x15x16x16xbf16>
    %228 = tpu.concatenate %226, %227 in 1 : vector<1x1x16x16xbf16>, vector<1x15x16x16xbf16> -> vector<1x16x16x16xbf16>
    %229 = vector.shape_cast %228 : vector<1x16x16x16xbf16> to vector<256x16xbf16>
    %cst_83 = arith.constant 0.000000e+00 : bf16
    %230 = vector.broadcast %cst_83 : bf16 to vector<1x1x16x16xbf16>
    %231 = vector.extract_strided_slice %218 {offsets = [0, 0, 0, 0], sizes = [1, 15, 16, 16], strides = [1, 1, 1, 1]} : vector<1x16x16x16xbf16> to vector<1x15x16x16xbf16>
    %232 = tpu.concatenate %230, %231 in 1 : vector<1x1x16x16xbf16>, vector<1x15x16x16xbf16> -> vector<1x16x16x16xbf16>
    %233 = vector.extract_strided_slice %232 {offsets = [0, 0, 1, 0], sizes = [1, 16, 15, 16], strides = [1, 1, 1, 1]} : vector<1x16x16x16xbf16> to vector<1x16x15x16xbf16>
    %cst_84 = arith.constant 0.000000e+00 : bf16
    %234 = vector.broadcast %cst_84 : bf16 to vector<1x16x1x16xbf16>
    %235 = tpu.concatenate %233, %234 in 2 : vector<1x16x15x16xbf16>, vector<1x16x1x16xbf16> -> vector<1x16x16x16xbf16>
    %236 = vector.shape_cast %235 : vector<1x16x16x16xbf16> to vector<256x16xbf16>
    %cst_85 = arith.constant 0.000000e+00 : bf16
    %237 = vector.broadcast %cst_85 : bf16 to vector<1x16x1x16xbf16>
    %238 = vector.extract_strided_slice %218 {offsets = [0, 0, 0, 0], sizes = [1, 16, 15, 16], strides = [1, 1, 1, 1]} : vector<1x16x16x16xbf16> to vector<1x16x15x16xbf16>
    %239 = tpu.concatenate %237, %238 in 2 : vector<1x16x1x16xbf16>, vector<1x16x15x16xbf16> -> vector<1x16x16x16xbf16>
    %240 = vector.shape_cast %239 : vector<1x16x16x16xbf16> to vector<256x16xbf16>
    %241 = vector.shape_cast %218 : vector<1x16x16x16xbf16> to vector<256x16xbf16>
    %242 = vector.extract_strided_slice %218 {offsets = [0, 0, 1, 0], sizes = [1, 16, 15, 16], strides = [1, 1, 1, 1]} : vector<1x16x16x16xbf16> to vector<1x16x15x16xbf16>
    %cst_86 = arith.constant 0.000000e+00 : bf16
    %243 = vector.broadcast %cst_86 : bf16 to vector<1x16x1x16xbf16>
    %244 = tpu.concatenate %242, %243 in 2 : vector<1x16x15x16xbf16>, vector<1x16x1x16xbf16> -> vector<1x16x16x16xbf16>
    %245 = vector.shape_cast %244 : vector<1x16x16x16xbf16> to vector<256x16xbf16>
    %246 = vector.extract_strided_slice %218 {offsets = [0, 1, 0, 0], sizes = [1, 15, 16, 16], strides = [1, 1, 1, 1]} : vector<1x16x16x16xbf16> to vector<1x15x16x16xbf16>
    %cst_87 = arith.constant 0.000000e+00 : bf16
    %247 = vector.broadcast %cst_87 : bf16 to vector<1x1x16x16xbf16>
    %248 = tpu.concatenate %246, %247 in 1 : vector<1x15x16x16xbf16>, vector<1x1x16x16xbf16> -> vector<1x16x16x16xbf16>
    %cst_88 = arith.constant 0.000000e+00 : bf16
    %249 = vector.broadcast %cst_88 : bf16 to vector<1x16x1x16xbf16>
    %250 = vector.extract_strided_slice %248 {offsets = [0, 0, 0, 0], sizes = [1, 16, 15, 16], strides = [1, 1, 1, 1]} : vector<1x16x16x16xbf16> to vector<1x16x15x16xbf16>
    %251 = tpu.concatenate %249, %250 in 2 : vector<1x16x1x16xbf16>, vector<1x16x15x16xbf16> -> vector<1x16x16x16xbf16>
    %252 = vector.shape_cast %251 : vector<1x16x16x16xbf16> to vector<256x16xbf16>
    %253 = vector.extract_strided_slice %218 {offsets = [0, 1, 0, 0], sizes = [1, 15, 16, 16], strides = [1, 1, 1, 1]} : vector<1x16x16x16xbf16> to vector<1x15x16x16xbf16>
    %cst_89 = arith.constant 0.000000e+00 : bf16
    %254 = vector.broadcast %cst_89 : bf16 to vector<1x1x16x16xbf16>
    %255 = tpu.concatenate %253, %254 in 1 : vector<1x15x16x16xbf16>, vector<1x1x16x16xbf16> -> vector<1x16x16x16xbf16>
    %256 = vector.shape_cast %255 : vector<1x16x16x16xbf16> to vector<256x16xbf16>
    %257 = vector.extract_strided_slice %218 {offsets = [0, 1, 0, 0], sizes = [1, 15, 16, 16], strides = [1, 1, 1, 1]} : vector<1x16x16x16xbf16> to vector<1x15x16x16xbf16>
    %cst_90 = arith.constant 0.000000e+00 : bf16
    %258 = vector.broadcast %cst_90 : bf16 to vector<1x1x16x16xbf16>
    %259 = tpu.concatenate %257, %258 in 1 : vector<1x15x16x16xbf16>, vector<1x1x16x16xbf16> -> vector<1x16x16x16xbf16>
    %260 = vector.extract_strided_slice %259 {offsets = [0, 0, 1, 0], sizes = [1, 16, 15, 16], strides = [1, 1, 1, 1]} : vector<1x16x16x16xbf16> to vector<1x16x15x16xbf16>
    %cst_91 = arith.constant 0.000000e+00 : bf16
    %261 = vector.broadcast %cst_91 : bf16 to vector<1x16x1x16xbf16>
    %262 = tpu.concatenate %260, %261 in 2 : vector<1x16x15x16xbf16>, vector<1x16x1x16xbf16> -> vector<1x16x16x16xbf16>
    %263 = vector.shape_cast %262 : vector<1x16x16x16xbf16> to vector<256x16xbf16>
    %264 = tpu.concatenate %225, %229, %236, %240, %241, %245, %252, %256, %263 in 1 : vector<256x16xbf16>, vector<256x16xbf16>, vector<256x16xbf16>, vector<256x16xbf16>, vector<256x16xbf16>, vector<256x16xbf16>, vector<256x16xbf16>, vector<256x16xbf16>, vector<256x16xbf16> -> vector<256x144xbf16>
    %c0_92 = arith.constant 0 : index
    %c0_93 = arith.constant 0 : index
    %265 = vector.load %arg5[%c0_92, %c0_93] : memref<144x3xbf16, #tpu.memory_space<vmem>>, vector<144x3xbf16>
    %cst_94 = arith.constant dense<0.000000e+00> : vector<256x3xf32>
    %266 = tpu.matmul %264, %265, %cst_94 {dimension_numbers = #tpu.dot_dimension_numbers<[1], [0], [0], [1], [0, 0, 1, 1], [], []>} : vector<256x144xbf16>, vector<144x3xbf16>, vector<256x3xf32> -> vector<256x3xf32>
    %c0_95 = arith.constant 0 : index
    %c0_96 = arith.constant 0 : index
    %267 = vector.load %arg6[%c0_95, %c0_96] : memref<1x3xf32, #tpu.memory_space<vmem>>, vector<1x3xf32>
    %268 = vector.broadcast %267 : vector<1x3xf32> to vector<256x3xf32>
    %269 = arith.addf %266, %268 : vector<256x3xf32>
    %270 = vector.shape_cast %269 : vector<256x3xf32> to vector<1x1x768xf32>
    %c0_97 = arith.constant 0 : index
    %c0_98 = arith.constant 0 : index
    %c0_99 = arith.constant 0 : index
    %271 = vector.load %arg7[%c0_97, %c0_98, %c0_99] : memref<1x1x768xf32, #tpu.memory_space<vmem>>, vector<1x1x768xf32>
    tpu.vector_store %arg7[%c0_97, %c0_98, %c0_99], %270 {strides = array<i32>} : memref<1x1x768xf32, #tpu.memory_space<vmem>>, vector<1x1x768xf32>,
    return
  }
  func.func @transform_0(%arg0: i32) -> (i32, i32, i32, i32) {
    %c0_i32 = arith.constant 0 : i32
    %c0_i32_0 = arith.constant 0 : i32
    %c0_i32_1 = arith.constant 0 : i32
    %c0_i32_2 = arith.constant 0 : i32
    return %arg0, %c0_i32, %c0_i32_0, %c0_i32_1 : i32, i32, i32, i32
  }
  func.func @transform_1(%arg0: i32) -> (i32, i32) {
    %c0_i32 = arith.constant 0 : i32
    %c0_i32_0 = arith.constant 0 : i32
    %c0_i32_1 = arith.constant 0 : i32
    return %c0_i32, %c0_i32_0 : i32, i32
  }
  func.func @transform_2(%arg0: i32) -> (i32, i32) {
    %c0_i32 = arith.constant 0 : i32
    %c0_i32_0 = arith.constant 0 : i32
    %c0_i32_1 = arith.constant 0 : i32
    return %c0_i32, %c0_i32_0 : i32, i32
  }
  func.func @transform_3(%arg0: i32) -> (i32, i32) {
    %c0_i32 = arith.constant 0 : i32
    %c0_i32_0 = arith.constant 0 : i32
    %c0_i32_1 = arith.constant 0 : i32
    return %c0_i32, %c0_i32_0 : i32, i32
  }
  func.func @transform_4(%arg0: i32) -> (i32, i32) {
    %c0_i32 = arith.constant 0 : i32
    %c0_i32_0 = arith.constant 0 : i32
    %c0_i32_1 = arith.constant 0 : i32
    return %c0_i32, %c0_i32_0 : i32, i32
  }
  func.func @transform_5(%arg0: i32) -> (i32, i32) {
    %c0_i32 = arith.constant 0 : i32
    %c0_i32_0 = arith.constant 0 : i32
    %c0_i32_1 = arith.constant 0 : i32
    return %c0_i32, %c0_i32_0 : i32, i32
  }
  func.func @transform_6(%arg0: i32) -> (i32, i32, i32) {
    %c0_i32 = arith.constant 0 : i32
    %c0_i32_0 = arith.constant 0 : i32
    %c0_i32_1 = arith.constant 0 : i32
    return %arg0, %c0_i32, %c0_i32_0 : i32, i32, i32
  }
}

module attributes {stable_mosaic.version = 11 : i64} {
  func.func @trans_guide_kernel(%arg0: i32, %arg1: memref<1x16x16x6xbf16, #tpu.memory_space<vmem>>, %arg2: memref<54x16xbf16, #tpu.memory_space<vmem>>, %arg3: memref<1x16xf32, #tpu.memory_space<vmem>>, %arg4: memref<9x2xf32, #tpu.memory_space<smem>>, %arg5: memref<144x3xbf16, #tpu.memory_space<vmem>>, %arg6: memref<1x3xf32, #tpu.memory_space<vmem>>, %arg7: memref<1x16x16x3xf32, #tpu.memory_space<vmem>>) attributes {dimension_semantics = [#tpu.dimension_semantics<parallel>], iteration_bounds = array<i64: 2>, scalar_prefetch = 0 : i64, scratch_operands = 0 : i64, tpu.core_type = #tpu.core_type<tc>, window_params = [{transform_indices = @transform_0, window_bounds = array<i64: 1, 16, 16, 6>}, {pipeline_mode = #tpu.pipeline_mode<synchronous>, transform_indices = @transform_1, window_bounds = array<i64: 54, 16>}, {pipeline_mode = #tpu.pipeline_mode<synchronous>, transform_indices = @transform_2, window_bounds = array<i64: 1, 16>}, {transform_indices = @transform_3, window_bounds = array<i64: 9, 2>}, {pipeline_mode = #tpu.pipeline_mode<synchronous>, transform_indices = @transform_4, window_bounds = array<i64: 144, 3>}, {pipeline_mode = #tpu.pipeline_mode<synchronous>, transform_indices = @transform_5, window_bounds = array<i64: 1, 3>}, {transform_indices = @transform_6, window_bounds = array<i64: 1, 16, 16, 3>}]} {
    %c0 = arith.constant 0 : index
    %c0_0 = arith.constant 0 : index
    %c0_1 = arith.constant 0 : index
    %c0_2 = arith.constant 0 : index
    %0 = vector.load %arg1[%c0, %c0_0, %c0_1, %c0_2] : memref<1x16x16x6xbf16, #tpu.memory_space<vmem>>, vector<1x16x16x6xbf16>
    %cst = arith.constant 0.000000e+00 : bf16
    %1 = vector.broadcast %cst : bf16 to vector<1x1x16x6xbf16>
    %2 = vector.extract_strided_slice %0 {offsets = [0, 0, 0, 0], sizes = [1, 15, 16, 6], strides = [1, 1, 1, 1]} : vector<1x16x16x6xbf16> to vector<1x15x16x6xbf16>
    %3 = tpu.concatenate %1, %2 in 1 : vector<1x1x16x6xbf16>, vector<1x15x16x6xbf16> -> vector<1x16x16x6xbf16>
    %cst_3 = arith.constant 0.000000e+00 : bf16
    %4 = vector.broadcast %cst_3 : bf16 to vector<1x16x1x6xbf16>
    %5 = vector.extract_strided_slice %3 {offsets = [0, 0, 0, 0], sizes = [1, 16, 15, 6], strides = [1, 1, 1, 1]} : vector<1x16x16x6xbf16> to vector<1x16x15x6xbf16>
    %6 = tpu.concatenate %4, %5 in 2 : vector<1x16x1x6xbf16>, vector<1x16x15x6xbf16> -> vector<1x16x16x6xbf16>
    %7 = vector.shape_cast %6 : vector<1x16x16x6xbf16> to vector<256x6xbf16>
    %cst_4 = arith.constant 0.000000e+00 : bf16
    %8 = vector.broadcast %cst_4 : bf16 to vector<1x1x16x6xbf16>
    %9 = vector.extract_strided_slice %0 {offsets = [0, 0, 0, 0], sizes = [1, 15, 16, 6], strides = [1, 1, 1, 1]} : vector<1x16x16x6xbf16> to vector<1x15x16x6xbf16>
    %10 = tpu.concatenate %8, %9 in 1 : vector<1x1x16x6xbf16>, vector<1x15x16x6xbf16> -> vector<1x16x16x6xbf16>
    %11 = vector.shape_cast %10 : vector<1x16x16x6xbf16> to vector<256x6xbf16>
    %cst_5 = arith.constant 0.000000e+00 : bf16
    %12 = vector.broadcast %cst_5 : bf16 to vector<1x1x16x6xbf16>
    %13 = vector.extract_strided_slice %0 {offsets = [0, 0, 0, 0], sizes = [1, 15, 16, 6], strides = [1, 1, 1, 1]} : vector<1x16x16x6xbf16> to vector<1x15x16x6xbf16>
    %14 = tpu.concatenate %12, %13 in 1 : vector<1x1x16x6xbf16>, vector<1x15x16x6xbf16> -> vector<1x16x16x6xbf16>
    %15 = vector.extract_strided_slice %14 {offsets = [0, 0, 1, 0], sizes = [1, 16, 15, 6], strides = [1, 1, 1, 1]} : vector<1x16x16x6xbf16> to vector<1x16x15x6xbf16>
    %cst_6 = arith.constant 0.000000e+00 : bf16
    %16 = vector.broadcast %cst_6 : bf16 to vector<1x16x1x6xbf16>
    %17 = tpu.concatenate %15, %16 in 2 : vector<1x16x15x6xbf16>, vector<1x16x1x6xbf16> -> vector<1x16x16x6xbf16>
    %18 = vector.shape_cast %17 : vector<1x16x16x6xbf16> to vector<256x6xbf16>
    %cst_7 = arith.constant 0.000000e+00 : bf16
    %19 = vector.broadcast %cst_7 : bf16 to vector<1x16x1x6xbf16>
    %20 = vector.extract_strided_slice %0 {offsets = [0, 0, 0, 0], sizes = [1, 16, 15, 6], strides = [1, 1, 1, 1]} : vector<1x16x16x6xbf16> to vector<1x16x15x6xbf16>
    %21 = tpu.concatenate %19, %20 in 2 : vector<1x16x1x6xbf16>, vector<1x16x15x6xbf16> -> vector<1x16x16x6xbf16>
    %22 = vector.shape_cast %21 : vector<1x16x16x6xbf16> to vector<256x6xbf16>
    %23 = vector.shape_cast %0 : vector<1x16x16x6xbf16> to vector<256x6xbf16>
    %24 = vector.extract_strided_slice %0 {offsets = [0, 0, 1, 0], sizes = [1, 16, 15, 6], strides = [1, 1, 1, 1]} : vector<1x16x16x6xbf16> to vector<1x16x15x6xbf16>
    %cst_8 = arith.constant 0.000000e+00 : bf16
    %25 = vector.broadcast %cst_8 : bf16 to vector<1x16x1x6xbf16>
    %26 = tpu.concatenate %24, %25 in 2 : vector<1x16x15x6xbf16>, vector<1x16x1x6xbf16> -> vector<1x16x16x6xbf16>
    %27 = vector.shape_cast %26 : vector<1x16x16x6xbf16> to vector<256x6xbf16>
    %28 = vector.extract_strided_slice %0 {offsets = [0, 1, 0, 0], sizes = [1, 15, 16, 6], strides = [1, 1, 1, 1]} : vector<1x16x16x6xbf16> to vector<1x15x16x6xbf16>
    %cst_9 = arith.constant 0.000000e+00 : bf16
    %29 = vector.broadcast %cst_9 : bf16 to vector<1x1x16x6xbf16>
    %30 = tpu.concatenate %28, %29 in 1 : vector<1x15x16x6xbf16>, vector<1x1x16x6xbf16> -> vector<1x16x16x6xbf16>
    %cst_10 = arith.constant 0.000000e+00 : bf16
    %31 = vector.broadcast %cst_10 : bf16 to vector<1x16x1x6xbf16>
    %32 = vector.extract_strided_slice %30 {offsets = [0, 0, 0, 0], sizes = [1, 16, 15, 6], strides = [1, 1, 1, 1]} : vector<1x16x16x6xbf16> to vector<1x16x15x6xbf16>
    %33 = tpu.concatenate %31, %32 in 2 : vector<1x16x1x6xbf16>, vector<1x16x15x6xbf16> -> vector<1x16x16x6xbf16>
    %34 = vector.shape_cast %33 : vector<1x16x16x6xbf16> to vector<256x6xbf16>
    %35 = vector.extract_strided_slice %0 {offsets = [0, 1, 0, 0], sizes = [1, 15, 16, 6], strides = [1, 1, 1, 1]} : vector<1x16x16x6xbf16> to vector<1x15x16x6xbf16>
    %cst_11 = arith.constant 0.000000e+00 : bf16
    %36 = vector.broadcast %cst_11 : bf16 to vector<1x1x16x6xbf16>
    %37 = tpu.concatenate %35, %36 in 1 : vector<1x15x16x6xbf16>, vector<1x1x16x6xbf16> -> vector<1x16x16x6xbf16>
    %38 = vector.shape_cast %37 : vector<1x16x16x6xbf16> to vector<256x6xbf16>
    %39 = vector.extract_strided_slice %0 {offsets = [0, 1, 0, 0], sizes = [1, 15, 16, 6], strides = [1, 1, 1, 1]} : vector<1x16x16x6xbf16> to vector<1x15x16x6xbf16>
    %cst_12 = arith.constant 0.000000e+00 : bf16
    %40 = vector.broadcast %cst_12 : bf16 to vector<1x1x16x6xbf16>
    %41 = tpu.concatenate %39, %40 in 1 : vector<1x15x16x6xbf16>, vector<1x1x16x6xbf16> -> vector<1x16x16x6xbf16>
    %42 = vector.extract_strided_slice %41 {offsets = [0, 0, 1, 0], sizes = [1, 16, 15, 6], strides = [1, 1, 1, 1]} : vector<1x16x16x6xbf16> to vector<1x16x15x6xbf16>
    %cst_13 = arith.constant 0.000000e+00 : bf16
    %43 = vector.broadcast %cst_13 : bf16 to vector<1x16x1x6xbf16>
    %44 = tpu.concatenate %42, %43 in 2 : vector<1x16x15x6xbf16>, vector<1x16x1x6xbf16> -> vector<1x16x16x6xbf16>
    %45 = vector.shape_cast %44 : vector<1x16x16x6xbf16> to vector<256x6xbf16>
    %46 = tpu.concatenate %7, %11, %18, %22, %23, %27, %34, %38, %45 in 1 : vector<256x6xbf16>, vector<256x6xbf16>, vector<256x6xbf16>, vector<256x6xbf16>, vector<256x6xbf16>, vector<256x6xbf16>, vector<256x6xbf16>, vector<256x6xbf16>, vector<256x6xbf16> -> vector<256x54xbf16>
    %c0_14 = arith.constant 0 : index
    %c0_15 = arith.constant 0 : index
    %47 = vector.load %arg2[%c0_14, %c0_15] : memref<54x16xbf16, #tpu.memory_space<vmem>>, vector<54x16xbf16>
    %cst_16 = arith.constant dense<0.000000e+00> : vector<256x16xf32>
    %48 = tpu.matmul %46, %47, %cst_16 {dimension_numbers = #tpu.dot_dimension_numbers<[1], [0], [0], [1], [0, 0, 1, 1], [], []>} : vector<256x54xbf16>, vector<54x16xbf16>, vector<256x16xf32> -> vector<256x16xf32>
    %c0_17 = arith.constant 0 : index
    %c0_18 = arith.constant 0 : index
    %49 = vector.load %arg3[%c0_17, %c0_18] : memref<1x16xf32, #tpu.memory_space<vmem>>, vector<1x16xf32>
    %50 = vector.broadcast %49 : vector<1x16xf32> to vector<256x16xf32>
    %51 = arith.addf %48, %50 : vector<256x16xf32>
    %cst_19 = arith.constant 0.000000e+00 : f32
    %52 = vector.broadcast %cst_19 : f32 to vector<256x16xf32>
    %53 = arith.cmpf ogt, %51, %52 : vector<256x16xf32>
    %cst_20 = arith.constant 0.00999999977 : f32
    %54 = vector.broadcast %cst_20 : f32 to vector<256x16xf32>
    %55 = arith.mulf %54, %51 : vector<256x16xf32>
    %56 = arith.select %53, %51, %55 : vector<256x16xi1>, vector<256x16xf32>
    %57 = vector.shape_cast %56 : vector<256x16xf32> to vector<1x16x16x16xf32>
    %cst_21 = arith.constant dense<0.000000e+00> : vector<1x16x16xf32>
    %58 = vector.multi_reduction <add>, %57, %cst_21 [3] : vector<1x16x16x16xf32> to vector<1x16x16xf32>
    %59 = vector.shape_cast %58 : vector<1x16x16xf32> to vector<1x16x16x1xf32>
    %cst_22 = arith.constant 1.600000e+01 : f32
    %60 = vector.broadcast %cst_22 : f32 to vector<1x16x16x1xf32>
    %61 = arith.divf %59, %60 : vector<1x16x16x1xf32>
    %cst_23 = arith.constant dense<0xFF800000> : vector<1x16x16xf32>
    %62 = vector.multi_reduction <maximumf>, %57, %cst_23 [3] : vector<1x16x16x16xf32> to vector<1x16x16xf32>
    %63 = vector.shape_cast %62 : vector<1x16x16xf32> to vector<1x16x16x1xf32>
    %cst_24 = arith.constant 0.000000e+00 : f32
    %64 = vector.broadcast %cst_24 : f32 to vector<1x16x16x1xf32>
    %c0_25 = arith.constant 0 : index
    %c0_26 = arith.constant 0 : index
    %65 = memref.load %arg4[%c0_25, %c0_26] : memref<9x2xf32, #tpu.memory_space<smem>>
    %cst_27 = arith.constant 0.000000e+00 : f32
    %66 = vector.broadcast %cst_27 : f32 to vector<1x1x16x1xf32>
    %67 = vector.extract_strided_slice %61 {offsets = [0, 0, 0, 0], sizes = [1, 15, 16, 1], strides = [1, 1, 1, 1]} : vector<1x16x16x1xf32> to vector<1x15x16x1xf32>
    %68 = tpu.concatenate %66, %67 in 1 : vector<1x1x16x1xf32>, vector<1x15x16x1xf32> -> vector<1x16x16x1xf32>
    %cst_28 = arith.constant 0.000000e+00 : f32
    %69 = vector.broadcast %cst_28 : f32 to vector<1x16x1x1xf32>
    %70 = vector.extract_strided_slice %68 {offsets = [0, 0, 0, 0], sizes = [1, 16, 15, 1], strides = [1, 1, 1, 1]} : vector<1x16x16x1xf32> to vector<1x16x15x1xf32>
    %71 = tpu.concatenate %69, %70 in 2 : vector<1x16x1x1xf32>, vector<1x16x15x1xf32> -> vector<1x16x16x1xf32>
    %72 = vector.broadcast %65 : f32 to vector<1x16x16x1xf32>
    %73 = arith.mulf %72, %71 : vector<1x16x16x1xf32>
    %c0_29 = arith.constant 0 : index
    %c1 = arith.constant 1 : index
    %74 = memref.load %arg4[%c0_29, %c1] : memref<9x2xf32, #tpu.memory_space<smem>>
    %cst_30 = arith.constant 0.000000e+00 : f32
    %75 = vector.broadcast %cst_30 : f32 to vector<1x1x16x1xf32>
    %76 = vector.extract_strided_slice %63 {offsets = [0, 0, 0, 0], sizes = [1, 15, 16, 1], strides = [1, 1, 1, 1]} : vector<1x16x16x1xf32> to vector<1x15x16x1xf32>
    %77 = tpu.concatenate %75, %76 in 1 : vector<1x1x16x1xf32>, vector<1x15x16x1xf32> -> vector<1x16x16x1xf32>
    %cst_31 = arith.constant 0.000000e+00 : f32
    %78 = vector.broadcast %cst_31 : f32 to vector<1x16x1x1xf32>
    %79 = vector.extract_strided_slice %77 {offsets = [0, 0, 0, 0], sizes = [1, 16, 15, 1], strides = [1, 1, 1, 1]} : vector<1x16x16x1xf32> to vector<1x16x15x1xf32>
    %80 = tpu.concatenate %78, %79 in 2 : vector<1x16x1x1xf32>, vector<1x16x15x1xf32> -> vector<1x16x16x1xf32>
    %81 = vector.broadcast %74 : f32 to vector<1x16x16x1xf32>
    %82 = arith.mulf %81, %80 : vector<1x16x16x1xf32>
    %83 = arith.addf %73, %82 : vector<1x16x16x1xf32>
    %84 = arith.addf %64, %83 : vector<1x16x16x1xf32>
    %c1_32 = arith.constant 1 : index
    %c0_33 = arith.constant 0 : index
    %85 = memref.load %arg4[%c1_32, %c0_33] : memref<9x2xf32, #tpu.memory_space<smem>>
    %cst_34 = arith.constant 0.000000e+00 : f32
    %86 = vector.broadcast %cst_34 : f32 to vector<1x1x16x1xf32>
    %87 = vector.extract_strided_slice %61 {offsets = [0, 0, 0, 0], sizes = [1, 15, 16, 1], strides = [1, 1, 1, 1]} : vector<1x16x16x1xf32> to vector<1x15x16x1xf32>
    %88 = tpu.concatenate %86, %87 in 1 : vector<1x1x16x1xf32>, vector<1x15x16x1xf32> -> vector<1x16x16x1xf32>
    %89 = vector.broadcast %85 : f32 to vector<1x16x16x1xf32>
    %90 = arith.mulf %89, %88 : vector<1x16x16x1xf32>
    %c1_35 = arith.constant 1 : index
    %c1_36 = arith.constant 1 : index
    %91 = memref.load %arg4[%c1_35, %c1_36] : memref<9x2xf32, #tpu.memory_space<smem>>
    %cst_37 = arith.constant 0.000000e+00 : f32
    %92 = vector.broadcast %cst_37 : f32 to vector<1x1x16x1xf32>
    %93 = vector.extract_strided_slice %63 {offsets = [0, 0, 0, 0], sizes = [1, 15, 16, 1], strides = [1, 1, 1, 1]} : vector<1x16x16x1xf32> to vector<1x15x16x1xf32>
    %94 = tpu.concatenate %92, %93 in 1 : vector<1x1x16x1xf32>, vector<1x15x16x1xf32> -> vector<1x16x16x1xf32>
    %95 = vector.broadcast %91 : f32 to vector<1x16x16x1xf32>
    %96 = arith.mulf %95, %94 : vector<1x16x16x1xf32>
    %97 = arith.addf %90, %96 : vector<1x16x16x1xf32>
    %98 = arith.addf %84, %97 : vector<1x16x16x1xf32>
    %c2 = arith.constant 2 : index
    %c0_38 = arith.constant 0 : index
    %99 = memref.load %arg4[%c2, %c0_38] : memref<9x2xf32, #tpu.memory_space<smem>>
    %cst_39 = arith.constant 0.000000e+00 : f32
    %100 = vector.broadcast %cst_39 : f32 to vector<1x1x16x1xf32>
    %101 = vector.extract_strided_slice %61 {offsets = [0, 0, 0, 0], sizes = [1, 15, 16, 1], strides = [1, 1, 1, 1]} : vector<1x16x16x1xf32> to vector<1x15x16x1xf32>
    %102 = tpu.concatenate %100, %101 in 1 : vector<1x1x16x1xf32>, vector<1x15x16x1xf32> -> vector<1x16x16x1xf32>
    %103 = vector.extract_strided_slice %102 {offsets = [0, 0, 1, 0], sizes = [1, 16, 15, 1], strides = [1, 1, 1, 1]} : vector<1x16x16x1xf32> to vector<1x16x15x1xf32>
    %cst_40 = arith.constant 0.000000e+00 : f32
    %104 = vector.broadcast %cst_40 : f32 to vector<1x16x1x1xf32>
    %105 = tpu.concatenate %103, %104 in 2 : vector<1x16x15x1xf32>, vector<1x16x1x1xf32> -> vector<1x16x16x1xf32>
    %106 = vector.broadcast %99 : f32 to vector<1x16x16x1xf32>
    %107 = arith.mulf %106, %105 : vector<1x16x16x1xf32>
    %c2_41 = arith.constant 2 : index
    %c1_42 = arith.constant 1 : index
    %108 = memref.load %arg4[%c2_41, %c1_42] : memref<9x2xf32, #tpu.memory_space<smem>>
    %cst_43 = arith.constant 0.000000e+00 : f32
    %109 = vector.broadcast %cst_43 : f32 to vector<1x1x16x1xf32>
    %110 = vector.extract_strided_slice %63 {offsets = [0, 0, 0, 0], sizes = [1, 15, 16, 1], strides = [1, 1, 1, 1]} : vector<1x16x16x1xf32> to vector<1x15x16x1xf32>
    %111 = tpu.concatenate %109, %110 in 1 : vector<1x1x16x1xf32>, vector<1x15x16x1xf32> -> vector<1x16x16x1xf32>
    %112 = vector.extract_strided_slice %111 {offsets = [0, 0, 1, 0], sizes = [1, 16, 15, 1], strides = [1, 1, 1, 1]} : vector<1x16x16x1xf32> to vector<1x16x15x1xf32>
    %cst_44 = arith.constant 0.000000e+00 : f32
    %113 = vector.broadcast %cst_44 : f32 to vector<1x16x1x1xf32>
    %114 = tpu.concatenate %112, %113 in 2 : vector<1x16x15x1xf32>, vector<1x16x1x1xf32> -> vector<1x16x16x1xf32>
    %115 = vector.broadcast %108 : f32 to vector<1x16x16x1xf32>
    %116 = arith.mulf %115, %114 : vector<1x16x16x1xf32>
    %117 = arith.addf %107, %116 : vector<1x16x16x1xf32>
    %118 = arith.addf %98, %117 : vector<1x16x16x1xf32>
    %c3 = arith.constant 3 : index
    %c0_45 = arith.constant 0 : index
    %119 = memref.load %arg4[%c3, %c0_45] : memref<9x2xf32, #tpu.memory_space<smem>>
    %cst_46 = arith.constant 0.000000e+00 : f32
    %120 = vector.broadcast %cst_46 : f32 to vector<1x16x1x1xf32>
    %121 = vector.extract_strided_slice %61 {offsets = [0, 0, 0, 0], sizes = [1, 16, 15, 1], strides = [1, 1, 1, 1]} : vector<1x16x16x1xf32> to vector<1x16x15x1xf32>
    %122 = tpu.concatenate %120, %121 in 2 : vector<1x16x1x1xf32>, vector<1x16x15x1xf32> -> vector<1x16x16x1xf32>
    %123 = vector.broadcast %119 : f32 to vector<1x16x16x1xf32>
    %124 = arith.mulf %123, %122 : vector<1x16x16x1xf32>
    %c3_47 = arith.constant 3 : index
    %c1_48 = arith.constant 1 : index
    %125 = memref.load %arg4[%c3_47, %c1_48] : memref<9x2xf32, #tpu.memory_space<smem>>
    %cst_49 = arith.constant 0.000000e+00 : f32
    %126 = vector.broadcast %cst_49 : f32 to vector<1x16x1x1xf32>
    %127 = vector.extract_strided_slice %63 {offsets = [0, 0, 0, 0], sizes = [1, 16, 15, 1], strides = [1, 1, 1, 1]} : vector<1x16x16x1xf32> to vector<1x16x15x1xf32>
    %128 = tpu.concatenate %126, %127 in 2 : vector<1x16x1x1xf32>, vector<1x16x15x1xf32> -> vector<1x16x16x1xf32>
    %129 = vector.broadcast %125 : f32 to vector<1x16x16x1xf32>
    %130 = arith.mulf %129, %128 : vector<1x16x16x1xf32>
    %131 = arith.addf %124, %130 : vector<1x16x16x1xf32>
    %132 = arith.addf %118, %131 : vector<1x16x16x1xf32>
    %c4 = arith.constant 4 : index
    %c0_50 = arith.constant 0 : index
    %133 = memref.load %arg4[%c4, %c0_50] : memref<9x2xf32, #tpu.memory_space<smem>>
    %134 = vector.broadcast %133 : f32 to vector<1x16x16x1xf32>
    %135 = arith.mulf %134, %61 : vector<1x16x16x1xf32>
    %c4_51 = arith.constant 4 : index
    %c1_52 = arith.constant 1 : index
    %136 = memref.load %arg4[%c4_51, %c1_52] : memref<9x2xf32, #tpu.memory_space<smem>>
    %137 = vector.broadcast %136 : f32 to vector<1x16x16x1xf32>
    %138 = arith.mulf %137, %63 : vector<1x16x16x1xf32>
    %139 = arith.addf %135, %138 : vector<1x16x16x1xf32>
    %140 = arith.addf %132, %139 : vector<1x16x16x1xf32>
    %c5 = arith.constant 5 : index
    %c0_53 = arith.constant 0 : index
    %141 = memref.load %arg4[%c5, %c0_53] : memref<9x2xf32, #tpu.memory_space<smem>>
    %142 = vector.extract_strided_slice %61 {offsets = [0, 0, 1, 0], sizes = [1, 16, 15, 1], strides = [1, 1, 1, 1]} : vector<1x16x16x1xf32> to vector<1x16x15x1xf32>
    %cst_54 = arith.constant 0.000000e+00 : f32
    %143 = vector.broadcast %cst_54 : f32 to vector<1x16x1x1xf32>
    %144 = tpu.concatenate %142, %143 in 2 : vector<1x16x15x1xf32>, vector<1x16x1x1xf32> -> vector<1x16x16x1xf32>
    %145 = vector.broadcast %141 : f32 to vector<1x16x16x1xf32>
    %146 = arith.mulf %145, %144 : vector<1x16x16x1xf32>
    %c5_55 = arith.constant 5 : index
    %c1_56 = arith.constant 1 : index
    %147 = memref.load %arg4[%c5_55, %c1_56] : memref<9x2xf32, #tpu.memory_space<smem>>
    %148 = vector.extract_strided_slice %63 {offsets = [0, 0, 1, 0], sizes = [1, 16, 15, 1], strides = [1, 1, 1, 1]} : vector<1x16x16x1xf32> to vector<1x16x15x1xf32>
    %cst_57 = arith.constant 0.000000e+00 : f32
    %149 = vector.broadcast %cst_57 : f32 to vector<1x16x1x1xf32>
    %150 = tpu.concatenate %148, %149 in 2 : vector<1x16x15x1xf32>, vector<1x16x1x1xf32> -> vector<1x16x16x1xf32>
    %151 = vector.broadcast %147 : f32 to vector<1x16x16x1xf32>
    %152 = arith.mulf %151, %150 : vector<1x16x16x1xf32>
    %153 = arith.addf %146, %152 : vector<1x16x16x1xf32>
    %154 = arith.addf %140, %153 : vector<1x16x16x1xf32>
    %c6 = arith.constant 6 : index
    %c0_58 = arith.constant 0 : index
    %155 = memref.load %arg4[%c6, %c0_58] : memref<9x2xf32, #tpu.memory_space<smem>>
    %156 = vector.extract_strided_slice %61 {offsets = [0, 1, 0, 0], sizes = [1, 15, 16, 1], strides = [1, 1, 1, 1]} : vector<1x16x16x1xf32> to vector<1x15x16x1xf32>
    %cst_59 = arith.constant 0.000000e+00 : f32
    %157 = vector.broadcast %cst_59 : f32 to vector<1x1x16x1xf32>
    %158 = tpu.concatenate %156, %157 in 1 : vector<1x15x16x1xf32>, vector<1x1x16x1xf32> -> vector<1x16x16x1xf32>
    %cst_60 = arith.constant 0.000000e+00 : f32
    %159 = vector.broadcast %cst_60 : f32 to vector<1x16x1x1xf32>
    %160 = vector.extract_strided_slice %158 {offsets = [0, 0, 0, 0], sizes = [1, 16, 15, 1], strides = [1, 1, 1, 1]} : vector<1x16x16x1xf32> to vector<1x16x15x1xf32>
    %161 = tpu.concatenate %159, %160 in 2 : vector<1x16x1x1xf32>, vector<1x16x15x1xf32> -> vector<1x16x16x1xf32>
    %162 = vector.broadcast %155 : f32 to vector<1x16x16x1xf32>
    %163 = arith.mulf %162, %161 : vector<1x16x16x1xf32>
    %c6_61 = arith.constant 6 : index
    %c1_62 = arith.constant 1 : index
    %164 = memref.load %arg4[%c6_61, %c1_62] : memref<9x2xf32, #tpu.memory_space<smem>>
    %165 = vector.extract_strided_slice %63 {offsets = [0, 1, 0, 0], sizes = [1, 15, 16, 1], strides = [1, 1, 1, 1]} : vector<1x16x16x1xf32> to vector<1x15x16x1xf32>
    %cst_63 = arith.constant 0.000000e+00 : f32
    %166 = vector.broadcast %cst_63 : f32 to vector<1x1x16x1xf32>
    %167 = tpu.concatenate %165, %166 in 1 : vector<1x15x16x1xf32>, vector<1x1x16x1xf32> -> vector<1x16x16x1xf32>
    %cst_64 = arith.constant 0.000000e+00 : f32
    %168 = vector.broadcast %cst_64 : f32 to vector<1x16x1x1xf32>
    %169 = vector.extract_strided_slice %167 {offsets = [0, 0, 0, 0], sizes = [1, 16, 15, 1], strides = [1, 1, 1, 1]} : vector<1x16x16x1xf32> to vector<1x16x15x1xf32>
    %170 = tpu.concatenate %168, %169 in 2 : vector<1x16x1x1xf32>, vector<1x16x15x1xf32> -> vector<1x16x16x1xf32>
    %171 = vector.broadcast %164 : f32 to vector<1x16x16x1xf32>
    %172 = arith.mulf %171, %170 : vector<1x16x16x1xf32>
    %173 = arith.addf %163, %172 : vector<1x16x16x1xf32>
    %174 = arith.addf %154, %173 : vector<1x16x16x1xf32>
    %c7 = arith.constant 7 : index
    %c0_65 = arith.constant 0 : index
    %175 = memref.load %arg4[%c7, %c0_65] : memref<9x2xf32, #tpu.memory_space<smem>>
    %176 = vector.extract_strided_slice %61 {offsets = [0, 1, 0, 0], sizes = [1, 15, 16, 1], strides = [1, 1, 1, 1]} : vector<1x16x16x1xf32> to vector<1x15x16x1xf32>
    %cst_66 = arith.constant 0.000000e+00 : f32
    %177 = vector.broadcast %cst_66 : f32 to vector<1x1x16x1xf32>
    %178 = tpu.concatenate %176, %177 in 1 : vector<1x15x16x1xf32>, vector<1x1x16x1xf32> -> vector<1x16x16x1xf32>
    %179 = vector.broadcast %175 : f32 to vector<1x16x16x1xf32>
    %180 = arith.mulf %179, %178 : vector<1x16x16x1xf32>
    %c7_67 = arith.constant 7 : index
    %c1_68 = arith.constant 1 : index
    %181 = memref.load %arg4[%c7_67, %c1_68] : memref<9x2xf32, #tpu.memory_space<smem>>
    %182 = vector.extract_strided_slice %63 {offsets = [0, 1, 0, 0], sizes = [1, 15, 16, 1], strides = [1, 1, 1, 1]} : vector<1x16x16x1xf32> to vector<1x15x16x1xf32>
    %cst_69 = arith.constant 0.000000e+00 : f32
    %183 = vector.broadcast %cst_69 : f32 to vector<1x1x16x1xf32>
    %184 = tpu.concatenate %182, %183 in 1 : vector<1x15x16x1xf32>, vector<1x1x16x1xf32> -> vector<1x16x16x1xf32>
    %185 = vector.broadcast %181 : f32 to vector<1x16x16x1xf32>
    %186 = arith.mulf %185, %184 : vector<1x16x16x1xf32>
    %187 = arith.addf %180, %186 : vector<1x16x16x1xf32>
    %188 = arith.addf %174, %187 : vector<1x16x16x1xf32>
    %c8 = arith.constant 8 : index
    %c0_70 = arith.constant 0 : index
    %189 = memref.load %arg4[%c8, %c0_70] : memref<9x2xf32, #tpu.memory_space<smem>>
    %190 = vector.extract_strided_slice %61 {offsets = [0, 1, 0, 0], sizes = [1, 15, 16, 1], strides = [1, 1, 1, 1]} : vector<1x16x16x1xf32> to vector<1x15x16x1xf32>
    %cst_71 = arith.constant 0.000000e+00 : f32
    %191 = vector.broadcast %cst_71 : f32 to vector<1x1x16x1xf32>
    %192 = tpu.concatenate %190, %191 in 1 : vector<1x15x16x1xf32>, vector<1x1x16x1xf32> -> vector<1x16x16x1xf32>
    %193 = vector.extract_strided_slice %192 {offsets = [0, 0, 1, 0], sizes = [1, 16, 15, 1], strides = [1, 1, 1, 1]} : vector<1x16x16x1xf32> to vector<1x16x15x1xf32>
    %cst_72 = arith.constant 0.000000e+00 : f32
    %194 = vector.broadcast %cst_72 : f32 to vector<1x16x1x1xf32>
    %195 = tpu.concatenate %193, %194 in 2 : vector<1x16x15x1xf32>, vector<1x16x1x1xf32> -> vector<1x16x16x1xf32>
    %196 = vector.broadcast %189 : f32 to vector<1x16x16x1xf32>
    %197 = arith.mulf %196, %195 : vector<1x16x16x1xf32>
    %c8_73 = arith.constant 8 : index
    %c1_74 = arith.constant 1 : index
    %198 = memref.load %arg4[%c8_73, %c1_74] : memref<9x2xf32, #tpu.memory_space<smem>>
    %199 = vector.extract_strided_slice %63 {offsets = [0, 1, 0, 0], sizes = [1, 15, 16, 1], strides = [1, 1, 1, 1]} : vector<1x16x16x1xf32> to vector<1x15x16x1xf32>
    %cst_75 = arith.constant 0.000000e+00 : f32
    %200 = vector.broadcast %cst_75 : f32 to vector<1x1x16x1xf32>
    %201 = tpu.concatenate %199, %200 in 1 : vector<1x15x16x1xf32>, vector<1x1x16x1xf32> -> vector<1x16x16x1xf32>
    %202 = vector.extract_strided_slice %201 {offsets = [0, 0, 1, 0], sizes = [1, 16, 15, 1], strides = [1, 1, 1, 1]} : vector<1x16x16x1xf32> to vector<1x16x15x1xf32>
    %cst_76 = arith.constant 0.000000e+00 : f32
    %203 = vector.broadcast %cst_76 : f32 to vector<1x16x1x1xf32>
    %204 = tpu.concatenate %202, %203 in 2 : vector<1x16x15x1xf32>, vector<1x16x1x1xf32> -> vector<1x16x16x1xf32>
    %205 = vector.broadcast %198 : f32 to vector<1x16x16x1xf32>
    %206 = arith.mulf %205, %204 : vector<1x16x16x1xf32>
    %207 = arith.addf %197, %206 : vector<1x16x16x1xf32>
    %208 = arith.addf %188, %207 : vector<1x16x16x1xf32>
    %cst_77 = arith.constant 0.000000e+00 : f32
    %209 = vector.broadcast %cst_77 : f32 to vector<1x16x16x1xf32>
    %210 = arith.subf %209, %208 : vector<1x16x16x1xf32>
    %211 = math.exp %210 : vector<1x16x16x1xf32>
    %cst_78 = arith.constant 1.000000e+00 : f32
    %212 = vector.broadcast %cst_78 : f32 to vector<1x16x16x1xf32>
    %213 = arith.addf %212, %211 : vector<1x16x16x1xf32>
    %cst_79 = arith.constant 1.000000e+00 : f32
    %214 = vector.broadcast %cst_79 : f32 to vector<1x16x16x1xf32>
    %215 = arith.divf %214, %213 : vector<1x16x16x1xf32>
    %216 = vector.broadcast %215 : vector<1x16x16x1xf32> to vector<1x16x16x16xf32>
    %217 = arith.mulf %57, %216 : vector<1x16x16x16xf32>
    %218 = arith.truncf %217 : vector<1x16x16x16xf32> to vector<1x16x16x16xbf16>
    %cst_80 = arith.constant 0.000000e+00 : bf16
    %219 = vector.broadcast %cst_80 : bf16 to vector<1x1x16x16xbf16>
    %220 = vector.extract_strided_slice %218 {offsets = [0, 0, 0, 0], sizes = [1, 15, 16, 16], strides = [1, 1, 1, 1]} : vector<1x16x16x16xbf16> to vector<1x15x16x16xbf16>
    %221 = tpu.concatenate %219, %220 in 1 : vector<1x1x16x16xbf16>, vector<1x15x16x16xbf16> -> vector<1x16x16x16xbf16>
    %cst_81 = arith.constant 0.000000e+00 : bf16
    %222 = vector.broadcast %cst_81 : bf16 to vector<1x16x1x16xbf16>
    %223 = vector.extract_strided_slice %221 {offsets = [0, 0, 0, 0], sizes = [1, 16, 15, 16], strides = [1, 1, 1, 1]} : vector<1x16x16x16xbf16> to vector<1x16x15x16xbf16>
    %224 = tpu.concatenate %222, %223 in 2 : vector<1x16x1x16xbf16>, vector<1x16x15x16xbf16> -> vector<1x16x16x16xbf16>
    %225 = vector.shape_cast %224 : vector<1x16x16x16xbf16> to vector<256x16xbf16>
    %cst_82 = arith.constant 0.000000e+00 : bf16
    %226 = vector.broadcast %cst_82 : bf16 to vector<1x1x16x16xbf16>
    %227 = vector.extract_strided_slice %218 {offsets = [0, 0, 0, 0], sizes = [1, 15, 16, 16], strides = [1, 1, 1, 1]} : vector<1x16x16x16xbf16> to vector<1x15x16x16xbf16>
    %228 = tpu.concatenate %226, %227 in 1 : vector<1x1x16x16xbf16>, vector<1x15x16x16xbf16> -> vector<1x16x16x16xbf16>
    %229 = vector.shape_cast %228 : vector<1x16x16x16xbf16> to vector<256x16xbf16>
    %cst_83 = arith.constant 0.000000e+00 : bf16
    %230 = vector.broadcast %cst_83 : bf16 to vector<1x1x16x16xbf16>
    %231 = vector.extract_strided_slice %218 {offsets = [0, 0, 0, 0], sizes = [1, 15, 16, 16], strides = [1, 1, 1, 1]} : vector<1x16x16x16xbf16> to vector<1x15x16x16xbf16>
    %232 = tpu.concatenate %230, %231 in 1 : vector<1x1x16x16xbf16>, vector<1x15x16x16xbf16> -> vector<1x16x16x16xbf16>
    %233 = vector.extract_strided_slice %232 {offsets = [0, 0, 1, 0], sizes = [1, 16, 15, 16], strides = [1, 1, 1, 1]} : vector<1x16x16x16xbf16> to vector<1x16x15x16xbf16>
    %cst_84 = arith.constant 0.000000e+00 : bf16
    %234 = vector.broadcast %cst_84 : bf16 to vector<1x16x1x16xbf16>
    %235 = tpu.concatenate %233, %234 in 2 : vector<1x16x15x16xbf16>, vector<1x16x1x16xbf16> -> vector<1x16x16x16xbf16>
    %236 = vector.shape_cast %235 : vector<1x16x16x16xbf16> to vector<256x16xbf16>
    %cst_85 = arith.constant 0.000000e+00 : bf16
    %237 = vector.broadcast %cst_85 : bf16 to vector<1x16x1x16xbf16>
    %238 = vector.extract_strided_slice %218 {offsets = [0, 0, 0, 0], sizes = [1, 16, 15, 16], strides = [1, 1, 1, 1]} : vector<1x16x16x16xbf16> to vector<1x16x15x16xbf16>
    %239 = tpu.concatenate %237, %238 in 2 : vector<1x16x1x16xbf16>, vector<1x16x15x16xbf16> -> vector<1x16x16x16xbf16>
    %240 = vector.shape_cast %239 : vector<1x16x16x16xbf16> to vector<256x16xbf16>
    %241 = vector.shape_cast %218 : vector<1x16x16x16xbf16> to vector<256x16xbf16>
    %242 = vector.extract_strided_slice %218 {offsets = [0, 0, 1, 0], sizes = [1, 16, 15, 16], strides = [1, 1, 1, 1]} : vector<1x16x16x16xbf16> to vector<1x16x15x16xbf16>
    %cst_86 = arith.constant 0.000000e+00 : bf16
    %243 = vector.broadcast %cst_86 : bf16 to vector<1x16x1x16xbf16>
    %244 = tpu.concatenate %242, %243 in 2 : vector<1x16x15x16xbf16>, vector<1x16x1x16xbf16> -> vector<1x16x16x16xbf16>
    %245 = vector.shape_cast %244 : vector<1x16x16x16xbf16> to vector<256x16xbf16>
    %246 = vector.extract_strided_slice %218 {offsets = [0, 1, 0, 0], sizes = [1, 15, 16, 16], strides = [1, 1, 1, 1]} : vector<1x16x16x16xbf16> to vector<1x15x16x16xbf16>
    %cst_87 = arith.constant 0.000000e+00 : bf16
    %247 = vector.broadcast %cst_87 : bf16 to vector<1x1x16x16xbf16>
    %248 = tpu.concatenate %246, %247 in 1 : vector<1x15x16x16xbf16>, vector<1x1x16x16xbf16> -> vector<1x16x16x16xbf16>
    %cst_88 = arith.constant 0.000000e+00 : bf16
    %249 = vector.broadcast %cst_88 : bf16 to vector<1x16x1x16xbf16>
    %250 = vector.extract_strided_slice %248 {offsets = [0, 0, 0, 0], sizes = [1, 16, 15, 16], strides = [1, 1, 1, 1]} : vector<1x16x16x16xbf16> to vector<1x16x15x16xbf16>
    %251 = tpu.concatenate %249, %250 in 2 : vector<1x16x1x16xbf16>, vector<1x16x15x16xbf16> -> vector<1x16x16x16xbf16>
    %252 = vector.shape_cast %251 : vector<1x16x16x16xbf16> to vector<256x16xbf16>
    %253 = vector.extract_strided_slice %218 {offsets = [0, 1, 0, 0], sizes = [1, 15, 16, 16], strides = [1, 1, 1, 1]} : vector<1x16x16x16xbf16> to vector<1x15x16x16xbf16>
    %cst_89 = arith.constant 0.000000e+00 : bf16
    %254 = vector.broadcast %cst_89 : bf16 to vector<1x1x16x16xbf16>
    %255 = tpu.concatenate %253, %254 in 1 : vector<1x15x16x16xbf16>, vector<1x1x16x16xbf16> -> vector<1x16x16x16xbf16>
    %256 = vector.shape_cast %255 : vector<1x16x16x16xbf16> to vector<256x16xbf16>
    %257 = vector.extract_strided_slice %218 {offsets = [0, 1, 0, 0], sizes = [1, 15, 16, 16], strides = [1, 1, 1, 1]} : vector<1x16x16x16xbf16> to vector<1x15x16x16xbf16>
    %cst_90 = arith.constant 0.000000e+00 : bf16
    %258 = vector.broadcast %cst_90 : bf16 to vector<1x1x16x16xbf16>
    %259 = tpu.concatenate %257, %258 in 1 : vector<1x15x16x16xbf16>, vector<1x1x16x16xbf16> -> vector<1x16x16x16xbf16>
    %260 = vector.extract_strided_slice %259 {offsets = [0, 0, 1, 0], sizes = [1, 16, 15, 16], strides = [1, 1, 1, 1]} : vector<1x16x16x16xbf16> to vector<1x16x15x16xbf16>
    %cst_91 = arith.constant 0.000000e+00 : bf16
    %261 = vector.broadcast %cst_91 : bf16 to vector<1x16x1x16xbf16>
    %262 = tpu.concatenate %260, %261 in 2 : vector<1x16x15x16xbf16>, vector<1x16x1x16xbf16> -> vector<1x16x16x16xbf16>
    %263 = vector.shape_cast %262 : vector<1x16x16x16xbf16> to vector<256x16xbf16>
    %264 = tpu.concatenate %225, %229, %236, %240, %241, %245, %252, %256, %263 in 1 : vector<256x16xbf16>, vector<256x16xbf16>, vector<256x16xbf16>, vector<256x16xbf16>, vector<256x16xbf16>, vector<256x16xbf16>, vector<256x16xbf16>, vector<256x16xbf16>, vector<256x16xbf16> -> vector<256x144xbf16>
    %c0_92 = arith.constant 0 : index
    %c0_93 = arith.constant 0 : index
    %265 = vector.load %arg5[%c0_92, %c0_93] : memref<144x3xbf16, #tpu.memory_space<vmem>>, vector<144x3xbf16>
    %cst_94 = arith.constant dense<0.000000e+00> : vector<256x3xf32>
    %266 = tpu.matmul %264, %265, %cst_94 {dimension_numbers = #tpu.dot_dimension_numbers<[1], [0], [0], [1], [0, 0, 1, 1], [], []>} : vector<256x144xbf16>, vector<144x3xbf16>, vector<256x3xf32> -> vector<256x3xf32>
    %c0_95 = arith.constant 0 : index
    %c0_96 = arith.constant 0 : index
    %267 = vector.load %arg6[%c0_95, %c0_96] : memref<1x3xf32, #tpu.memory_space<vmem>>, vector<1x3xf32>
    %268 = vector.broadcast %267 : vector<1x3xf32> to vector<256x3xf32>
    %269 = arith.addf %266, %268 : vector<256x3xf32>
    %270 = vector.shape_cast %269 : vector<256x3xf32> to vector<1x16x16x3xf32>
    %c0_97 = arith.constant 0 : index
    %c0_98 = arith.constant 0 : index
    %c0_99 = arith.constant 0 : index
    %c0_100 = arith.constant 0 : index
    %271 = vector.load %arg7[%c0_97, %c0_98, %c0_99, %c0_100] : memref<1x16x16x3xf32, #tpu.memory_space<vmem>>, vector<1x16x16x3xf32>
    tpu.vector_store %arg7[%c0_97, %c0_98, %c0_99, %c0_100], %270 {strides = array<i32>} : memref<1x16x16x3xf32, #tpu.memory_space<vmem>>, vector<1x16x16x3xf32>,
    return
  }
  func.func @transform_0(%arg0: i32) -> (i32, i32, i32, i32) {
    %c0_i32 = arith.constant 0 : i32
    %c0_i32_0 = arith.constant 0 : i32
    %c0_i32_1 = arith.constant 0 : i32
    %c0_i32_2 = arith.constant 0 : i32
    return %arg0, %c0_i32, %c0_i32_0, %c0_i32_1 : i32, i32, i32, i32
  }
  func.func @transform_1(%arg0: i32) -> (i32, i32) {
    %c0_i32 = arith.constant 0 : i32
    %c0_i32_0 = arith.constant 0 : i32
    %c0_i32_1 = arith.constant 0 : i32
    return %c0_i32, %c0_i32_0 : i32, i32
  }
  func.func @transform_2(%arg0: i32) -> (i32, i32) {
    %c0_i32 = arith.constant 0 : i32
    %c0_i32_0 = arith.constant 0 : i32
    %c0_i32_1 = arith.constant 0 : i32
    return %c0_i32, %c0_i32_0 : i32, i32
  }
  func.func @transform_3(%arg0: i32) -> (i32, i32) {
    %c0_i32 = arith.constant 0 : i32
    %c0_i32_0 = arith.constant 0 : i32
    %c0_i32_1 = arith.constant 0 : i32
    return %c0_i32, %c0_i32_0 : i32, i32
  }
  func.func @transform_4(%arg0: i32) -> (i32, i32) {
    %c0_i32 = arith.constant 0 : i32
    %c0_i32_0 = arith.constant 0 : i32
    %c0_i32_1 = arith.constant 0 : i32
    return %c0_i32, %c0_i32_0 : i32, i32
  }
  func.func @transform_5(%arg0: i32) -> (i32, i32) {
    %c0_i32 = arith.constant 0 : i32
    %c0_i32_0 = arith.constant 0 : i32
    %c0_i32_1 = arith.constant 0 : i32
    return %c0_i32, %c0_i32_0 : i32, i32
  }
  func.func @transform_6(%arg0: i32) -> (i32, i32, i32, i32) {
    %c0_i32 = arith.constant 0 : i32
    %c0_i32_0 = arith.constant 0 : i32
    %c0_i32_1 = arith.constant 0 : i32
    %c0_i32_2 = arith.constant 0 : i32
    return %arg0, %c0_i32, %c0_i32_0, %c0_i32_1 : i32, i32, i32, i32
  }
}

</mosaic_0001>

<llo_original>
// kernel: tpu_custom_call.1
$region0: #{tpu_custom_call.1}
  #allocation0 [shape = 'u32[]', space=smem, size = 0x4, offset = 0x4, fixed_abs, tag = 'smem constant byte address 0x4 - core index']
  #allocation1 [shape = 'u32[144,128]{1,0:T(1,128)}', space=vmem, size = 0x12000, scoped, tag = 'internal scratch']
  %s0 = inlined_call_operand.vmem [shape: bf16[2,16,16,6], index: 0, kind: input, shape index: {}]
  %s1 = inlined_call_operand.vmem [shape: bf16[54,16], index: 1, kind: input, shape index: {}]
  %s2 = inlined_call_operand.vmem [shape: f32[1,16], index: 2, kind: input, shape index: {}]
  %s3 = inlined_call_operand.vmem [shape: f32[9,2], index: 3, kind: input, shape index: {}]
  %s4 = inlined_call_operand.vmem [shape: bf16[144,3], index: 4, kind: input, shape index: {}]
  %s5 = inlined_call_operand.vmem [shape: f32[1,3], index: 5, kind: input, shape index: {}]
  %s6 = inlined_call_operand.vmem [shape: f32[2,16,16,3], index: 6, kind: output, shape index: {}]
  %s7 = sld [smem:[#allocation0]]
  $region61: #{tpu_custom_call.1} parent=0
    _
  %s9 = ssub.s32 1, %s7
  %s10 = scalar_select 0, %s9, %s7
  $region1: #{tpu_custom_call.1} parent=0
    #allocation2 [shape = 'u8[8192]{0}', space=smem, size = 0x2000, scoped, tag = 'input window, operand 3, single buffered']
    #allocation3 [shape = 's32[2]{0}', space=sflag, size = 0x8, scoped, tag = 'scoped memory for tpu_custom_call.1']
    %11 = vsyncpa [#allocation3], 0
    loop: start=0, step=1, limit=4
    $region2: #{tpu_custom_call.1} parent=1 // loop_pre_header
      _
    $region3: #{tpu_custom_call.1} parent=1 // loop_header
      %s13 = sphi 0, %s17
      %p14 = scmp.ge.s32.totalorder %s13, 4
      %s23 = sphi 0, %s25
      %s26 = sphi 0, %s23
      %s27 = sphi 0, %s26
      %s43 = sphi 0, %s27
      %s47 = sphi 0, %s47
      %s49 = sphi 0, %s47
      %s50 = sphi 0, %s49
      %s64 = sphi 0, %s50
      %s68 = sphi 0, %s68
      %s70 = sphi 0, %s68
      %s71 = sphi 0, %s70
      %s85 = sphi 0, %s71
      %s89 = sphi 0, %s89
      %s91 = sphi 0, %s89
      %s92 = sphi 0, %s91
      %s106 = sphi 0, %s92
      %s110 = sphi 0, %s110
      %s112 = sphi 0, %s110
      %s113 = sphi 0, %s112
      %s127 = sphi 0, %s113
      %s131 = sphi 0, %s131
      %s133 = sphi 0, %s131
      %s134 = sphi 0, %s133
      %s148 = sphi 0, %s134
      %s154 = sphi 0, %s156
      %s157 = sphi 0, %s154
      %s158 = sphi 0, %s157
      %s174 = sphi 0, %s158
    $region4: #{tpu_custom_call.1} parent=1 // loop_header_branch
      %16 = sbr.rel (%p14) target = $region8
    $region5: #{tpu_custom_call.1} parent=1 // loop_body
      %s18 = ssub.s32 %s13, 1
      %s19 = ssub.s32 %s13, 2
      %s20 = sadd.s32 %s13, 1
      %s21 = ssub.s32 %s13, %s20
      %p22 = scmp.eq.s32.totalorder %s21, 0
      %s24 = sadd.s32 %s23, 1
      %s25 = scalar_select %p22, %s23, %s24
      %p28 = pneg %p22
      %p29 = scmp.eq.s32.totalorder %s13, 1
      %p30 = por %p28, %p29
      %p31 = scmp.ne.s32.totalorder %s23, %s26
      %p32 = scmp.eq.s32.totalorder %s13, 0
      %p33 = por %p31, %p32
      %p34 = scmp.ne.s32.totalorder %s23, %s26
      %p35 = scmp.eq.s32.totalorder %s18, 1
      %p36 = por %p34, %p35
      %p37 = scmp.ne.s32.totalorder %s26, %s27
      %p38 = scmp.eq.s32.totalorder %s18, 0
      %p39 = por %p37, %p38
      %p40 = scmp.ne.s32.totalorder %s26, %s27
      %p41 = scmp.eq.s32.totalorder %s19, 1
      %p42 = por %p40, %p41
      %p44 = scmp.ne.s32.totalorder %s27, %s43
      %p45 = scmp.eq.s32.totalorder %s19, 0
      %p46 = por %p44, %p45
      %s48 = sadd.s32 %s47, 1
      %p51 = scmp.eq.s32.totalorder %s13, 1
      %p52 = scmp.ne.s32.totalorder %s47, %s49
      %p53 = scmp.eq.s32.totalorder %s13, 0
      %p54 = por %p52, %p53
      %p55 = scmp.ne.s32.totalorder %s47, %s49
      %p56 = scmp.eq.s32.totalorder %s18, 1
      %p57 = por %p55, %p56
      %p58 = scmp.ne.s32.totalorder %s49, %s50
      %p59 = scmp.eq.s32.totalorder %s18, 0
      %p60 = por %p58, %p59
      %p61 = scmp.ne.s32.totalorder %s49, %s50
      %p62 = scmp.eq.s32.totalorder %s19, 1
      %p63 = por %p61, %p62
      %p65 = scmp.ne.s32.totalorder %s50, %s64
      %p66 = scmp.eq.s32.totalorder %s19, 0
      %p67 = por %p65, %p66
      %s69 = sadd.s32 %s68, 1
      %p72 = scmp.eq.s32.totalorder %s13, 1
      %p73 = scmp.ne.s32.totalorder %s68, %s70
      %p74 = scmp.eq.s32.totalorder %s13, 0
      %p75 = por %p73, %p74
      %p76 = scmp.ne.s32.totalorder %s68, %s70
      %p77 = scmp.eq.s32.totalorder %s18, 1
      %p78 = por %p76, %p77
      %p79 = scmp.ne.s32.totalorder %s70, %s71
      %p80 = scmp.eq.s32.totalorder %s18, 0
      %p81 = por %p79, %p80
      %p82 = scmp.ne.s32.totalorder %s70, %s71
      %p83 = scmp.eq.s32.totalorder %s19, 1
      %p84 = por %p82, %p83
      %p86 = scmp.ne.s32.totalorder %s71, %s85
      %p87 = scmp.eq.s32.totalorder %s19, 0
      %p88 = por %p86, %p87
      %s90 = sadd.s32 %s89, 1
      %p93 = scmp.eq.s32.totalorder %s13, 1
      %p94 = scmp.ne.s32.totalorder %s89, %s91
      %p95 = scmp.eq.s32.totalorder %s13, 0
      %p96 = por %p94, %p95
      %p97 = scmp.ne.s32.totalorder %s89, %s91
      %p98 = scmp.eq.s32.totalorder %s18, 1
      %p99 = por %p97, %p98
      %p100 = scmp.ne.s32.totalorder %s91, %s92
      %p101 = scmp.eq.s32.totalorder %s18, 0
      %p102 = por %p100, %p101
      %p103 = scmp.ne.s32.totalorder %s91, %s92
      %p104 = scmp.eq.s32.totalorder %s19, 1
      %p105 = por %p103, %p104
      %p107 = scmp.ne.s32.totalorder %s92, %s106
      %p108 = scmp.eq.s32.totalorder %s19, 0
      %p109 = por %p107, %p108
      %s111 = sadd.s32 %s110, 1
      %p114 = scmp.eq.s32.totalorder %s13, 1
      %p115 = scmp.ne.s32.totalorder %s110, %s112
      %p116 = scmp.eq.s32.totalorder %s13, 0
      %p117 = por %p115, %p116
      %p118 = scmp.ne.s32.totalorder %s110, %s112
      %p119 = scmp.eq.s32.totalorder %s18, 1
      %p120 = por %p118, %p119
      %p121 = scmp.ne.s32.totalorder %s112, %s113
      %p122 = scmp.eq.s32.totalorder %s18, 0
      %p123 = por %p121, %p122
      %p124 = scmp.ne.s32.totalorder %s112, %s113
      %p125 = scmp.eq.s32.totalorder %s19, 1
      %p126 = por %p124, %p125
      %p128 = scmp.ne.s32.totalorder %s113, %s127
      %p129 = scmp.eq.s32.totalorder %s19, 0
      %p130 = por %p128, %p129
      %s132 = sadd.s32 %s131, 1
      %p135 = scmp.eq.s32.totalorder %s13, 1
      %p136 = scmp.ne.s32.totalorder %s131, %s133
      %p137 = scmp.eq.s32.totalorder %s13, 0
      %p138 = por %p136, %p137
      %p139 = scmp.ne.s32.totalorder %s131, %s133
      %p140 = scmp.eq.s32.totalorder %s18, 1
      %p141 = por %p139, %p140
      %p142 = scmp.ne.s32.totalorder %s133, %s134
      %p143 = scmp.eq.s32.totalorder %s18, 0
      %p144 = por %p142, %p143
      %p145 = scmp.ne.s32.totalorder %s133, %s134
      %p146 = scmp.eq.s32.totalorder %s19, 1
      %p147 = por %p145, %p146
      %p149 = scmp.ne.s32.totalorder %s134, %s148
      %p150 = scmp.eq.s32.totalorder %s19, 0
      %p151 = por %p149, %p150
      %s152 = ssub.s32 %s13, %s20
      %p153 = scmp.eq.s32.totalorder %s152, 0
      %s155 = sadd.s32 %s154, 1
      %s156 = scalar_select %p153, %s154, %s155
      %p159 = pneg %p153
      %p160 = scmp.eq.s32.totalorder %s13, 1
      %p161 = por %p159, %p160
      %p162 = scmp.ne.s32.totalorder %s154, %s157
      %p163 = scmp.eq.s32.totalorder %s13, 0
      %p164 = por %p162, %p163
      %p165 = scmp.ne.s32.totalorder %s154, %s157
      %p166 = scmp.eq.s32.totalorder %s18, 1
      %p167 = por %p165, %p166
      %p168 = scmp.ne.s32.totalorder %s157, %s158
      %p169 = scmp.eq.s32.totalorder %s18, 0
      %p170 = por %p168, %p169
      %p171 = scmp.ne.s32.totalorder %s157, %s158
      %p172 = scmp.eq.s32.totalorder %s19, 1
      %p173 = por %p171, %p172
      %p175 = scmp.ne.s32.totalorder %s158, %s174
      %p176 = scmp.eq.s32.totalorder %s19, 0
      %p177 = por %p175, %p176
      %p178 = scmp.le.s32.totalorder 1, %s13
      %p179 = scmp.lt.s32.totalorder %s13, 3
      %p180 = pnand %p178, %p179
      %p181 = pneg %p180
      // Predicated region
      $region9: #{tpu_custom_call.1} parent=5 // pred_check
        _
      $region10: #{tpu_custom_call.1} parent=5 // pred_check_branch
        %183 = sbr.rel (%p180) target = $region12
      $region11: #{tpu_custom_call.1} parent=5 // pred_region
        %s184 = ssub.s32 %s13, 1
        // Predicated region
        $region13: #{tpu_custom_call.1} parent=11 // pred_check
          %p185 = pneg %p60
        $region14: #{tpu_custom_call.1} parent=11 // pred_check_branch
          %187 = sbr.rel (%p185) target = $region16
        $region15: #{tpu_custom_call.1} parent=11 // pred_region
          _
        $region16: #{tpu_custom_call.1} parent=11 // pred_fallthru
          _
        // Predicated region
        $region17: #{tpu_custom_call.1} parent=11 // pred_check
          %p188 = pneg %p81
        $region18: #{tpu_custom_call.1} parent=11 // pred_check_branch
          %190 = sbr.rel (%p188) target = $region20
        $region19: #{tpu_custom_call.1} parent=11 // pred_region
          _
        $region20: #{tpu_custom_call.1} parent=11 // pred_fallthru
          _
        // Predicated region
        $region21: #{tpu_custom_call.1} parent=11 // pred_check
          %p191 = pneg %p102
        $region22: #{tpu_custom_call.1} parent=11 // pred_check_branch
          %193 = sbr.rel (%p191) target = $region24
        $region23: #{tpu_custom_call.1} parent=11 // pred_region
          %s195 = ssub.s32 256, 256
          %196 = vsyncadd [#allocation3], %s195
          %s197 = sshll.u32 %s3, 4
          %s198 = int_to_ptr.vmem [resolvable:$true] %s197
          %203 = dma.vmem_to_smem %s198, 256, [#allocation2], [#allocation3], 128, 128, 8
        $region24: #{tpu_custom_call.1} parent=11 // pred_fallthru
          _
        // Predicated region
        $region25: #{tpu_custom_call.1} parent=11 // pred_check
          %p204 = pneg %p123
        $region26: #{tpu_custom_call.1} parent=11 // pred_check_branch
          %206 = sbr.rel (%p204) target = $region28
        $region27: #{tpu_custom_call.1} parent=11 // pred_region
          _
        $region28: #{tpu_custom_call.1} parent=11 // pred_fallthru
          _
        // Predicated region
        $region29: #{tpu_custom_call.1} parent=11 // pred_check
          %p207 = pneg %p144
        $region30: #{tpu_custom_call.1} parent=11 // pred_check_branch
          %209 = sbr.rel (%p207) target = $region32
        $region31: #{tpu_custom_call.1} parent=11 // pred_region
          _
        $region32: #{tpu_custom_call.1} parent=11 // pred_fallthru
          _
      $region12: #{tpu_custom_call.1} parent=5 // pred_fallthru
        _
      %p210 = scmp.lt.s32.totalorder %s13, 2
      // Predicated region
      $region33: #{tpu_custom_call.1} parent=5 // pred_check
        %p211 = pneg %p210
      $region34: #{tpu_custom_call.1} parent=5 // pred_check_branch
        %213 = sbr.rel (%p211) target = $region36
      $region35: #{tpu_custom_call.1} parent=5 // pred_region
        // Predicated region
        $region37: #{tpu_custom_call.1} parent=35 // pred_check
          %p214 = pneg %p33
        $region38: #{tpu_custom_call.1} parent=35 // pred_check_branch
          %216 = sbr.rel (%p214) target = $region40
        $region39: #{tpu_custom_call.1} parent=35 // pred_region
          %p217 = scmp.lt.s32.totalorder %s13, 1
          %s218 = scalar_select %p217, %s13, 1
          %s219 = smul.addr %s218, 32
          %s220 = smul.addr %s219, 4
          %s221 = scalar_lea.vmem %s0, %s220
        $region40: #{tpu_custom_call.1} parent=35 // pred_fallthru
          _
      $region36: #{tpu_custom_call.1} parent=5 // pred_fallthru
        _
      %p222 = scmp.le.s32.totalorder 1, %s13
      %p223 = scmp.lt.s32.totalorder %s13, 3
      %p224 = pnand %p222, %p223
      %p225 = pneg %p224
      // Predicated region
      $region41: #{tpu_custom_call.1} parent=5 // pred_check
        _
      $region42: #{tpu_custom_call.1} parent=5 // pred_check_branch
        %227 = sbr.rel (%p224) target = $region44
      $region43: #{tpu_custom_call.1} parent=5 // pred_region
        %s228 = ssub.s32 %s13, 1
        // Predicated region
        $region45: #{tpu_custom_call.1} parent=43 // pred_check
          %p229 = pneg %p102
        $region46: #{tpu_custom_call.1} parent=43 // pred_check_branch
          %231 = sbr.rel (%p229) target = $region48
        $region47: #{tpu_custom_call.1} parent=43 // pred_region
          %232 = dma.done [#allocation3], 256
        $region48: #{tpu_custom_call.1} parent=43 // pred_fallthru
          _
        %233 = sfence
        %p234 = scmp.lt.s32.totalorder %s18, 1
        %s235 = scalar_select %p234, %s18, 1
        %s236 = smul.addr %s235, 32
        %s237 = smul.addr %s236, 4
        %s238 = scalar_lea.vmem %s0, %s237
        %p239 = pneg %p39
        %p240 = pneg %p36
        %p241 = pneg %p60
        %p242 = pneg %p57
        %p243 = pneg %p81
        %p244 = pneg %p78
        %p245 = pneg %p102
        %p246 = pneg %p99
        %p247 = pneg %p123
        %p248 = pneg %p120
        %p249 = pneg %p144
        %p250 = pneg %p141
        %p251 = pneg %p170
        %p252 = pneg %p167
        %p253 = scmp.lt.s32.totalorder %s18, 1
        %s254 = scalar_select %p253, %s18, 1
        %s255 = smul.addr %s254, 32
        %s256 = smul.addr %s255, 8
        %s257 = scalar_lea.vmem %s6, %s256
        %p258 = scmp.lt.s32.totalorder %s18, 1
        %s259 = scalar_select %p258, %s18, 1
        %s260 = smul.addr %s259, 32
        %s261 = smul.addr %s260, 4
        %s262 = scalar_lea.vmem %s0, %s261
        %p263 = scmp.lt.s32.totalorder %s18, 1
        %s264 = scalar_select %p263, %s18, 1
        %s265 = smul.addr %s264, 32
        %s266 = smul.addr %s265, 8
        %s267 = scalar_lea.vmem %s6, %s266
        %v269 = vld [vmem:[%s262] sm:$0xf]
        %v270 = vld [vmem:[%s262 + $0x4] sm:$0xf]
        %v271 = vld [vmem:[%s262 + $0x8] sm:$0xf]
        %v272 = vld [vmem:[%s262 + $0xc] sm:$0xf]
        %v273 = vld [vmem:[%s262 + $0x10] sm:$0xf]
        %v274 = vld [vmem:[%s262 + $0x14] sm:$0xf]
        %v275 = vld [vmem:[%s262 + $0x18] sm:$0xf]
        %v276 = vld [vmem:[%s262 + $0x1c] sm:$0xf]
        %v277 = vld [vmem:[%s262 + $0x20] sm:$0xf]
        %v278 = vld [vmem:[%s262 + $0x24] sm:$0xf]
        %v279 = vld [vmem:[%s262 + $0x28] sm:$0xf]
        %v280 = vld [vmem:[%s262 + $0x2c] sm:$0xf]
        %v281 = vld [vmem:[%s262 + $0x30] sm:$0xf]
        %v282 = vld [vmem:[%s262 + $0x34] sm:$0xf]
        %v283 = vld [vmem:[%s262 + $0x38] sm:$0xf]
        %v284 = vld [vmem:[%s262 + $0x3c] sm:$0xf]
        %v285 = vld [vmem:[%s262 + $0x40] sm:$0xf]
        %v286 = vld [vmem:[%s262 + $0x44] sm:$0xf]
        %v287 = vld [vmem:[%s262 + $0x48] sm:$0xf]
        %v288 = vld [vmem:[%s262 + $0x4c] sm:$0xf]
        %v289 = vld [vmem:[%s262 + $0x50] sm:$0xf]
        %v290 = vld [vmem:[%s262 + $0x54] sm:$0xf]
        %v291 = vld [vmem:[%s262 + $0x58] sm:$0xf]
        %v292 = vld [vmem:[%s262 + $0x5c] sm:$0xf]
        %v293 = vld [vmem:[%s262 + $0x60] sm:$0xf]
        %v294 = vld [vmem:[%s262 + $0x64] sm:$0xf]
        %v295 = vld [vmem:[%s262 + $0x68] sm:$0xf]
        %v296 = vld [vmem:[%s262 + $0x6c] sm:$0xf]
        %v297 = vld [vmem:[%s262 + $0x70] sm:$0xf]
        %v298 = vld [vmem:[%s262 + $0x74] sm:$0xf]
        %v299 = vld [vmem:[%s262 + $0x78] sm:$0xf]
        %v300 = vld [vmem:[%s262 + $0x7c] sm:$0xf]
        %v331 = vunpack.c.l.b16 %v269
        %v332 = vunpack.c.l.b16 %v270
        %v333 = vunpack.c.l.b16 %v271
        %v334 = vunpack.c.l.b16 %v272
        %v335 = vunpack.c.l.b16 %v273
        %v336 = vunpack.c.l.b16 %v274
        %v337 = vunpack.c.l.b16 %v275
        %v338 = vunpack.c.l.b16 %v276
        %v339 = vunpack.c.l.b16 %v277
        %v340 = vunpack.c.l.b16 %v278
        %v341 = vunpack.c.l.b16 %v279
        %v342 = vunpack.c.l.b16 %v280
        %v343 = vunpack.c.l.b16 %v281
        %v344 = vunpack.c.l.b16 %v282
        %v345 = vunpack.c.l.b16 %v283
        %v346 = vunpack.c.l.b16 %v284
        %v347 = vunpack.c.l.b16 %v285
        %v348 = vunpack.c.l.b16 %v286
        %v349 = vunpack.c.l.b16 %v287
        %v350 = vunpack.c.l.b16 %v288
        %v351 = vunpack.c.l.b16 %v289
        %v352 = vunpack.c.l.b16 %v290
        %v353 = vunpack.c.l.b16 %v291
        %v354 = vunpack.c.l.b16 %v292
        %v355 = vunpack.c.l.b16 %v293
        %v356 = vunpack.c.l.b16 %v294
        %v357 = vunpack.c.l.b16 %v295
        %v358 = vunpack.c.l.b16 %v296
        %v359 = vunpack.c.l.b16 %v297
        %v360 = vunpack.c.l.b16 %v298
        %v361 = vpack.c.b16 %v332, %v331
        %v362 = vpack.c.b16 %v334, %v333
        %v363 = vpack.c.b16 %v336, %v335
        %v364 = vpack.c.b16 %v338, %v337
        %v365 = vpack.c.b16 %v340, %v339
        %v366 = vpack.c.b16 %v342, %v341
        %v367 = vpack.c.b16 %v344, %v343
        %v368 = vpack.c.b16 %v346, %v345
        %v369 = vpack.c.b16 %v348, %v347
        %v370 = vpack.c.b16 %v350, %v349
        %v371 = vpack.c.b16 %v352, %v351
        %v372 = vpack.c.b16 %v354, %v353
        %v373 = vpack.c.b16 %v356, %v355
        %v374 = vpack.c.b16 %v358, %v357
        %v375 = vpack.c.b16 %v360, %v359
        %v377 = vshrl.u32 0, 16
        %v379 = vrot.slane %v377, 7
        %v380 = vshll.u32 0, 16
        %v382 = vor.u32 %v379, %v380
        %v384 = vshrl.u32 %v361, 16
        %v386 = vrot.slane %v384, 7
        %v387 = vshll.u32 %v361, 16
        %v389 = vor.u32 %v386, %v387
        %v391 = vshrl.u32 %v362, 16
        %v393 = vrot.slane %v391, 7
        %v394 = vshll.u32 %v362, 16
        %v396 = vor.u32 %v393, %v394
        %v398 = vshrl.u32 %v363, 16
        %v400 = vrot.slane %v398, 7
        %v401 = vshll.u32 %v363, 16
        %v403 = vor.u32 %v400, %v401
        %v405 = vshrl.u32 %v364, 16
        %v407 = vrot.slane %v405, 7
        %v408 = vshll.u32 %v364, 16
        %v410 = vor.u32 %v407, %v408
        %v412 = vshrl.u32 %v365, 16
        %v414 = vrot.slane %v412, 7
        %v415 = vshll.u32 %v365, 16
        %v417 = vor.u32 %v414, %v415
        %v419 = vshrl.u32 %v366, 16
        %v421 = vrot.slane %v419, 7
        %v422 = vshll.u32 %v366, 16
        %v424 = vor.u32 %v421, %v422
        %v426 = vshrl.u32 %v367, 16
        %v428 = vrot.slane %v426, 7
        %v429 = vshll.u32 %v367, 16
        %v431 = vor.u32 %v428, %v429
        %v433 = vshrl.u32 %v368, 16
        %v435 = vrot.slane %v433, 7
        %v436 = vshll.u32 %v368, 16
        %v438 = vor.u32 %v435, %v436
        %v440 = vshrl.u32 %v369, 16
        %v442 = vrot.slane %v440, 7
        %v443 = vshll.u32 %v369, 16
        %v445 = vor.u32 %v442, %v443
        %v447 = vshrl.u32 %v370, 16
        %v449 = vrot.slane %v447, 7
        %v450 = vshll.u32 %v370, 16
        %v452 = vor.u32 %v449, %v450
        %v454 = vshrl.u32 %v371, 16
        %v456 = vrot.slane %v454, 7
        %v457 = vshll.u32 %v371, 16
        %v459 = vor.u32 %v456, %v457
        %v461 = vshrl.u32 %v372, 16
        %v463 = vrot.slane %v461, 7
        %v464 = vshll.u32 %v372, 16
        %v466 = vor.u32 %v463, %v464
        %v468 = vshrl.u32 %v373, 16
        %v470 = vrot.slane %v468, 7
        %v471 = vshll.u32 %v373, 16
        %v473 = vor.u32 %v470, %v471
        %v475 = vshrl.u32 %v374, 16
        %v477 = vrot.slane %v475, 7
        %v478 = vshll.u32 %v374, 16
        %v480 = vor.u32 %v477, %v478
        %v482 = vshrl.u32 %v375, 16
        %v484 = vrot.slane %v482, 7
        %v485 = vshll.u32 %v375, 16
        %v487 = vor.u32 %v484, %v485
        %vm504 = vcmask 1040384
        %vm505 = vsmask.f32 256
        %vm506 = vmand %vm504, %vm505
        %v507 = vsel %vm506, 0, %v382
        %v508 = vsel %vm506, 0, %v389
        %v509 = vsel %vm506, 0, %v396
        %v510 = vsel %vm506, 0, %v403
        %v511 = vsel %vm506, 0, %v410
        %v512 = vsel %vm506, 0, %v417
        %v513 = vsel %vm506, 0, %v424
        %v514 = vsel %vm506, 0, %v431
        %v515 = vsel %vm506, 0, %v438
        %v516 = vsel %vm506, 0, %v445
        %v517 = vsel %vm506, 0, %v452
        %v518 = vsel %vm506, 0, %v459
        %v519 = vsel %vm506, 0, %v466
        %v520 = vsel %vm506, 0, %v473
        %v521 = vsel %vm506, 0, %v480
        %v522 = vsel %vm506, 0, %v487
        %v523 = vrot.slane %v380, 1
        %v524 = vor.u32 %v377, %v523
        %v525 = vrot.slane %v387, 1
        %v526 = vor.u32 %v384, %v525
        %v527 = vrot.slane %v394, 1
        %v528 = vor.u32 %v391, %v527
        %v529 = vrot.slane %v401, 1
        %v530 = vor.u32 %v398, %v529
        %v531 = vrot.slane %v408, 1
        %v532 = vor.u32 %v405, %v531
        %v533 = vrot.slane %v415, 1
        %v534 = vor.u32 %v412, %v533
        %v535 = vrot.slane %v422, 1
        %v536 = vor.u32 %v419, %v535
        %v537 = vrot.slane %v429, 1
        %v538 = vor.u32 %v426, %v537
        %v539 = vrot.slane %v436, 1
        %v540 = vor.u32 %v433, %v539
        %v541 = vrot.slane %v443, 1
        %v542 = vor.u32 %v440, %v541
        %v543 = vrot.slane %v450, 1
        %v544 = vor.u32 %v447, %v543
        %v545 = vrot.slane %v457, 1
        %v546 = vor.u32 %v454, %v545
        %v547 = vrot.slane %v464, 1
        %v548 = vor.u32 %v461, %v547
        %v549 = vrot.slane %v471, 1
        %v550 = vor.u32 %v468, %v549
        %v551 = vrot.slane %v478, 1
        %v552 = vor.u32 %v475, %v551
        %v553 = vrot.slane %v485, 1
        %v554 = vor.u32 %v482, %v553
        %vm571 = vcmask 1047552
        %vm572 = vsmask.f32 7424
        %vm573 = vmand %vm571, %vm572
        %v574 = vsel %vm573, %v524, 0
        %v575 = vsel %vm573, %v526, 0
        %v576 = vsel %vm573, %v528, 0
        %v577 = vsel %vm573, %v530, 0
        %v578 = vsel %vm573, %v532, 0
        %v579 = vsel %vm573, %v534, 0
        %v580 = vsel %vm573, %v536, 0
        %v581 = vsel %vm573, %v538, 0
        %v582 = vsel %vm573, %v540, 0
        %v583 = vsel %vm573, %v542, 0
        %v584 = vsel %vm573, %v544, 0
        %v585 = vsel %vm573, %v546, 0
        %v586 = vsel %vm573, %v548, 0
        %v587 = vsel %vm573, %v550, 0
        %v588 = vsel %vm573, %v552, 0
        %v589 = vsel %vm573, %v554, 0
        %v592 = vunpack.c.l.b16 %v299
        %v593 = vunpack.c.l.b16 %v300
        %v594 = vpack.c.b16 %v593, %v592
        %v596 = vshrl.u32 %v594, 16
        %v598 = vrot.slane %v596, 7
        %v599 = vshll.u32 %v594, 16
        %v601 = vor.u32 %v598, %v599
        %v603 = vsel %vm506, 0, %v601
        %v604 = vrot.slane %v599, 1
        %v605 = vor.u32 %v596, %v604
        %v607 = vsel %vm573, %v605, 0
        %v609 = vunpack.c.l.b16 0
        %v610 = vpack.c.b16 %v609, %v609
        %v612 = vshrl.u32 %v610, 16
        %v614 = vrot.slane %v612, 7
        %v615 = vshll.u32 %v610, 16
        %v617 = vor.u32 %v614, %v615
        %v619 = vsel %vm506, 0, %v617
        %v620 = vrot.slane %v615, 1
        %v621 = vor.u32 %v612, %v620
        %v623 = vsel %vm573, %v621, 0
        %624 = vrot.lane.b32.xlu0 0, 6
        %v625 = vpop.permute.xlu0 %624
        %626 = vrot.lane.b32.xlu0 %v361, 6
        %v627 = vpop.permute.xlu0 %626
        %628 = vrot.lane.b32.xlu0 %v362, 6
        %v629 = vpop.permute.xlu0 %628
        %630 = vrot.lane.b32.xlu0 %v363, 6
        %v631 = vpop.permute.xlu0 %630
        %632 = vrot.lane.b32.xlu0 %v364, 6
        %v633 = vpop.permute.xlu0 %632
        %634 = vrot.lane.b32.xlu0 %v365, 6
        %v635 = vpop.permute.xlu0 %634
        %636 = vrot.lane.b32.xlu0 %v366, 6
        %v637 = vpop.permute.xlu0 %636
        %638 = vrot.lane.b32.xlu0 %v367, 6
        %v639 = vpop.permute.xlu0 %638
        %640 = vrot.lane.b32.xlu0 %v368, 6
        %v641 = vpop.permute.xlu0 %640
        %642 = vrot.lane.b32.xlu0 %v369, 6
        %v643 = vpop.permute.xlu0 %642
        %644 = vrot.lane.b32.xlu0 %v370, 6
        %v645 = vpop.permute.xlu0 %644
        %646 = vrot.lane.b32.xlu0 %v371, 6
        %v647 = vpop.permute.xlu0 %646
        %648 = vrot.lane.b32.xlu0 %v372, 6
        %v649 = vpop.permute.xlu0 %648
        %650 = vrot.lane.b32.xlu0 %v373, 6
        %v651 = vpop.permute.xlu0 %650
        %652 = vrot.lane.b32.xlu0 %v374, 6
        %v653 = vpop.permute.xlu0 %652
        %654 = vrot.lane.b32.xlu0 %v375, 6
        %v655 = vpop.permute.xlu0 %654
        %672 = vrot.lane.b32.xlu0 %v574, 12
        %v673 = vpop.permute.xlu0 %672
        %674 = vrot.lane.b32.xlu0 %v575, 12
        %v675 = vpop.permute.xlu0 %674
        %676 = vrot.lane.b32.xlu0 %v576, 12
        %v677 = vpop.permute.xlu0 %676
        %678 = vrot.lane.b32.xlu0 %v577, 12
        %v679 = vpop.permute.xlu0 %678
        %680 = vrot.lane.b32.xlu0 %v578, 12
        %v681 = vpop.permute.xlu0 %680
        %682 = vrot.lane.b32.xlu0 %v579, 12
        %v683 = vpop.permute.xlu0 %682
        %684 = vrot.lane.b32.xlu0 %v580, 12
        %v685 = vpop.permute.xlu0 %684
        %686 = vrot.lane.b32.xlu0 %v581, 12
        %v687 = vpop.permute.xlu0 %686
        %688 = vrot.lane.b32.xlu0 %v582, 12
        %v689 = vpop.permute.xlu0 %688
        %690 = vrot.lane.b32.xlu0 %v583, 12
        %v691 = vpop.permute.xlu0 %690
        %692 = vrot.lane.b32.xlu0 %v584, 12
        %v693 = vpop.permute.xlu0 %692
        %694 = vrot.lane.b32.xlu0 %v585, 12
        %v695 = vpop.permute.xlu0 %694
        %696 = vrot.lane.b32.xlu0 %v586, 12
        %v697 = vpop.permute.xlu0 %696
        %698 = vrot.lane.b32.xlu0 %v587, 12
        %v699 = vpop.permute.xlu0 %698
        %700 = vrot.lane.b32.xlu0 %v588, 12
        %v701 = vpop.permute.xlu0 %700
        %702 = vrot.lane.b32.xlu0 %v589, 12
        %v703 = vpop.permute.xlu0 %702
        %720 = vrot.lane.b32.xlu0 %v508, 18
        %v721 = vpop.permute.xlu0 %720
        %722 = vrot.lane.b32.xlu0 %v509, 18
        %v723 = vpop.permute.xlu0 %722
        %724 = vrot.lane.b32.xlu0 %v510, 18
        %v725 = vpop.permute.xlu0 %724
        %726 = vrot.lane.b32.xlu0 %v511, 18
        %v727 = vpop.permute.xlu0 %726
        %728 = vrot.lane.b32.xlu0 %v512, 18
        %v729 = vpop.permute.xlu0 %728
        %730 = vrot.lane.b32.xlu0 %v513, 18
        %v731 = vpop.permute.xlu0 %730
        %732 = vrot.lane.b32.xlu0 %v514, 18
        %v733 = vpop.permute.xlu0 %732
        %734 = vrot.lane.b32.xlu0 %v515, 18
        %v735 = vpop.permute.xlu0 %734
        %736 = vrot.lane.b32.xlu0 %v516, 18
        %v737 = vpop.permute.xlu0 %736
        %738 = vrot.lane.b32.xlu0 %v517, 18
        %v739 = vpop.permute.xlu0 %738
        %740 = vrot.lane.b32.xlu0 %v518, 18
        %v741 = vpop.permute.xlu0 %740
        %742 = vrot.lane.b32.xlu0 %v519, 18
        %v743 = vpop.permute.xlu0 %742
        %744 = vrot.lane.b32.xlu0 %v520, 18
        %v745 = vpop.permute.xlu0 %744
        %746 = vrot.lane.b32.xlu0 %v521, 18
        %v747 = vpop.permute.xlu0 %746
        %748 = vrot.lane.b32.xlu0 %v522, 18
        %v749 = vpop.permute.xlu0 %748
        %750 = vrot.lane.b32.xlu0 %v603, 18
        %v751 = vpop.permute.xlu0 %750
        %752 = vrot.lane.b32.xlu0 %v361, 24
        %v753 = vpop.permute.xlu0 %752
        %754 = vrot.lane.b32.xlu0 %v362, 24
        %v755 = vpop.permute.xlu0 %754
        %756 = vrot.lane.b32.xlu0 %v363, 24
        %v757 = vpop.permute.xlu0 %756
        %758 = vrot.lane.b32.xlu0 %v364, 24
        %v759 = vpop.permute.xlu0 %758
        %760 = vrot.lane.b32.xlu0 %v365, 24
        %v761 = vpop.permute.xlu0 %760
        %762 = vrot.lane.b32.xlu0 %v366, 24
        %v763 = vpop.permute.xlu0 %762
        %764 = vrot.lane.b32.xlu0 %v367, 24
        %v765 = vpop.permute.xlu0 %764
        %766 = vrot.lane.b32.xlu0 %v368, 24
        %v767 = vpop.permute.xlu0 %766
        %768 = vrot.lane.b32.xlu0 %v369, 24
        %v769 = vpop.permute.xlu0 %768
        %770 = vrot.lane.b32.xlu0 %v370, 24
        %v771 = vpop.permute.xlu0 %770
        %772 = vrot.lane.b32.xlu0 %v371, 24
        %v773 = vpop.permute.xlu0 %772
        %774 = vrot.lane.b32.xlu0 %v372, 24
        %v775 = vpop.permute.xlu0 %774
        %776 = vrot.lane.b32.xlu0 %v373, 24
        %v777 = vpop.permute.xlu0 %776
        %778 = vrot.lane.b32.xlu0 %v374, 24
        %v779 = vpop.permute.xlu0 %778
        %780 = vrot.lane.b32.xlu0 %v375, 24
        %v781 = vpop.permute.xlu0 %780
        %782 = vrot.lane.b32.xlu0 %v594, 24
        %v783 = vpop.permute.xlu0 %782
        %785 = vrot.lane.b32.xlu0 %v575, 30
        %v786 = vpop.permute.xlu0 %785
        %787 = vrot.lane.b32.xlu0 %v576, 30
        %v788 = vpop.permute.xlu0 %787
        %789 = vrot.lane.b32.xlu0 %v577, 30
        %v790 = vpop.permute.xlu0 %789
        %791 = vrot.lane.b32.xlu0 %v578, 30
        %v792 = vpop.permute.xlu0 %791
        %793 = vrot.lane.b32.xlu0 %v579, 30
        %v794 = vpop.permute.xlu0 %793
        %795 = vrot.lane.b32.xlu0 %v580, 30
        %v796 = vpop.permute.xlu0 %795
        %797 = vrot.lane.b32.xlu0 %v581, 30
        %v798 = vpop.permute.xlu0 %797
        %799 = vrot.lane.b32.xlu0 %v582, 30
        %v800 = vpop.permute.xlu0 %799
        %801 = vrot.lane.b32.xlu0 %v583, 30
        %v802 = vpop.permute.xlu0 %801
        %803 = vrot.lane.b32.xlu0 %v584, 30
        %v804 = vpop.permute.xlu0 %803
        %805 = vrot.lane.b32.xlu0 %v585, 30
        %v806 = vpop.permute.xlu0 %805
        %807 = vrot.lane.b32.xlu0 %v586, 30
        %v808 = vpop.permute.xlu0 %807
        %809 = vrot.lane.b32.xlu0 %v587, 30
        %v810 = vpop.permute.xlu0 %809
        %811 = vrot.lane.b32.xlu0 %v588, 30
        %v812 = vpop.permute.xlu0 %811
        %813 = vrot.lane.b32.xlu0 %v589, 30
        %v814 = vpop.permute.xlu0 %813
        %815 = vrot.lane.b32.xlu0 %v607, 30
        %v816 = vpop.permute.xlu0 %815
        %818 = vrot.lane.b32.xlu0 %v509, 36
        %v819 = vpop.permute.xlu0 %818
        %820 = vrot.lane.b32.xlu0 %v510, 36
        %v821 = vpop.permute.xlu0 %820
        %822 = vrot.lane.b32.xlu0 %v511, 36
        %v823 = vpop.permute.xlu0 %822
        %824 = vrot.lane.b32.xlu0 %v512, 36
        %v825 = vpop.permute.xlu0 %824
        %826 = vrot.lane.b32.xlu0 %v513, 36
        %v827 = vpop.permute.xlu0 %826
        %828 = vrot.lane.b32.xlu0 %v514, 36
        %v829 = vpop.permute.xlu0 %828
        %830 = vrot.lane.b32.xlu0 %v515, 36
        %v831 = vpop.permute.xlu0 %830
        %832 = vrot.lane.b32.xlu0 %v516, 36
        %v833 = vpop.permute.xlu0 %832
        %834 = vrot.lane.b32.xlu0 %v517, 36
        %v835 = vpop.permute.xlu0 %834
        %836 = vrot.lane.b32.xlu0 %v518, 36
        %v837 = vpop.permute.xlu0 %836
        %838 = vrot.lane.b32.xlu0 %v519, 36
        %v839 = vpop.permute.xlu0 %838
        %840 = vrot.lane.b32.xlu0 %v520, 36
        %v841 = vpop.permute.xlu0 %840
        %842 = vrot.lane.b32.xlu0 %v521, 36
        %v843 = vpop.permute.xlu0 %842
        %844 = vrot.lane.b32.xlu0 %v522, 36
        %v845 = vpop.permute.xlu0 %844
        %846 = vrot.lane.b32.xlu0 %v603, 36
        %v847 = vpop.permute.xlu0 %846
        %848 = vrot.lane.b32.xlu0 %v619, 36
        %v849 = vpop.permute.xlu0 %848
        %850 = vrot.lane.b32.xlu0 %v362, 42
        %v851 = vpop.permute.xlu0 %850
        %852 = vrot.lane.b32.xlu0 %v363, 42
        %v853 = vpop.permute.xlu0 %852
        %854 = vrot.lane.b32.xlu0 %v364, 42
        %v855 = vpop.permute.xlu0 %854
        %856 = vrot.lane.b32.xlu0 %v365, 42
        %v857 = vpop.permute.xlu0 %856
        %858 = vrot.lane.b32.xlu0 %v366, 42
        %v859 = vpop.permute.xlu0 %858
        %860 = vrot.lane.b32.xlu0 %v367, 42
        %v861 = vpop.permute.xlu0 %860
        %862 = vrot.lane.b32.xlu0 %v368, 42
        %v863 = vpop.permute.xlu0 %862
        %864 = vrot.lane.b32.xlu0 %v369, 42
        %v865 = vpop.permute.xlu0 %864
        %866 = vrot.lane.b32.xlu0 %v370, 42
        %v867 = vpop.permute.xlu0 %866
        %868 = vrot.lane.b32.xlu0 %v371, 42
        %v869 = vpop.permute.xlu0 %868
        %870 = vrot.lane.b32.xlu0 %v372, 42
        %v871 = vpop.permute.xlu0 %870
        %872 = vrot.lane.b32.xlu0 %v373, 42
        %v873 = vpop.permute.xlu0 %872
        %874 = vrot.lane.b32.xlu0 %v374, 42
        %v875 = vpop.permute.xlu0 %874
        %876 = vrot.lane.b32.xlu0 %v375, 42
        %v877 = vpop.permute.xlu0 %876
        %878 = vrot.lane.b32.xlu0 %v594, 42
        %v879 = vpop.permute.xlu0 %878
        %880 = vrot.lane.b32.xlu0 %v610, 42
        %v881 = vpop.permute.xlu0 %880
        %883 = vrot.lane.b32.xlu0 %v576, 48
        %v884 = vpop.permute.xlu0 %883
        %885 = vrot.lane.b32.xlu0 %v577, 48
        %v886 = vpop.permute.xlu0 %885
        %887 = vrot.lane.b32.xlu0 %v578, 48
        %v888 = vpop.permute.xlu0 %887
        %889 = vrot.lane.b32.xlu0 %v579, 48
        %v890 = vpop.permute.xlu0 %889
        %891 = vrot.lane.b32.xlu0 %v580, 48
        %v892 = vpop.permute.xlu0 %891
        %893 = vrot.lane.b32.xlu0 %v581, 48
        %v894 = vpop.permute.xlu0 %893
        %895 = vrot.lane.b32.xlu0 %v582, 48
        %v896 = vpop.permute.xlu0 %895
        %897 = vrot.lane.b32.xlu0 %v583, 48
        %v898 = vpop.permute.xlu0 %897
        %899 = vrot.lane.b32.xlu0 %v584, 48
        %v900 = vpop.permute.xlu0 %899
        %901 = vrot.lane.b32.xlu0 %v585, 48
        %v902 = vpop.permute.xlu0 %901
        %903 = vrot.lane.b32.xlu0 %v586, 48
        %v904 = vpop.permute.xlu0 %903
        %905 = vrot.lane.b32.xlu0 %v587, 48
        %v906 = vpop.permute.xlu0 %905
        %907 = vrot.lane.b32.xlu0 %v588, 48
        %v908 = vpop.permute.xlu0 %907
        %909 = vrot.lane.b32.xlu0 %v589, 48
        %v910 = vpop.permute.xlu0 %909
        %911 = vrot.lane.b32.xlu0 %v607, 48
        %v912 = vpop.permute.xlu0 %911
        %913 = vrot.lane.b32.xlu0 %v623, 48
        %v914 = vpop.permute.xlu0 %913
        %vm915 = vcmask 48128
        %v918 = vsel %vm915, %v507, %v625
        %v921 = vsel %vm915, %v508, %v627
        %v924 = vsel %vm915, %v509, %v629
        %v927 = vsel %vm915, %v510, %v631
        %v930 = vsel %vm915, %v511, %v633
        %v933 = vsel %vm915, %v512, %v635
        %v936 = vsel %vm915, %v513, %v637
        %v939 = vsel %vm915, %v514, %v639
        %v942 = vsel %vm915, %v515, %v641
        %v945 = vsel %vm915, %v516, %v643
        %v948 = vsel %vm915, %v517, %v645
        %v951 = vsel %vm915, %v518, %v647
        %v954 = vsel %vm915, %v519, %v649
        %v957 = vsel %vm915, %v520, %v651
        %v960 = vsel %vm915, %v521, %v653
        %v963 = vsel %vm915, %v522, %v655
        %vm964 = vcmask 97280
        %v966 = vsel %vm964, %v918, %v673
        %v968 = vsel %vm964, %v921, %v675
        %v970 = vsel %vm964, %v924, %v677
        %v972 = vsel %vm964, %v927, %v679
        %v974 = vsel %vm964, %v930, %v681
        %v976 = vsel %vm964, %v933, %v683
        %v978 = vsel %vm964, %v936, %v685
        %v980 = vsel %vm964, %v939, %v687
        %v982 = vsel %vm964, %v942, %v689
        %v984 = vsel %vm964, %v945, %v691
        %v986 = vsel %vm964, %v948, %v693
        %v988 = vsel %vm964, %v951, %v695
        %v990 = vsel %vm964, %v954, %v697
        %v992 = vsel %vm964, %v957, %v699
        %v994 = vsel %vm964, %v960, %v701
        %v996 = vsel %vm964, %v963, %v703
        %vm997 = vcmask 146432
        %v999 = vsel %vm997, %v966, %v721
        %v1001 = vsel %vm997, %v968, %v723
        %v1003 = vsel %vm997, %v970, %v725
        %v1005 = vsel %vm997, %v972, %v727
        %v1007 = vsel %vm997, %v974, %v729
        %v1009 = vsel %vm997, %v976, %v731
        %v1011 = vsel %vm997, %v978, %v733
        %v1013 = vsel %vm997, %v980, %v735
        %v1015 = vsel %vm997, %v982, %v737
        %v1017 = vsel %vm997, %v984, %v739
        %v1019 = vsel %vm997, %v986, %v741
        %v1021 = vsel %vm997, %v988, %v743
        %v1023 = vsel %vm997, %v990, %v745
        %v1025 = vsel %vm997, %v992, %v747
        %v1027 = vsel %vm997, %v994, %v749
        %v1029 = vsel %vm997, %v996, %v751
        %vm1030 = vcmask 195584
        %v1032 = vsel %vm1030, %v999, %v753
        %v1034 = vsel %vm1030, %v1001, %v755
        %v1036 = vsel %vm1030, %v1003, %v757
        %v1038 = vsel %vm1030, %v1005, %v759
        %v1040 = vsel %vm1030, %v1007, %v761
        %v1042 = vsel %vm1030, %v1009, %v763
        %v1044 = vsel %vm1030, %v1011, %v765
        %v1046 = vsel %vm1030, %v1013, %v767
        %v1048 = vsel %vm1030, %v1015, %v769
        %v1050 = vsel %vm1030, %v1017, %v771
        %v1052 = vsel %vm1030, %v1019, %v773
        %v1054 = vsel %vm1030, %v1021, %v775
        %v1056 = vsel %vm1030, %v1023, %v777
        %v1058 = vsel %vm1030, %v1025, %v779
        %v1060 = vsel %vm1030, %v1027, %v781
        %v1062 = vsel %vm1030, %v1029, %v783
        %vm1063 = vcmask 244736
        %v1065 = vsel %vm1063, %v1032, %v786
        %v1067 = vsel %vm1063, %v1034, %v788
        %v1069 = vsel %vm1063, %v1036, %v790
        %v1071 = vsel %vm1063, %v1038, %v792
        %v1073 = vsel %vm1063, %v1040, %v794
        %v1075 = vsel %vm1063, %v1042, %v796
        %v1077 = vsel %vm1063, %v1044, %v798
        %v1079 = vsel %vm1063, %v1046, %v800
        %v1081 = vsel %vm1063, %v1048, %v802
        %v1083 = vsel %vm1063, %v1050, %v804
        %v1085 = vsel %vm1063, %v1052, %v806
        %v1087 = vsel %vm1063, %v1054, %v808
        %v1089 = vsel %vm1063, %v1056, %v810
        %v1091 = vsel %vm1063, %v1058, %v812
        %v1093 = vsel %vm1063, %v1060, %v814
        %v1095 = vsel %vm1063, %v1062, %v816
        %vm1096 = vcmask 293888
        %v1098 = vsel %vm1096, %v1065, %v819
        %v1100 = vsel %vm1096, %v1067, %v821
        %v1102 = vsel %vm1096, %v1069, %v823
        %v1104 = vsel %vm1096, %v1071, %v825
        %v1106 = vsel %vm1096, %v1073, %v827
        %v1108 = vsel %vm1096, %v1075, %v829
        %v1110 = vsel %vm1096, %v1077, %v831
        %v1112 = vsel %vm1096, %v1079, %v833
        %v1114 = vsel %vm1096, %v1081, %v835
        %v1116 = vsel %vm1096, %v1083, %v837
        %v1118 = vsel %vm1096, %v1085, %v839
        %v1120 = vsel %vm1096, %v1087, %v841
        %v1122 = vsel %vm1096, %v1089, %v843
        %v1124 = vsel %vm1096, %v1091, %v845
        %v1126 = vsel %vm1096, %v1093, %v847
        %v1128 = vsel %vm1096, %v1095, %v849
        %vm1129 = vcmask 343040
        %v1131 = vsel %vm1129, %v1098, %v851
        %v1133 = vsel %vm1129, %v1100, %v853
        %v1135 = vsel %vm1129, %v1102, %v855
        %v1137 = vsel %vm1129, %v1104, %v857
        %v1139 = vsel %vm1129, %v1106, %v859
        %v1141 = vsel %vm1129, %v1108, %v861
        %v1143 = vsel %vm1129, %v1110, %v863
        %v1145 = vsel %vm1129, %v1112, %v865
        %v1147 = vsel %vm1129, %v1114, %v867
        %v1149 = vsel %vm1129, %v1116, %v869
        %v1151 = vsel %vm1129, %v1118, %v871
        %v1153 = vsel %vm1129, %v1120, %v873
        %v1155 = vsel %vm1129, %v1122, %v875
        %v1157 = vsel %vm1129, %v1124, %v877
        %v1159 = vsel %vm1129, %v1126, %v879
        %v1161 = vsel %vm1129, %v1128, %v881
        %vm1162 = vcmask 392192
        %v1164 = vsel %vm1162, %v1131, %v884
        %v1166 = vsel %vm1162, %v1133, %v886
        %v1168 = vsel %vm1162, %v1135, %v888
        %v1170 = vsel %vm1162, %v1137, %v890
        %v1172 = vsel %vm1162, %v1139, %v892
        %v1174 = vsel %vm1162, %v1141, %v894
        %v1176 = vsel %vm1162, %v1143, %v896
        %v1178 = vsel %vm1162, %v1145, %v898
        %v1180 = vsel %vm1162, %v1147, %v900
        %v1182 = vsel %vm1162, %v1149, %v902
        %v1184 = vsel %vm1162, %v1151, %v904
        %v1186 = vsel %vm1162, %v1153, %v906
        %v1188 = vsel %vm1162, %v1155, %v908
        %v1190 = vsel %vm1162, %v1157, %v910
        %v1192 = vsel %vm1162, %v1159, %v912
        %v1194 = vsel %vm1162, %v1161, %v914
        %v1195 = vld [vmem:[%s1] sm:$0xf]
        %v1196 = vld [vmem:[%s1 + $0x4] sm:$0xf]
        %v1197 = vld [vmem:[%s1 + $0x8] sm:$0xf]
        %v1198 = vld [vmem:[%s1 + $0xc] sm:$0xf]
        %v1199 = vld [vmem:[%s1 + $0x10] sm:$0xf]
        %v1200 = vld [vmem:[%s1 + $0x14] sm:$0xf]
        %v1201 = vld [vmem:[%s1 + $0x18] sm:$0x7]
        %v1202 = vld [vmem:[%s2] sm:$0x1]
        %v1204 = vlaneseq
        %v1205 = vshrl.u32 %v1204, 7
        %v1206 = vsub.s32 0, %v1205
        %v1207 = vrot.slane %v1202, %v1206
        %v1216 = vunpack.c.l.b16 %v1195
        %v1217 = vunpack.c.l.b16 %v1196
        %v1218 = vunpack.c.l.b16 %v1197
        %v1219 = vunpack.c.l.b16 %v1198
        %v1220 = vunpack.c.l.b16 %v1199
        %v1221 = vunpack.c.l.b16 %v1200
        %v1222 = vunpack.c.l.b16 %v1201
        %v1223 = vpack.c.b16 %v1217, %v1216
        %v1224 = vpack.c.b16 %v1219, %v1218
        %v1225 = vpack.c.b16 %v1221, %v1220
        %v1226 = vpack.c.b16 %v1222, %v1222
        %vm1230 = vcmask 441344
        %v1231 = vsel %vm1230, %v1164, 0
        %v1233 = vsel %vm1230, %v1166, 0
        %v1235 = vsel %vm1230, %v1168, 0
        %v1237 = vsel %vm1230, %v1170, 0
        %v1239 = vsel %vm1230, %v1172, 0
        %v1241 = vsel %vm1230, %v1174, 0
        %v1243 = vsel %vm1230, %v1176, 0
        %v1245 = vsel %vm1230, %v1178, 0
        %v1247 = vsel %vm1230, %v1180, 0
        %v1249 = vsel %vm1230, %v1182, 0
        %v1251 = vsel %vm1230, %v1184, 0
        %v1253 = vsel %vm1230, %v1186, 0
        %v1255 = vsel %vm1230, %v1188, 0
        %v1257 = vsel %vm1230, %v1190, 0
        %v1259 = vsel %vm1230, %v1192, 0
        %v1261 = vsel %vm1230, %v1194, 0
        %vm1263 = vcmask 1042432
        %v1265 = vsel %vm1263, %v1226, 0
        %1267 = vmatprep.subr.bf16.mxu0 0
        %1268 = vmatpush1.bf16.msra.mxu0 %v1223
        %1269 = vmatprep.subr.bf16.mxu0 0
        %1270 = vmatpush1.bf16.msra.mxu0 %v1224
        %1271 = vmatprep.subr.bf16.mxu0 0
        %1272 = vmatpush1.bf16.msra.mxu0 %v1225
        %1273 = vmatprep.subr.bf16.mxu0 0
        %1274 = vmatpush1.bf16.msra.mxu0 %v1265
        %1275 = vmatprep.subr.bf16.mxu0 0
        %1276 = vmatpush1.bf16.msra.mxu0 0
        %1277 = vmatprep.subr.bf16.mxu0 0
        %1278 = vmatpush1.bf16.msra.mxu0 0
        %1279 = vmatprep.subr.bf16.mxu0 0
        %1280 = vmatpush1.bf16.msra.mxu0 0
        %1281 = vmatprep.subr.bf16.mxu0 0
        %1282 = vmatpush1.bf16.msra.mxu0 0
        %1283 = vmatprep.subr.bf16.mxu0 0
        %1284 = vmatpush1.bf16.msra.mxu0 0
        %1285 = vmatprep.subr.bf16.mxu0 0
        %1286 = vmatpush1.bf16.msra.mxu0 0
        %1287 = vmatprep.subr.bf16.mxu0 0
        %1288 = vmatpush1.bf16.msra.mxu0 0
        %1289 = vmatprep.subr.bf16.mxu0 0
        %1290 = vmatpush1.bf16.msra.mxu0 0
        %1291 = vmatprep.subr.bf16.mxu0 0
        %1292 = vmatpush1.bf16.msra.mxu0 0
        %1293 = vmatprep.subr.bf16.mxu0 0
        %1294 = vmatpush1.bf16.msra.mxu0 0
        %1295 = vmatprep.subr.bf16.mxu0 0
        %1296 = vmatpush1.bf16.msra.mxu0 0
        %1297 = vmatprep.subr.bf16.mxu0 0
        %1298 = vmatpush1.bf16.msra.mxu0 0
        %1299 = vmatprep.mubr.bf16.mxu0 0
        %1300 = vmatmul.mubr.bf16.gmra.mrb[0].mxu0 %v1231
        %v1301 = vpop.f32.mrb[0].mxu0
        %v1302 = vadd.f32 %v1207, %v1301
        %v1303 = vpop.f32.mrb[0].mxu0
        %v1304 = vpop.f32.mrb[0].mxu0
        %v1305 = vadd.f32 %v1207, %v1304
        %v1306 = vpop.f32.mrb[0].mxu0
        %1307 = vmatprep.mubr.bf16.mxu0 0
        %1308 = vmatmul.mubr.bf16.gmra.mrb[0].mxu0 %v1233
        %v1309 = vpop.f32.mrb[0].mxu0
        %v1310 = vadd.f32 %v1207, %v1309
        %v1311 = vpop.f32.mrb[0].mxu0
        %v1312 = vpop.f32.mrb[0].mxu0
        %v1313 = vadd.f32 %v1207, %v1312
        %v1314 = vpop.f32.mrb[0].mxu0
        %1315 = vmatprep.mubr.bf16.mxu0 0
        %1316 = vmatmul.mubr.bf16.gmra.mrb[0].mxu0 %v1235
        %v1317 = vpop.f32.mrb[0].mxu0
        %v1318 = vadd.f32 %v1207, %v1317
        %v1319 = vpop.f32.mrb[0].mxu0
        %v1320 = vpop.f32.mrb[0].mxu0
        %v1321 = vadd.f32 %v1207, %v1320
        %v1322 = vpop.f32.mrb[0].mxu0
        %1323 = vmatprep.mubr.bf16.mxu0 0
        %1324 = vmatmul.mubr.bf16.gmra.mrb[0].mxu0 %v1237
        %v1325 = vpop.f32.mrb[0].mxu0
        %v1326 = vadd.f32 %v1207, %v1325
        %v1327 = vpop.f32.mrb[0].mxu0
        %v1328 = vpop.f32.mrb[0].mxu0
        %v1329 = vadd.f32 %v1207, %v1328
        %v1330 = vpop.f32.mrb[0].mxu0
        %1331 = vmatprep.mubr.bf16.mxu0 0
        %1332 = vmatmul.mubr.bf16.gmra.mrb[0].mxu0 %v1239
        %v1333 = vpop.f32.mrb[0].mxu0
        %v1334 = vadd.f32 %v1207, %v1333
        %v1335 = vpop.f32.mrb[0].mxu0
        %v1336 = vpop.f32.mrb[0].mxu0
        %v1337 = vadd.f32 %v1207, %v1336
        %v1338 = vpop.f32.mrb[0].mxu0
        %1339 = vmatprep.mubr.bf16.mxu0 0
        %1340 = vmatmul.mubr.bf16.gmra.mrb[0].mxu0 %v1241
        %v1341 = vpop.f32.mrb[0].mxu0
        %v1342 = vadd.f32 %v1207, %v1341
        %v1343 = vpop.f32.mrb[0].mxu0
        %v1344 = vpop.f32.mrb[0].mxu0
        %v1345 = vadd.f32 %v1207, %v1344
        %v1346 = vpop.f32.mrb[0].mxu0
        %1347 = vmatprep.mubr.bf16.mxu0 0
        %1348 = vmatmul.mubr.bf16.gmra.mrb[0].mxu0 %v1243
        %v1349 = vpop.f32.mrb[0].mxu0
        %v1350 = vadd.f32 %v1207, %v1349
        %v1351 = vpop.f32.mrb[0].mxu0
        %v1352 = vpop.f32.mrb[0].mxu0
        %v1353 = vadd.f32 %v1207, %v1352
        %v1354 = vpop.f32.mrb[0].mxu0
        %1355 = vmatprep.mubr.bf16.mxu0 0
        %1356 = vmatmul.mubr.bf16.gmra.mrb[0].mxu0 %v1245
        %v1357 = vpop.f32.mrb[0].mxu0
        %v1358 = vadd.f32 %v1207, %v1357
        %v1359 = vpop.f32.mrb[0].mxu0
        %v1360 = vpop.f32.mrb[0].mxu0
        %v1361 = vadd.f32 %v1207, %v1360
        %v1362 = vpop.f32.mrb[0].mxu0
        %1363 = vmatprep.mubr.bf16.mxu0 0
        %1364 = vmatmul.mubr.bf16.gmra.mrb[0].mxu0 %v1247
        %v1365 = vpop.f32.mrb[0].mxu0
        %v1366 = vadd.f32 %v1207, %v1365
        %v1367 = vpop.f32.mrb[0].mxu0
        %v1368 = vpop.f32.mrb[0].mxu0
        %v1369 = vadd.f32 %v1207, %v1368
        %v1370 = vpop.f32.mrb[0].mxu0
        %1371 = vmatprep.mubr.bf16.mxu0 0
        %1372 = vmatmul.mubr.bf16.gmra.mrb[0].mxu0 %v1249
        %v1373 = vpop.f32.mrb[0].mxu0
        %v1374 = vadd.f32 %v1207, %v1373
        %v1375 = vpop.f32.mrb[0].mxu0
        %v1376 = vpop.f32.mrb[0].mxu0
        %v1377 = vadd.f32 %v1207, %v1376
        %v1378 = vpop.f32.mrb[0].mxu0
        %1379 = vmatprep.mubr.bf16.mxu0 0
        %1380 = vmatmul.mubr.bf16.gmra.mrb[0].mxu0 %v1251
        %v1381 = vpop.f32.mrb[0].mxu0
        %v1382 = vadd.f32 %v1207, %v1381
        %v1383 = vpop.f32.mrb[0].mxu0
        %v1384 = vpop.f32.mrb[0].mxu0
        %v1385 = vadd.f32 %v1207, %v1384
        %v1386 = vpop.f32.mrb[0].mxu0
        %1387 = vmatprep.mubr.bf16.mxu0 0
        %1388 = vmatmul.mubr.bf16.gmra.mrb[0].mxu0 %v1253
        %v1389 = vpop.f32.mrb[0].mxu0
        %v1390 = vadd.f32 %v1207, %v1389
        %v1391 = vpop.f32.mrb[0].mxu0
        %v1392 = vpop.f32.mrb[0].mxu0
        %v1393 = vadd.f32 %v1207, %v1392
        %v1394 = vpop.f32.mrb[0].mxu0
        %1395 = vmatprep.mubr.bf16.mxu0 0
        %1396 = vmatmul.mubr.bf16.gmra.mrb[0].mxu0 %v1255
        %v1397 = vpop.f32.mrb[0].mxu0
        %v1398 = vadd.f32 %v1207, %v1397
        %v1399 = vpop.f32.mrb[0].mxu0
        %v1400 = vpop.f32.mrb[0].mxu0
        %v1401 = vadd.f32 %v1207, %v1400
        %v1402 = vpop.f32.mrb[0].mxu0
        %1403 = vmatprep.mubr.bf16.mxu0 0
        %1404 = vmatmul.mubr.bf16.gmra.mrb[0].mxu0 %v1257
        %v1405 = vpop.f32.mrb[0].mxu0
        %v1406 = vadd.f32 %v1207, %v1405
        %v1407 = vpop.f32.mrb[0].mxu0
        %v1408 = vpop.f32.mrb[0].mxu0
        %v1409 = vadd.f32 %v1207, %v1408
        %v1410 = vpop.f32.mrb[0].mxu0
        %1411 = vmatprep.mubr.bf16.mxu0 0
        %1412 = vmatmul.mubr.bf16.gmra.mrb[0].mxu0 %v1259
        %v1413 = vpop.f32.mrb[0].mxu0
        %v1414 = vadd.f32 %v1207, %v1413
        %v1415 = vpop.f32.mrb[0].mxu0
        %v1416 = vpop.f32.mrb[0].mxu0
        %v1417 = vadd.f32 %v1207, %v1416
        %v1418 = vpop.f32.mrb[0].mxu0
        %1419 = vmatprep.mubr.bf16.mxu0 0
        %1420 = vmatmul.mubr.bf16.gmra.mrb[0].mxu0 %v1261
        %v1421 = vpop.f32.mrb[0].mxu0
        %v1422 = vadd.f32 %v1207, %v1421
        %v1423 = vpop.f32.mrb[0].mxu0
        %v1424 = vpop.f32.mrb[0].mxu0
        %v1425 = vadd.f32 %v1207, %v1424
        %v1426 = vpop.f32.mrb[0].mxu0
        %1427 = vdwg.mxu0
        %vm1428 = vcmp.gt.f32.partialorder %v1302, 0.0
        %vm1429 = vcmp.gt.f32.partialorder %v1305, 0.0
        %vm1430 = vcmp.gt.f32.partialorder %v1310, 0.0
        %vm1431 = vcmp.gt.f32.partialorder %v1313, 0.0
        %vm1432 = vcmp.gt.f32.partialorder %v1318, 0.0
        %vm1433 = vcmp.gt.f32.partialorder %v1321, 0.0
        %vm1434 = vcmp.gt.f32.partialorder %v1326, 0.0
        %vm1435 = vcmp.gt.f32.partialorder %v1329, 0.0
        %vm1436 = vcmp.gt.f32.partialorder %v1334, 0.0
        %vm1437 = vcmp.gt.f32.partialorder %v1337, 0.0
        %vm1438 = vcmp.gt.f32.partialorder %v1342, 0.0
        %vm1439 = vcmp.gt.f32.partialorder %v1345, 0.0
        %vm1440 = vcmp.gt.f32.partialorder %v1350, 0.0
        %vm1441 = vcmp.gt.f32.partialorder %v1353, 0.0
        %vm1442 = vcmp.gt.f32.partialorder %v1358, 0.0
        %vm1443 = vcmp.gt.f32.partialorder %v1361, 0.0
        %vm1444 = vcmp.gt.f32.partialorder %v1366, 0.0
        %vm1445 = vcmp.gt.f32.partialorder %v1369, 0.0
        %vm1446 = vcmp.gt.f32.partialorder %v1374, 0.0
        %vm1447 = vcmp.gt.f32.partialorder %v1377, 0.0
        %vm1448 = vcmp.gt.f32.partialorder %v1382, 0.0
        %vm1449 = vcmp.gt.f32.partialorder %v1385, 0.0
        %vm1450 = vcmp.gt.f32.partialorder %v1390, 0.0
        %vm1451 = vcmp.gt.f32.partialorder %v1393, 0.0
        %vm1452 = vcmp.gt.f32.partialorder %v1398, 0.0
        %vm1453 = vcmp.gt.f32.partialorder %v1401, 0.0
        %vm1454 = vcmp.gt.f32.partialorder %v1406, 0.0
        %vm1455 = vcmp.gt.f32.partialorder %v1409, 0.0
        %vm1456 = vcmp.gt.f32.partialorder %v1414, 0.0
        %vm1457 = vcmp.gt.f32.partialorder %v1417, 0.0
        %vm1458 = vcmp.gt.f32.partialorder %v1422, 0.0
        %vm1459 = vcmp.gt.f32.partialorder %v1425, 0.0
        %v1460 = vmul.f32 %v1302, 0.01
        %v1461 = vmul.f32 %v1305, 0.01
        %v1462 = vmul.f32 %v1310, 0.01
        %v1463 = vmul.f32 %v1313, 0.01
        %v1464 = vmul.f32 %v1318, 0.01
        %v1465 = vmul.f32 %v1321, 0.01
        %v1466 = vmul.f32 %v1326, 0.01
        %v1467 = vmul.f32 %v1329, 0.01
        %v1468 = vmul.f32 %v1334, 0.01
        %v1469 = vmul.f32 %v1337, 0.01
        %v1470 = vmul.f32 %v1342, 0.01
        %v1471 = vmul.f32 %v1345, 0.01
        %v1472 = vmul.f32 %v1350, 0.01
        %v1473 = vmul.f32 %v1353, 0.01
        %v1474 = vmul.f32 %v1358, 0.01
        %v1475 = vmul.f32 %v1361, 0.01
        %v1476 = vmul.f32 %v1366, 0.01
        %v1477 = vmul.f32 %v1369, 0.01
        %v1478 = vmul.f32 %v1374, 0.01
        %v1479 = vmul.f32 %v1377, 0.01
        %v1480 = vmul.f32 %v1382, 0.01
        %v1481 = vmul.f32 %v1385, 0.01
        %v1482 = vmul.f32 %v1390, 0.01
        %v1483 = vmul.f32 %v1393, 0.01
        %v1484 = vmul.f32 %v1398, 0.01
        %v1485 = vmul.f32 %v1401, 0.01
        %v1486 = vmul.f32 %v1406, 0.01
        %v1487 = vmul.f32 %v1409, 0.01
        %v1488 = vmul.f32 %v1414, 0.01
        %v1489 = vmul.f32 %v1417, 0.01
        %v1490 = vmul.f32 %v1422, 0.01
        %v1491 = vmul.f32 %v1425, 0.01
        %v1492 = vsel %vm1428, %v1302, %v1460
        %v1493 = vsel %vm1429, %v1305, %v1461
        %v1494 = vsel %vm1430, %v1310, %v1462
        %v1495 = vsel %vm1431, %v1313, %v1463
        %v1496 = vsel %vm1432, %v1318, %v1464
        %v1497 = vsel %vm1433, %v1321, %v1465
        %v1498 = vsel %vm1434, %v1326, %v1466
        %v1499 = vsel %vm1435, %v1329, %v1467
        %v1500 = vsel %vm1436, %v1334, %v1468
        %v1501 = vsel %vm1437, %v1337, %v1469
        %v1502 = vsel %vm1438, %v1342, %v1470
        %v1503 = vsel %vm1439, %v1345, %v1471
        %v1504 = vsel %vm1440, %v1350, %v1472
        %v1505 = vsel %vm1441, %v1353, %v1473
        %v1506 = vsel %vm1442, %v1358, %v1474
        %v1507 = vsel %vm1443, %v1361, %v1475
        %v1508 = vsel %vm1444, %v1366, %v1476
        %v1509 = vsel %vm1445, %v1369, %v1477
        %v1510 = vsel %vm1446, %v1374, %v1478
        %v1511 = vsel %vm1447, %v1377, %v1479
        %v1512 = vsel %vm1448, %v1382, %v1480
        %v1513 = vsel %vm1449, %v1385, %v1481
        %v1514 = vsel %vm1450, %v1390, %v1482
        %v1515 = vsel %vm1451, %v1393, %v1483
        %v1516 = vsel %vm1452, %v1398, %v1484
        %v1517 = vsel %vm1453, %v1401, %v1485
        %v1518 = vsel %vm1454, %v1406, %v1486
        %v1519 = vsel %vm1455, %v1409, %v1487
        %v1520 = vsel %vm1456, %v1414, %v1488
        %v1521 = vsel %vm1457, %v1417, %v1489
        %v1522 = vsel %vm1458, %v1422, %v1490
        %v1523 = vsel %vm1459, %v1425, %v1491
        %vm1524 = vcmask 130048
        %v1525 = vsel %vm1524, %v1492, 0.0
        %1526 = vadd.xlane.f32.xlu0 %v1525
        %v1527 = vpop.xlane.xlu0 %1526
        %v1528 = vsel %vm1524, %v1493, 0.0
        %1529 = vadd.xlane.f32.xlu0 %v1528
        %v1530 = vpop.xlane.xlu0 %1529
        %v1531 = vsel %vm1524, %v1494, 0.0
        %1532 = vadd.xlane.f32.xlu0 %v1531
        %v1533 = vpop.xlane.xlu0 %1532
        %v1534 = vsel %vm1524, %v1495, 0.0
        %1535 = vadd.xlane.f32.xlu0 %v1534
        %v1536 = vpop.xlane.xlu0 %1535
        %v1537 = vsel %vm1524, %v1496, 0.0
        %1538 = vadd.xlane.f32.xlu0 %v1537
        %v1539 = vpop.xlane.xlu0 %1538
        %v1540 = vsel %vm1524, %v1497, 0.0
        %1541 = vadd.xlane.f32.xlu0 %v1540
        %v1542 = vpop.xlane.xlu0 %1541
        %v1543 = vsel %vm1524, %v1498, 0.0
        %1544 = vadd.xlane.f32.xlu0 %v1543
        %v1545 = vpop.xlane.xlu0 %1544
        %v1546 = vsel %vm1524, %v1499, 0.0
        %1547 = vadd.xlane.f32.xlu0 %v1546
        %v1548 = vpop.xlane.xlu0 %1547
        %v1549 = vsel %vm1524, %v1500, 0.0
        %1550 = vadd.xlane.f32.xlu0 %v1549
        %v1551 = vpop.xlane.xlu0 %1550
        %v1552 = vsel %vm1524, %v1501, 0.0
        %1553 = vadd.xlane.f32.xlu0 %v1552
        %v1554 = vpop.xlane.xlu0 %1553
        %v1555 = vsel %vm1524, %v1502, 0.0
        %1556 = vadd.xlane.f32.xlu0 %v1555
        %v1557 = vpop.xlane.xlu0 %1556
        %v1558 = vsel %vm1524, %v1503, 0.0
        %1559 = vadd.xlane.f32.xlu0 %v1558
        %v1560 = vpop.xlane.xlu0 %1559
        %v1561 = vsel %vm1524, %v1504, 0.0
        %1562 = vadd.xlane.f32.xlu0 %v1561
        %v1563 = vpop.xlane.xlu0 %1562
        %v1564 = vsel %vm1524, %v1505, 0.0
        %1565 = vadd.xlane.f32.xlu0 %v1564
        %v1566 = vpop.xlane.xlu0 %1565
        %v1567 = vsel %vm1524, %v1506, 0.0
        %1568 = vadd.xlane.f32.xlu0 %v1567
        %v1569 = vpop.xlane.xlu0 %1568
        %v1570 = vsel %vm1524, %v1507, 0.0
        %1571 = vadd.xlane.f32.xlu0 %v1570
        %v1572 = vpop.xlane.xlu0 %1571
        %v1573 = vsel %vm1524, %v1508, 0.0
        %1574 = vadd.xlane.f32.xlu0 %v1573
        %v1575 = vpop.xlane.xlu0 %1574
        %v1576 = vsel %vm1524, %v1509, 0.0
        %1577 = vadd.xlane.f32.xlu0 %v1576
        %v1578 = vpop.xlane.xlu0 %1577
        %v1579 = vsel %vm1524, %v1510, 0.0
        %1580 = vadd.xlane.f32.xlu0 %v1579
        %v1581 = vpop.xlane.xlu0 %1580
        %v1582 = vsel %vm1524, %v1511, 0.0
        %1583 = vadd.xlane.f32.xlu0 %v1582
        %v1584 = vpop.xlane.xlu0 %1583
        %v1585 = vsel %vm1524, %v1512, 0.0
        %1586 = vadd.xlane.f32.xlu0 %v1585
        %v1587 = vpop.xlane.xlu0 %1586
        %v1588 = vsel %vm1524, %v1513, 0.0
        %1589 = vadd.xlane.f32.xlu0 %v1588
        %v1590 = vpop.xlane.xlu0 %1589
        %v1591 = vsel %vm1524, %v1514, 0.0
        %1592 = vadd.xlane.f32.xlu0 %v1591
        %v1593 = vpop.xlane.xlu0 %1592
        %v1594 = vsel %vm1524, %v1515, 0.0
        %1595 = vadd.xlane.f32.xlu0 %v1594
        %v1596 = vpop.xlane.xlu0 %1595
        %v1597 = vsel %vm1524, %v1516, 0.0
        %1598 = vadd.xlane.f32.xlu0 %v1597
        %v1599 = vpop.xlane.xlu0 %1598
        %v1600 = vsel %vm1524, %v1517, 0.0
        %1601 = vadd.xlane.f32.xlu0 %v1600
        %v1602 = vpop.xlane.xlu0 %1601
        %v1603 = vsel %vm1524, %v1518, 0.0
        %1604 = vadd.xlane.f32.xlu0 %v1603
        %v1605 = vpop.xlane.xlu0 %1604
        %v1606 = vsel %vm1524, %v1519, 0.0
        %1607 = vadd.xlane.f32.xlu0 %v1606
        %v1608 = vpop.xlane.xlu0 %1607
        %v1609 = vsel %vm1524, %v1520, 0.0
        %1610 = vadd.xlane.f32.xlu0 %v1609
        %v1611 = vpop.xlane.xlu0 %1610
        %v1612 = vsel %vm1524, %v1521, 0.0
        %1613 = vadd.xlane.f32.xlu0 %v1612
        %v1614 = vpop.xlane.xlu0 %1613
        %v1615 = vsel %vm1524, %v1522, 0.0
        %1616 = vadd.xlane.f32.xlu0 %v1615
        %v1617 = vpop.xlane.xlu0 %1616
        %v1618 = vsel %vm1524, %v1523, 0.0
        %1619 = vadd.xlane.f32.xlu0 %v1618
        %v1620 = vpop.xlane.xlu0 %1619
        %v1621 = vrcp.pop 16.0
        %v1622 = vmul.f32 %v1527, %v1621
        %v1623 = vmul.f32 %v1530, %v1621
        %v1624 = vmul.f32 %v1533, %v1621
        %v1625 = vmul.f32 %v1536, %v1621
        %v1626 = vmul.f32 %v1539, %v1621
        %v1627 = vmul.f32 %v1542, %v1621
        %v1628 = vmul.f32 %v1545, %v1621
        %v1629 = vmul.f32 %v1548, %v1621
        %v1630 = vmul.f32 %v1551, %v1621
        %v1631 = vmul.f32 %v1554, %v1621
        %v1632 = vmul.f32 %v1557, %v1621
        %v1633 = vmul.f32 %v1560, %v1621
        %v1634 = vmul.f32 %v1563, %v1621
        %v1635 = vmul.f32 %v1566, %v1621
        %v1636 = vmul.f32 %v1569, %v1621
        %v1637 = vmul.f32 %v1572, %v1621
        %v1638 = vmul.f32 %v1575, %v1621
        %v1639 = vmul.f32 %v1578, %v1621
        %v1640 = vmul.f32 %v1581, %v1621
        %v1641 = vmul.f32 %v1584, %v1621
        %v1642 = vmul.f32 %v1587, %v1621
        %v1643 = vmul.f32 %v1590, %v1621
        %v1644 = vmul.f32 %v1593, %v1621
        %v1645 = vmul.f32 %v1596, %v1621
        %v1646 = vmul.f32 %v1599, %v1621
        %v1647 = vmul.f32 %v1602, %v1621
        %v1648 = vmul.f32 %v1605, %v1621
        %v1649 = vmul.f32 %v1608, %v1621
        %v1650 = vmul.f32 %v1611, %v1621
        %v1651 = vmul.f32 %v1614, %v1621
        %v1652 = vmul.f32 %v1617, %v1621
        %v1653 = vmul.f32 %v1620, %v1621
        %v1654 = vsel %vm1524, %v1492, -inf
        %1655 = vmax.xlane.f32.xlu0 %v1654
        %v1656 = vpop.xlane.xlu0 %1655
        %v1657 = vsel %vm1524, %v1493, -inf
        %1658 = vmax.xlane.f32.xlu0 %v1657
        %v1659 = vpop.xlane.xlu0 %1658
        %v1660 = vsel %vm1524, %v1494, -inf
        %1661 = vmax.xlane.f32.xlu0 %v1660
        %v1662 = vpop.xlane.xlu0 %1661
        %v1663 = vsel %vm1524, %v1495, -inf
        %1664 = vmax.xlane.f32.xlu0 %v1663
        %v1665 = vpop.xlane.xlu0 %1664
        %v1666 = vsel %vm1524, %v1496, -inf
        %1667 = vmax.xlane.f32.xlu0 %v1666
        %v1668 = vpop.xlane.xlu0 %1667
        %v1669 = vsel %vm1524, %v1497, -inf
        %1670 = vmax.xlane.f32.xlu0 %v1669
        %v1671 = vpop.xlane.xlu0 %1670
        %v1672 = vsel %vm1524, %v1498, -inf
        %1673 = vmax.xlane.f32.xlu0 %v1672
        %v1674 = vpop.xlane.xlu0 %1673
        %v1675 = vsel %vm1524, %v1499, -inf
        %1676 = vmax.xlane.f32.xlu0 %v1675
        %v1677 = vpop.xlane.xlu0 %1676
        %v1678 = vsel %vm1524, %v1500, -inf
        %1679 = vmax.xlane.f32.xlu0 %v1678
        %v1680 = vpop.xlane.xlu0 %1679
        %v1681 = vsel %vm1524, %v1501, -inf
        %1682 = vmax.xlane.f32.xlu0 %v1681
        %v1683 = vpop.xlane.xlu0 %1682
        %v1684 = vsel %vm1524, %v1502, -inf
        %1685 = vmax.xlane.f32.xlu0 %v1684
        %v1686 = vpop.xlane.xlu0 %1685
        %v1687 = vsel %vm1524, %v1503, -inf
        %1688 = vmax.xlane.f32.xlu0 %v1687
        %v1689 = vpop.xlane.xlu0 %1688
        %v1690 = vsel %vm1524, %v1504, -inf
        %1691 = vmax.xlane.f32.xlu0 %v1690
        %v1692 = vpop.xlane.xlu0 %1691
        %v1693 = vsel %vm1524, %v1505, -inf
        %1694 = vmax.xlane.f32.xlu0 %v1693
        %v1695 = vpop.xlane.xlu0 %1694
        %v1696 = vsel %vm1524, %v1506, -inf
        %1697 = vmax.xlane.f32.xlu0 %v1696
        %v1698 = vpop.xlane.xlu0 %1697
        %v1699 = vsel %vm1524, %v1507, -inf
        %1700 = vmax.xlane.f32.xlu0 %v1699
        %v1701 = vpop.xlane.xlu0 %1700
        %v1702 = vsel %vm1524, %v1508, -inf
        %1703 = vmax.xlane.f32.xlu0 %v1702
        %v1704 = vpop.xlane.xlu0 %1703
        %v1705 = vsel %vm1524, %v1509, -inf
        %1706 = vmax.xlane.f32.xlu0 %v1705
        %v1707 = vpop.xlane.xlu0 %1706
        %v1708 = vsel %vm1524, %v1510, -inf
        %1709 = vmax.xlane.f32.xlu0 %v1708
        %v1710 = vpop.xlane.xlu0 %1709
        %v1711 = vsel %vm1524, %v1511, -inf
        %1712 = vmax.xlane.f32.xlu0 %v1711
        %v1713 = vpop.xlane.xlu0 %1712
        %v1714 = vsel %vm1524, %v1512, -inf
        %1715 = vmax.xlane.f32.xlu0 %v1714
        %v1716 = vpop.xlane.xlu0 %1715
        %v1717 = vsel %vm1524, %v1513, -inf
        %1718 = vmax.xlane.f32.xlu0 %v1717
        %v1719 = vpop.xlane.xlu0 %1718
        %v1720 = vsel %vm1524, %v1514, -inf
        %1721 = vmax.xlane.f32.xlu0 %v1720
        %v1722 = vpop.xlane.xlu0 %1721
        %v1723 = vsel %vm1524, %v1515, -inf
        %1724 = vmax.xlane.f32.xlu0 %v1723
        %v1725 = vpop.xlane.xlu0 %1724
        %v1726 = vsel %vm1524, %v1516, -inf
        %1727 = vmax.xlane.f32.xlu0 %v1726
        %v1728 = vpop.xlane.xlu0 %1727
        %v1729 = vsel %vm1524, %v1517, -inf
        %1730 = vmax.xlane.f32.xlu0 %v1729
        %v1731 = vpop.xlane.xlu0 %1730
        %v1732 = vsel %vm1524, %v1518, -inf
        %1733 = vmax.xlane.f32.xlu0 %v1732
        %v1734 = vpop.xlane.xlu0 %1733
        %v1735 = vsel %vm1524, %v1519, -inf
        %1736 = vmax.xlane.f32.xlu0 %v1735
        %v1737 = vpop.xlane.xlu0 %1736
        %v1738 = vsel %vm1524, %v1520, -inf
        %1739 = vmax.xlane.f32.xlu0 %v1738
        %v1740 = vpop.xlane.xlu0 %1739
        %v1741 = vsel %vm1524, %v1521, -inf
        %1742 = vmax.xlane.f32.xlu0 %v1741
        %v1743 = vpop.xlane.xlu0 %1742
        %v1744 = vsel %vm1524, %v1522, -inf
        %1745 = vmax.xlane.f32.xlu0 %v1744
        %v1746 = vpop.xlane.xlu0 %1745
        %v1747 = vsel %vm1524, %v1523, -inf
        %1748 = vmax.xlane.f32.xlu0 %v1747
        %v1749 = vpop.xlane.xlu0 %1748
        %s1750 = sld [smem:[#allocation2]]
        %vm1782 = vcmask 1040384
        %v1783 = vrot.slane 0.0, 7
        %v1784 = vsel %vm1782, %v1783, %v1783
        %v1785 = vrot.slane %v1622, 7
        %v1786 = vrot.slane %v1623, 7
        %v1787 = vsel %vm1782, %v1785, %v1786
        %v1788 = vrot.slane %v1624, 7
        %v1789 = vrot.slane %v1625, 7
        %v1790 = vsel %vm1782, %v1788, %v1789
        %v1791 = vrot.slane %v1626, 7
        %v1792 = vrot.slane %v1627, 7
        %v1793 = vsel %vm1782, %v1791, %v1792
        %v1794 = vrot.slane %v1628, 7
        %v1795 = vrot.slane %v1629, 7
        %v1796 = vsel %vm1782, %v1794, %v1795
        %v1797 = vrot.slane %v1630, 7
        %v1798 = vrot.slane %v1631, 7
        %v1799 = vsel %vm1782, %v1797, %v1798
        %v1800 = vrot.slane %v1632, 7
        %v1801 = vrot.slane %v1633, 7
        %v1802 = vsel %vm1782, %v1800, %v1801
        %v1803 = vrot.slane %v1634, 7
        %v1804 = vrot.slane %v1635, 7
        %v1805 = vsel %vm1782, %v1803, %v1804
        %v1806 = vrot.slane %v1636, 7
        %v1807 = vrot.slane %v1637, 7
        %v1808 = vsel %vm1782, %v1806, %v1807
        %v1809 = vrot.slane %v1638, 7
        %v1810 = vrot.slane %v1639, 7
        %v1811 = vsel %vm1782, %v1809, %v1810
        %v1812 = vrot.slane %v1640, 7
        %v1813 = vrot.slane %v1641, 7
        %v1814 = vsel %vm1782, %v1812, %v1813
        %v1815 = vrot.slane %v1642, 7
        %v1816 = vrot.slane %v1643, 7
        %v1817 = vsel %vm1782, %v1815, %v1816
        %v1818 = vrot.slane %v1644, 7
        %v1819 = vrot.slane %v1645, 7
        %v1820 = vsel %vm1782, %v1818, %v1819
        %v1821 = vrot.slane %v1646, 7
        %v1822 = vrot.slane %v1647, 7
        %v1823 = vsel %vm1782, %v1821, %v1822
        %v1824 = vrot.slane %v1648, 7
        %v1825 = vrot.slane %v1649, 7
        %v1826 = vsel %vm1782, %v1824, %v1825
        %v1827 = vrot.slane %v1650, 7
        %v1828 = vrot.slane %v1651, 7
        %v1829 = vsel %vm1782, %v1827, %v1828
        %v1862 = vsel %vm1782, 0.0, %v1783
        %v1863 = vsel %vm1782, 0.0, %v1785
        %v1864 = vsel %vm1782, 0.0, %v1788
        %v1865 = vsel %vm1782, 0.0, %v1791
        %v1866 = vsel %vm1782, 0.0, %v1794
        %v1867 = vsel %vm1782, 0.0, %v1797
        %v1868 = vsel %vm1782, 0.0, %v1800
        %v1869 = vsel %vm1782, 0.0, %v1803
        %v1870 = vsel %vm1782, 0.0, %v1806
        %v1871 = vsel %vm1782, 0.0, %v1809
        %v1872 = vsel %vm1782, 0.0, %v1812
        %v1873 = vsel %vm1782, 0.0, %v1815
        %v1874 = vsel %vm1782, 0.0, %v1818
        %v1875 = vsel %vm1782, 0.0, %v1821
        %v1876 = vsel %vm1782, 0.0, %v1824
        %v1877 = vsel %vm1782, 0.0, %v1827
        %v1878 = vstv %s1750
        %v1879 = vmul.f32 %v1878, %v1862
        %v1880 = vmul.f32 %v1878, %v1784
        %v1881 = vmul.f32 %v1878, %v1863
        %v1882 = vmul.f32 %v1878, %v1787
        %v1883 = vmul.f32 %v1878, %v1864
        %v1884 = vmul.f32 %v1878, %v1790
        %v1885 = vmul.f32 %v1878, %v1865
        %v1886 = vmul.f32 %v1878, %v1793
        %v1887 = vmul.f32 %v1878, %v1866
        %v1888 = vmul.f32 %v1878, %v1796
        %v1889 = vmul.f32 %v1878, %v1867
        %v1890 = vmul.f32 %v1878, %v1799
        %v1891 = vmul.f32 %v1878, %v1868
        %v1892 = vmul.f32 %v1878, %v1802
        %v1893 = vmul.f32 %v1878, %v1869
        %v1894 = vmul.f32 %v1878, %v1805
        %v1895 = vmul.f32 %v1878, %v1870
        %v1896 = vmul.f32 %v1878, %v1808
        %v1897 = vmul.f32 %v1878, %v1871
        %v1898 = vmul.f32 %v1878, %v1811
        %v1899 = vmul.f32 %v1878, %v1872
        %v1900 = vmul.f32 %v1878, %v1814
        %v1901 = vmul.f32 %v1878, %v1873
        %v1902 = vmul.f32 %v1878, %v1817
        %v1903 = vmul.f32 %v1878, %v1874
        %v1904 = vmul.f32 %v1878, %v1820
        %v1905 = vmul.f32 %v1878, %v1875
        %v1906 = vmul.f32 %v1878, %v1823
        %v1907 = vmul.f32 %v1878, %v1876
        %v1908 = vmul.f32 %v1878, %v1826
        %v1909 = vmul.f32 %v1878, %v1877
        %v1910 = vmul.f32 %v1878, %v1829
        %s1911 = sld [smem:[#allocation2 + $0x1]]
        %v1942 = vrot.slane %v1656, 7
        %v1943 = vrot.slane %v1659, 7
        %v1944 = vsel %vm1782, %v1942, %v1943
        %v1945 = vrot.slane %v1662, 7
        %v1946 = vrot.slane %v1665, 7
        %v1947 = vsel %vm1782, %v1945, %v1946
        %v1948 = vrot.slane %v1668, 7
        %v1949 = vrot.slane %v1671, 7
        %v1950 = vsel %vm1782, %v1948, %v1949
        %v1951 = vrot.slane %v1674, 7
        %v1952 = vrot.slane %v1677, 7
        %v1953 = vsel %vm1782, %v1951, %v1952
        %v1954 = vrot.slane %v1680, 7
        %v1955 = vrot.slane %v1683, 7
        %v1956 = vsel %vm1782, %v1954, %v1955
        %v1957 = vrot.slane %v1686, 7
        %v1958 = vrot.slane %v1689, 7
        %v1959 = vsel %vm1782, %v1957, %v1958
        %v1960 = vrot.slane %v1692, 7
        %v1961 = vrot.slane %v1695, 7
        %v1962 = vsel %vm1782, %v1960, %v1961
        %v1963 = vrot.slane %v1698, 7
        %v1964 = vrot.slane %v1701, 7
        %v1965 = vsel %vm1782, %v1963, %v1964
        %v1966 = vrot.slane %v1704, 7
        %v1967 = vrot.slane %v1707, 7
        %v1968 = vsel %vm1782, %v1966, %v1967
        %v1969 = vrot.slane %v1710, 7
        %v1970 = vrot.slane %v1713, 7
        %v1971 = vsel %vm1782, %v1969, %v1970
        %v1972 = vrot.slane %v1716, 7
        %v1973 = vrot.slane %v1719, 7
        %v1974 = vsel %vm1782, %v1972, %v1973
        %v1975 = vrot.slane %v1722, 7
        %v1976 = vrot.slane %v1725, 7
        %v1977 = vsel %vm1782, %v1975, %v1976
        %v1978 = vrot.slane %v1728, 7
        %v1979 = vrot.slane %v1731, 7
        %v1980 = vsel %vm1782, %v1978, %v1979
        %v1981 = vrot.slane %v1734, 7
        %v1982 = vrot.slane %v1737, 7
        %v1983 = vsel %vm1782, %v1981, %v1982
        %v1984 = vrot.slane %v1740, 7
        %v1985 = vrot.slane %v1743, 7
        %v1986 = vsel %vm1782, %v1984, %v1985
        %v2017 = vsel %vm1782, 0.0, %v1942
        %v2018 = vsel %vm1782, 0.0, %v1945
        %v2019 = vsel %vm1782, 0.0, %v1948
        %v2020 = vsel %vm1782, 0.0, %v1951
        %v2021 = vsel %vm1782, 0.0, %v1954
        %v2022 = vsel %vm1782, 0.0, %v1957
        %v2023 = vsel %vm1782, 0.0, %v1960
        %v2024 = vsel %vm1782, 0.0, %v1963
        %v2025 = vsel %vm1782, 0.0, %v1966
        %v2026 = vsel %vm1782, 0.0, %v1969
        %v2027 = vsel %vm1782, 0.0, %v1972
        %v2028 = vsel %vm1782, 0.0, %v1975
        %v2029 = vsel %vm1782, 0.0, %v1978
        %v2030 = vsel %vm1782, 0.0, %v1981
        %v2031 = vsel %vm1782, 0.0, %v1984
        %v2032 = vstv %s1911
        %v2033 = vmul.f32 %v2032, %v1862
        %v2034 = vmul.f32 %v2032, %v1784
        %v2035 = vmul.f32 %v2032, %v2017
        %v2036 = vmul.f32 %v2032, %v1944
        %v2037 = vmul.f32 %v2032, %v2018
        %v2038 = vmul.f32 %v2032, %v1947
        %v2039 = vmul.f32 %v2032, %v2019
        %v2040 = vmul.f32 %v2032, %v1950
        %v2041 = vmul.f32 %v2032, %v2020
        %v2042 = vmul.f32 %v2032, %v1953
        %v2043 = vmul.f32 %v2032, %v2021
        %v2044 = vmul.f32 %v2032, %v1956
        %v2045 = vmul.f32 %v2032, %v2022
        %v2046 = vmul.f32 %v2032, %v1959
        %v2047 = vmul.f32 %v2032, %v2023
        %v2048 = vmul.f32 %v2032, %v1962
        %v2049 = vmul.f32 %v2032, %v2024
        %v2050 = vmul.f32 %v2032, %v1965
        %v2051 = vmul.f32 %v2032, %v2025
        %v2052 = vmul.f32 %v2032, %v1968
        %v2053 = vmul.f32 %v2032, %v2026
        %v2054 = vmul.f32 %v2032, %v1971
        %v2055 = vmul.f32 %v2032, %v2027
        %v2056 = vmul.f32 %v2032, %v1974
        %v2057 = vmul.f32 %v2032, %v2028
        %v2058 = vmul.f32 %v2032, %v1977
        %v2059 = vmul.f32 %v2032, %v2029
        %v2060 = vmul.f32 %v2032, %v1980
        %v2061 = vmul.f32 %v2032, %v2030
        %v2062 = vmul.f32 %v2032, %v1983
        %v2063 = vmul.f32 %v2032, %v2031
        %v2064 = vmul.f32 %v2032, %v1986
        %v2065 = vadd.f32 %v1879, %v2033
        %v2066 = vadd.f32 %v1880, %v2034
        %v2067 = vadd.f32 %v1881, %v2035
        %v2068 = vadd.f32 %v1882, %v2036
        %v2069 = vadd.f32 %v1883, %v2037
        %v2070 = vadd.f32 %v1884, %v2038
        %v2071 = vadd.f32 %v1885, %v2039
        %v2072 = vadd.f32 %v1886, %v2040
        %v2073 = vadd.f32 %v1887, %v2041
        %v2074 = vadd.f32 %v1888, %v2042
        %v2075 = vadd.f32 %v1889, %v2043
        %v2076 = vadd.f32 %v1890, %v2044
        %v2077 = vadd.f32 %v1891, %v2045
        %v2078 = vadd.f32 %v1892, %v2046
        %v2079 = vadd.f32 %v1893, %v2047
        %v2080 = vadd.f32 %v1894, %v2048
        %v2081 = vadd.f32 %v1895, %v2049
        %v2082 = vadd.f32 %v1896, %v2050
        %v2083 = vadd.f32 %v1897, %v2051
        %v2084 = vadd.f32 %v1898, %v2052
        %v2085 = vadd.f32 %v1899, %v2053
        %v2086 = vadd.f32 %v1900, %v2054
        %v2087 = vadd.f32 %v1901, %v2055
        %v2088 = vadd.f32 %v1902, %v2056
        %v2089 = vadd.f32 %v1903, %v2057
        %v2090 = vadd.f32 %v1904, %v2058
        %v2091 = vadd.f32 %v1905, %v2059
        %v2092 = vadd.f32 %v1906, %v2060
        %v2093 = vadd.f32 %v1907, %v2061
        %v2094 = vadd.f32 %v1908, %v2062
        %v2095 = vadd.f32 %v1909, %v2063
        %v2096 = vadd.f32 %v1910, %v2064
        %v2097 = vadd.f32 %v2065, 0.0
        %v2098 = vadd.f32 %v2066, 0.0
        %v2099 = vadd.f32 %v2067, 0.0
        %v2100 = vadd.f32 %v2068, 0.0
        %v2101 = vadd.f32 %v2069, 0.0
        %v2102 = vadd.f32 %v2070, 0.0
        %v2103 = vadd.f32 %v2071, 0.0
        %v2104 = vadd.f32 %v2072, 0.0
        %v2105 = vadd.f32 %v2073, 0.0
        %v2106 = vadd.f32 %v2074, 0.0
        %v2107 = vadd.f32 %v2075, 0.0
        %v2108 = vadd.f32 %v2076, 0.0
        %v2109 = vadd.f32 %v2077, 0.0
        %v2110 = vadd.f32 %v2078, 0.0
        %v2111 = vadd.f32 %v2079, 0.0
        %v2112 = vadd.f32 %v2080, 0.0
        %v2113 = vadd.f32 %v2081, 0.0
        %v2114 = vadd.f32 %v2082, 0.0
        %v2115 = vadd.f32 %v2083, 0.0
        %v2116 = vadd.f32 %v2084, 0.0
        %v2117 = vadd.f32 %v2085, 0.0
        %v2118 = vadd.f32 %v2086, 0.0
        %v2119 = vadd.f32 %v2087, 0.0
        %v2120 = vadd.f32 %v2088, 0.0
        %v2121 = vadd.f32 %v2089, 0.0
        %v2122 = vadd.f32 %v2090, 0.0
        %v2123 = vadd.f32 %v2091, 0.0
        %v2124 = vadd.f32 %v2092, 0.0
        %v2125 = vadd.f32 %v2093, 0.0
        %v2126 = vadd.f32 %v2094, 0.0
        %v2127 = vadd.f32 %v2095, 0.0
        %v2128 = vadd.f32 %v2096, 0.0
        %s2129 = sld [smem:[#allocation2 + $0x80]]
        %v2130 = vstv %s2129
        %v2131 = vmul.f32 %v2130, 0.0
        %v2132 = vmul.f32 %v2130, %v1622
        %v2133 = vmul.f32 %v2130, %v1623
        %v2134 = vmul.f32 %v2130, %v1624
        %v2135 = vmul.f32 %v2130, %v1625
        %v2136 = vmul.f32 %v2130, %v1626
        %v2137 = vmul.f32 %v2130, %v1627
        %v2138 = vmul.f32 %v2130, %v1628
        %v2139 = vmul.f32 %v2130, %v1629
        %v2140 = vmul.f32 %v2130, %v1630
        %v2141 = vmul.f32 %v2130, %v1631
        %v2142 = vmul.f32 %v2130, %v1632
        %v2143 = vmul.f32 %v2130, %v1633
        %v2144 = vmul.f32 %v2130, %v1634
        %v2145 = vmul.f32 %v2130, %v1635
        %v2146 = vmul.f32 %v2130, %v1636
        %v2147 = vmul.f32 %v2130, %v1637
        %v2148 = vmul.f32 %v2130, %v1638
        %v2149 = vmul.f32 %v2130, %v1639
        %v2150 = vmul.f32 %v2130, %v1640
        %v2151 = vmul.f32 %v2130, %v1641
        %v2152 = vmul.f32 %v2130, %v1642
        %v2153 = vmul.f32 %v2130, %v1643
        %v2154 = vmul.f32 %v2130, %v1644
        %v2155 = vmul.f32 %v2130, %v1645
        %v2156 = vmul.f32 %v2130, %v1646
        %v2157 = vmul.f32 %v2130, %v1647
        %v2158 = vmul.f32 %v2130, %v1648
        %v2159 = vmul.f32 %v2130, %v1649
        %v2160 = vmul.f32 %v2130, %v1650
        %v2161 = vmul.f32 %v2130, %v1651
        %s2162 = sld [smem:[#allocation2 + $0x81]]
        %v2163 = vstv %s2162
        %v2164 = vmul.f32 %v2163, 0.0
        %v2165 = vmul.f32 %v2163, %v1656
        %v2166 = vmul.f32 %v2163, %v1659
        %v2167 = vmul.f32 %v2163, %v1662
        %v2168 = vmul.f32 %v2163, %v1665
        %v2169 = vmul.f32 %v2163, %v1668
        %v2170 = vmul.f32 %v2163, %v1671
        %v2171 = vmul.f32 %v2163, %v1674
        %v2172 = vmul.f32 %v2163, %v1677
        %v2173 = vmul.f32 %v2163, %v1680
        %v2174 = vmul.f32 %v2163, %v1683
        %v2175 = vmul.f32 %v2163, %v1686
        %v2176 = vmul.f32 %v2163, %v1689
        %v2177 = vmul.f32 %v2163, %v1692
        %v2178 = vmul.f32 %v2163, %v1695
        %v2179 = vmul.f32 %v2163, %v1698
        %v2180 = vmul.f32 %v2163, %v1701
        %v2181 = vmul.f32 %v2163, %v1704
        %v2182 = vmul.f32 %v2163, %v1707
        %v2183 = vmul.f32 %v2163, %v1710
        %v2184 = vmul.f32 %v2163, %v1713
        %v2185 = vmul.f32 %v2163, %v1716
        %v2186 = vmul.f32 %v2163, %v1719
        %v2187 = vmul.f32 %v2163, %v1722
        %v2188 = vmul.f32 %v2163, %v1725
        %v2189 = vmul.f32 %v2163, %v1728
        %v2190 = vmul.f32 %v2163, %v1731
        %v2191 = vmul.f32 %v2163, %v1734
        %v2192 = vmul.f32 %v2163, %v1737
        %v2193 = vmul.f32 %v2163, %v1740
        %v2194 = vmul.f32 %v2163, %v1743
        %v2195 = vadd.f32 %v2131, %v2164
        %v2196 = vadd.f32 %v2132, %v2165
        %v2197 = vadd.f32 %v2133, %v2166
        %v2198 = vadd.f32 %v2134, %v2167
        %v2199 = vadd.f32 %v2135, %v2168
        %v2200 = vadd.f32 %v2136, %v2169
        %v2201 = vadd.f32 %v2137, %v2170
        %v2202 = vadd.f32 %v2138, %v2171
        %v2203 = vadd.f32 %v2139, %v2172
        %v2204 = vadd.f32 %v2140, %v2173
        %v2205 = vadd.f32 %v2141, %v2174
        %v2206 = vadd.f32 %v2142, %v2175
        %v2207 = vadd.f32 %v2143, %v2176
        %v2208 = vadd.f32 %v2144, %v2177
        %v2209 = vadd.f32 %v2145, %v2178
        %v2210 = vadd.f32 %v2146, %v2179
        %v2211 = vadd.f32 %v2147, %v2180
        %v2212 = vadd.f32 %v2148, %v2181
        %v2213 = vadd.f32 %v2149, %v2182
        %v2214 = vadd.f32 %v2150, %v2183
        %v2215 = vadd.f32 %v2151, %v2184
        %v2216 = vadd.f32 %v2152, %v2185
        %v2217 = vadd.f32 %v2153, %v2186
        %v2218 = vadd.f32 %v2154, %v2187
        %v2219 = vadd.f32 %v2155, %v2188
        %v2220 = vadd.f32 %v2156, %v2189
        %v2221 = vadd.f32 %v2157, %v2190
        %v2222 = vadd.f32 %v2158, %v2191
        %v2223 = vadd.f32 %v2159, %v2192
        %v2224 = vadd.f32 %v2160, %v2193
        %v2225 = vadd.f32 %v2161, %v2194
        %v2226 = vadd.f32 %v2097, %v2195
        %v2227 = vadd.f32 %v2098, %v2195
        %v2228 = vadd.f32 %v2099, %v2196
        %v2229 = vadd.f32 %v2100, %v2197
        %v2230 = vadd.f32 %v2101, %v2198
        %v2231 = vadd.f32 %v2102, %v2199
        %v2232 = vadd.f32 %v2103, %v2200
        %v2233 = vadd.f32 %v2104, %v2201
        %v2234 = vadd.f32 %v2105, %v2202
        %v2235 = vadd.f32 %v2106, %v2203
        %v2236 = vadd.f32 %v2107, %v2204
        %v2237 = vadd.f32 %v2108, %v2205
        %v2238 = vadd.f32 %v2109, %v2206
        %v2239 = vadd.f32 %v2110, %v2207
        %v2240 = vadd.f32 %v2111, %v2208
        %v2241 = vadd.f32 %v2112, %v2209
        %v2242 = vadd.f32 %v2113, %v2210
        %v2243 = vadd.f32 %v2114, %v2211
        %v2244 = vadd.f32 %v2115, %v2212
        %v2245 = vadd.f32 %v2116, %v2213
        %v2246 = vadd.f32 %v2117, %v2214
        %v2247 = vadd.f32 %v2118, %v2215
        %v2248 = vadd.f32 %v2119, %v2216
        %v2249 = vadd.f32 %v2120, %v2217
        %v2250 = vadd.f32 %v2121, %v2218
        %v2251 = vadd.f32 %v2122, %v2219
        %v2252 = vadd.f32 %v2123, %v2220
        %v2253 = vadd.f32 %v2124, %v2221
        %v2254 = vadd.f32 %v2125, %v2222
        %v2255 = vadd.f32 %v2126, %v2223
        %v2256 = vadd.f32 %v2127, %v2224
        %v2257 = vadd.f32 %v2128, %v2225
        %s2258 = sld [smem:[#allocation2 + $0x100]]
        %vm2259 = vcmask 1046528
        %v2260 = vrot.slane 0.0, 1
        %v2261 = vsel %vm2259, %v2260, %v2260
        %v2262 = vrot.slane %v1622, 1
        %v2263 = vrot.slane %v1623, 1
        %v2264 = vsel %vm2259, %v2262, %v2263
        %v2265 = vrot.slane %v1624, 1
        %v2266 = vrot.slane %v1625, 1
        %v2267 = vsel %vm2259, %v2265, %v2266
        %v2268 = vrot.slane %v1626, 1
        %v2269 = vrot.slane %v1627, 1
        %v2270 = vsel %vm2259, %v2268, %v2269
        %v2271 = vrot.slane %v1628, 1
        %v2272 = vrot.slane %v1629, 1
        %v2273 = vsel %vm2259, %v2271, %v2272
        %v2274 = vrot.slane %v1630, 1
        %v2275 = vrot.slane %v1631, 1
        %v2276 = vsel %vm2259, %v2274, %v2275
        %v2277 = vrot.slane %v1632, 1
        %v2278 = vrot.slane %v1633, 1
        %v2279 = vsel %vm2259, %v2277, %v2278
        %v2280 = vrot.slane %v1634, 1
        %v2281 = vrot.slane %v1635, 1
        %v2282 = vsel %vm2259, %v2280, %v2281
        %v2283 = vrot.slane %v1636, 1
        %v2284 = vrot.slane %v1637, 1
        %v2285 = vsel %vm2259, %v2283, %v2284
        %v2286 = vrot.slane %v1638, 1
        %v2287 = vrot.slane %v1639, 1
        %v2288 = vsel %vm2259, %v2286, %v2287
        %v2289 = vrot.slane %v1640, 1
        %v2290 = vrot.slane %v1641, 1
        %v2291 = vsel %vm2259, %v2289, %v2290
        %v2292 = vrot.slane %v1642, 1
        %v2293 = vrot.slane %v1643, 1
        %v2294 = vsel %vm2259, %v2292, %v2293
        %v2295 = vrot.slane %v1644, 1
        %v2296 = vrot.slane %v1645, 1
        %v2297 = vsel %vm2259, %v2295, %v2296
        %v2298 = vrot.slane %v1646, 1
        %v2299 = vrot.slane %v1647, 1
        %v2300 = vsel %vm2259, %v2298, %v2299
        %v2301 = vrot.slane %v1648, 1
        %v2302 = vrot.slane %v1649, 1
        %v2303 = vsel %vm2259, %v2301, %v2302
        %v2304 = vrot.slane %v1650, 1
        %v2305 = vrot.slane %v1651, 1
        %v2306 = vsel %vm2259, %v2304, %v2305
        %v2339 = vsel %vm2259, %v2260, 0.0
        %v2340 = vsel %vm2259, %v2263, 0.0
        %v2341 = vsel %vm2259, %v2266, 0.0
        %v2342 = vsel %vm2259, %v2269, 0.0
        %v2343 = vsel %vm2259, %v2272, 0.0
        %v2344 = vsel %vm2259, %v2275, 0.0
        %v2345 = vsel %vm2259, %v2278, 0.0
        %v2346 = vsel %vm2259, %v2281, 0.0
        %v2347 = vsel %vm2259, %v2284, 0.0
        %v2348 = vsel %vm2259, %v2287, 0.0
        %v2349 = vsel %vm2259, %v2290, 0.0
        %v2350 = vsel %vm2259, %v2293, 0.0
        %v2351 = vsel %vm2259, %v2296, 0.0
        %v2352 = vsel %vm2259, %v2299, 0.0
        %v2353 = vsel %vm2259, %v2302, 0.0
        %v2354 = vsel %vm2259, %v2305, 0.0
        %v2355 = vstv %s2258
        %v2356 = vmul.f32 %v2355, %v2261
        %v2357 = vmul.f32 %v2355, %v2339
        %v2358 = vmul.f32 %v2355, %v2264
        %v2359 = vmul.f32 %v2355, %v2340
        %v2360 = vmul.f32 %v2355, %v2267
        %v2361 = vmul.f32 %v2355, %v2341
        %v2362 = vmul.f32 %v2355, %v2270
        %v2363 = vmul.f32 %v2355, %v2342
        %v2364 = vmul.f32 %v2355, %v2273
        %v2365 = vmul.f32 %v2355, %v2343
        %v2366 = vmul.f32 %v2355, %v2276
        %v2367 = vmul.f32 %v2355, %v2344
        %v2368 = vmul.f32 %v2355, %v2279
        %v2369 = vmul.f32 %v2355, %v2345
        %v2370 = vmul.f32 %v2355, %v2282
        %v2371 = vmul.f32 %v2355, %v2346
        %v2372 = vmul.f32 %v2355, %v2285
        %v2373 = vmul.f32 %v2355, %v2347
        %v2374 = vmul.f32 %v2355, %v2288
        %v2375 = vmul.f32 %v2355, %v2348
        %v2376 = vmul.f32 %v2355, %v2291
        %v2377 = vmul.f32 %v2355, %v2349
        %v2378 = vmul.f32 %v2355, %v2294
        %v2379 = vmul.f32 %v2355, %v2350
        %v2380 = vmul.f32 %v2355, %v2297
        %v2381 = vmul.f32 %v2355, %v2351
        %v2382 = vmul.f32 %v2355, %v2300
        %v2383 = vmul.f32 %v2355, %v2352
        %v2384 = vmul.f32 %v2355, %v2303
        %v2385 = vmul.f32 %v2355, %v2353
        %v2386 = vmul.f32 %v2355, %v2306
        %v2387 = vmul.f32 %v2355, %v2354
        %s2388 = sld [smem:[#allocation2 + $0x101]]
        %v2389 = vrot.slane %v1656, 1
        %v2390 = vrot.slane %v1659, 1
        %v2391 = vsel %vm2259, %v2389, %v2390
        %v2392 = vrot.slane %v1662, 1
        %v2393 = vrot.slane %v1665, 1
        %v2394 = vsel %vm2259, %v2392, %v2393
        %v2395 = vrot.slane %v1668, 1
        %v2396 = vrot.slane %v1671, 1
        %v2397 = vsel %vm2259, %v2395, %v2396
        %v2398 = vrot.slane %v1674, 1
        %v2399 = vrot.slane %v1677, 1
        %v2400 = vsel %vm2259, %v2398, %v2399
        %v2401 = vrot.slane %v1680, 1
        %v2402 = vrot.slane %v1683, 1
        %v2403 = vsel %vm2259, %v2401, %v2402
        %v2404 = vrot.slane %v1686, 1
        %v2405 = vrot.slane %v1689, 1
        %v2406 = vsel %vm2259, %v2404, %v2405
        %v2407 = vrot.slane %v1692, 1
        %v2408 = vrot.slane %v1695, 1
        %v2409 = vsel %vm2259, %v2407, %v2408
        %v2410 = vrot.slane %v1698, 1
        %v2411 = vrot.slane %v1701, 1
        %v2412 = vsel %vm2259, %v2410, %v2411
        %v2413 = vrot.slane %v1704, 1
        %v2414 = vrot.slane %v1707, 1
        %v2415 = vsel %vm2259, %v2413, %v2414
        %v2416 = vrot.slane %v1710, 1
        %v2417 = vrot.slane %v1713, 1
        %v2418 = vsel %vm2259, %v2416, %v2417
        %v2419 = vrot.slane %v1716, 1
        %v2420 = vrot.slane %v1719, 1
        %v2421 = vsel %vm2259, %v2419, %v2420
        %v2422 = vrot.slane %v1722, 1
        %v2423 = vrot.slane %v1725, 1
        %v2424 = vsel %vm2259, %v2422, %v2423
        %v2425 = vrot.slane %v1728, 1
        %v2426 = vrot.slane %v1731, 1
        %v2427 = vsel %vm2259, %v2425, %v2426
        %v2428 = vrot.slane %v1734, 1
        %v2429 = vrot.slane %v1737, 1
        %v2430 = vsel %vm2259, %v2428, %v2429
        %v2431 = vrot.slane %v1740, 1
        %v2432 = vrot.slane %v1743, 1
        %v2433 = vsel %vm2259, %v2431, %v2432
        %v2464 = vsel %vm2259, %v2390, 0.0
        %v2465 = vsel %vm2259, %v2393, 0.0
        %v2466 = vsel %vm2259, %v2396, 0.0
        %v2467 = vsel %vm2259, %v2399, 0.0
        %v2468 = vsel %vm2259, %v2402, 0.0
        %v2469 = vsel %vm2259, %v2405, 0.0
        %v2470 = vsel %vm2259, %v2408, 0.0
        %v2471 = vsel %vm2259, %v2411, 0.0
        %v2472 = vsel %vm2259, %v2414, 0.0
        %v2473 = vsel %vm2259, %v2417, 0.0
        %v2474 = vsel %vm2259, %v2420, 0.0
        %v2475 = vsel %vm2259, %v2423, 0.0
        %v2476 = vsel %vm2259, %v2426, 0.0
        %v2477 = vsel %vm2259, %v2429, 0.0
        %v2478 = vsel %vm2259, %v2432, 0.0
        %v2479 = vstv %s2388
        %v2480 = vmul.f32 %v2479, %v2261
        %v2481 = vmul.f32 %v2479, %v2339
        %v2482 = vmul.f32 %v2479, %v2391
        %v2483 = vmul.f32 %v2479, %v2464
        %v2484 = vmul.f32 %v2479, %v2394
        %v2485 = vmul.f32 %v2479, %v2465
        %v2486 = vmul.f32 %v2479, %v2397
        %v2487 = vmul.f32 %v2479, %v2466
        %v2488 = vmul.f32 %v2479, %v2400
        %v2489 = vmul.f32 %v2479, %v2467
        %v2490 = vmul.f32 %v2479, %v2403
        %v2491 = vmul.f32 %v2479, %v2468
        %v2492 = vmul.f32 %v2479, %v2406
        %v2493 = vmul.f32 %v2479, %v2469
        %v2494 = vmul.f32 %v2479, %v2409
        %v2495 = vmul.f32 %v2479, %v2470
        %v2496 = vmul.f32 %v2479, %v2412
        %v2497 = vmul.f32 %v2479, %v2471
        %v2498 = vmul.f32 %v2479, %v2415
        %v2499 = vmul.f32 %v2479, %v2472
        %v2500 = vmul.f32 %v2479, %v2418
        %v2501 = vmul.f32 %v2479, %v2473
        %v2502 = vmul.f32 %v2479, %v2421
        %v2503 = vmul.f32 %v2479, %v2474
        %v2504 = vmul.f32 %v2479, %v2424
        %v2505 = vmul.f32 %v2479, %v2475
        %v2506 = vmul.f32 %v2479, %v2427
        %v2507 = vmul.f32 %v2479, %v2476
        %v2508 = vmul.f32 %v2479, %v2430
        %v2509 = vmul.f32 %v2479, %v2477
        %v2510 = vmul.f32 %v2479, %v2433
        %v2511 = vmul.f32 %v2479, %v2478
        %v2512 = vadd.f32 %v2356, %v2480
        %v2513 = vadd.f32 %v2357, %v2481
        %v2514 = vadd.f32 %v2358, %v2482
        %v2515 = vadd.f32 %v2359, %v2483
        %v2516 = vadd.f32 %v2360, %v2484
        %v2517 = vadd.f32 %v2361, %v2485
        %v2518 = vadd.f32 %v2362, %v2486
        %v2519 = vadd.f32 %v2363, %v2487
        %v2520 = vadd.f32 %v2364, %v2488
        %v2521 = vadd.f32 %v2365, %v2489
        %v2522 = vadd.f32 %v2366, %v2490
        %v2523 = vadd.f32 %v2367, %v2491
        %v2524 = vadd.f32 %v2368, %v2492
        %v2525 = vadd.f32 %v2369, %v2493
        %v2526 = vadd.f32 %v2370, %v2494
        %v2527 = vadd.f32 %v2371, %v2495
        %v2528 = vadd.f32 %v2372, %v2496
        %v2529 = vadd.f32 %v2373, %v2497
        %v2530 = vadd.f32 %v2374, %v2498
        %v2531 = vadd.f32 %v2375, %v2499
        %v2532 = vadd.f32 %v2376, %v2500
        %v2533 = vadd.f32 %v2377, %v2501
        %v2534 = vadd.f32 %v2378, %v2502
        %v2535 = vadd.f32 %v2379, %v2503
        %v2536 = vadd.f32 %v2380, %v2504
        %v2537 = vadd.f32 %v2381, %v2505
        %v2538 = vadd.f32 %v2382, %v2506
        %v2539 = vadd.f32 %v2383, %v2507
        %v2540 = vadd.f32 %v2384, %v2508
        %v2541 = vadd.f32 %v2385, %v2509
        %v2542 = vadd.f32 %v2386, %v2510
        %v2543 = vadd.f32 %v2387, %v2511
        %v2544 = vadd.f32 %v2226, %v2512
        %v2545 = vadd.f32 %v2227, %v2513
        %v2546 = vadd.f32 %v2228, %v2514
        %v2547 = vadd.f32 %v2229, %v2515
        %v2548 = vadd.f32 %v2230, %v2516
        %v2549 = vadd.f32 %v2231, %v2517
        %v2550 = vadd.f32 %v2232, %v2518
        %v2551 = vadd.f32 %v2233, %v2519
        %v2552 = vadd.f32 %v2234, %v2520
        %v2553 = vadd.f32 %v2235, %v2521
        %v2554 = vadd.f32 %v2236, %v2522
        %v2555 = vadd.f32 %v2237, %v2523
        %v2556 = vadd.f32 %v2238, %v2524
        %v2557 = vadd.f32 %v2239, %v2525
        %v2558 = vadd.f32 %v2240, %v2526
        %v2559 = vadd.f32 %v2241, %v2527
        %v2560 = vadd.f32 %v2242, %v2528
        %v2561 = vadd.f32 %v2243, %v2529
        %v2562 = vadd.f32 %v2244, %v2530
        %v2563 = vadd.f32 %v2245, %v2531
        %v2564 = vadd.f32 %v2246, %v2532
        %v2565 = vadd.f32 %v2247, %v2533
        %v2566 = vadd.f32 %v2248, %v2534
        %v2567 = vadd.f32 %v2249, %v2535
        %v2568 = vadd.f32 %v2250, %v2536
        %v2569 = vadd.f32 %v2251, %v2537
        %v2570 = vadd.f32 %v2252, %v2538
        %v2571 = vadd.f32 %v2253, %v2539
        %v2572 = vadd.f32 %v2254, %v2540
        %v2573 = vadd.f32 %v2255, %v2541
        %v2574 = vadd.f32 %v2256, %v2542
        %v2575 = vadd.f32 %v2257, %v2543
        %s2576 = sld [smem:[#allocation2 + $0x180]]
        %v2579 = vrot.slane %v1652, 7
        %v2580 = vrot.slane %v1653, 7
        %v2581 = vsel %vm1782, %v2579, %v2580
        %v2584 = vsel %vm1782, 0.0, %v2579
        %v2585 = vstv %s2576
        %v2586 = vmul.f32 %v2585, %v1863
        %v2587 = vmul.f32 %v2585, %v1787
        %v2588 = vmul.f32 %v2585, %v1864
        %v2589 = vmul.f32 %v2585, %v1790
        %v2590 = vmul.f32 %v2585, %v1865
        %v2591 = vmul.f32 %v2585, %v1793
        %v2592 = vmul.f32 %v2585, %v1866
        %v2593 = vmul.f32 %v2585, %v1796
        %v2594 = vmul.f32 %v2585, %v1867
        %v2595 = vmul.f32 %v2585, %v1799
        %v2596 = vmul.f32 %v2585, %v1868
        %v2597 = vmul.f32 %v2585, %v1802
        %v2598 = vmul.f32 %v2585, %v1869
        %v2599 = vmul.f32 %v2585, %v1805
        %v2600 = vmul.f32 %v2585, %v1870
        %v2601 = vmul.f32 %v2585, %v1808
        %v2602 = vmul.f32 %v2585, %v1871
        %v2603 = vmul.f32 %v2585, %v1811
        %v2604 = vmul.f32 %v2585, %v1872
        %v2605 = vmul.f32 %v2585, %v1814
        %v2606 = vmul.f32 %v2585, %v1873
        %v2607 = vmul.f32 %v2585, %v1817
        %v2608 = vmul.f32 %v2585, %v1874
        %v2609 = vmul.f32 %v2585, %v1820
        %v2610 = vmul.f32 %v2585, %v1875
        %v2611 = vmul.f32 %v2585, %v1823
        %v2612 = vmul.f32 %v2585, %v1876
        %v2613 = vmul.f32 %v2585, %v1826
        %v2614 = vmul.f32 %v2585, %v1877
        %v2615 = vmul.f32 %v2585, %v1829
        %v2616 = vmul.f32 %v2585, %v2584
        %v2617 = vmul.f32 %v2585, %v2581
        %s2618 = sld [smem:[#allocation2 + $0x181]]
        %v2621 = vrot.slane %v1746, 7
        %v2622 = vrot.slane %v1749, 7
        %v2623 = vsel %vm1782, %v2621, %v2622
        %v2626 = vsel %vm1782, 0.0, %v2621
        %v2627 = vstv %s2618
        %v2628 = vmul.f32 %v2627, %v2017
        %v2629 = vmul.f32 %v2627, %v1944
        %v2630 = vmul.f32 %v2627, %v2018
        %v2631 = vmul.f32 %v2627, %v1947
        %v2632 = vmul.f32 %v2627, %v2019
        %v2633 = vmul.f32 %v2627, %v1950
        %v2634 = vmul.f32 %v2627, %v2020
        %v2635 = vmul.f32 %v2627, %v1953
        %v2636 = vmul.f32 %v2627, %v2021
        %v2637 = vmul.f32 %v2627, %v1956
        %v2638 = vmul.f32 %v2627, %v2022
        %v2639 = vmul.f32 %v2627, %v1959
        %v2640 = vmul.f32 %v2627, %v2023
        %v2641 = vmul.f32 %v2627, %v1962
        %v2642 = vmul.f32 %v2627, %v2024
        %v2643 = vmul.f32 %v2627, %v1965
        %v2644 = vmul.f32 %v2627, %v2025
        %v2645 = vmul.f32 %v2627, %v1968
        %v2646 = vmul.f32 %v2627, %v2026
        %v2647 = vmul.f32 %v2627, %v1971
        %v2648 = vmul.f32 %v2627, %v2027
        %v2649 = vmul.f32 %v2627, %v1974
        %v2650 = vmul.f32 %v2627, %v2028
        %v2651 = vmul.f32 %v2627, %v1977
        %v2652 = vmul.f32 %v2627, %v2029
        %v2653 = vmul.f32 %v2627, %v1980
        %v2654 = vmul.f32 %v2627, %v2030
        %v2655 = vmul.f32 %v2627, %v1983
        %v2656 = vmul.f32 %v2627, %v2031
        %v2657 = vmul.f32 %v2627, %v1986
        %v2658 = vmul.f32 %v2627, %v2626
        %v2659 = vmul.f32 %v2627, %v2623
        %v2660 = vadd.f32 %v2586, %v2628
        %v2661 = vadd.f32 %v2587, %v2629
        %v2662 = vadd.f32 %v2588, %v2630
        %v2663 = vadd.f32 %v2589, %v2631
        %v2664 = vadd.f32 %v2590, %v2632
        %v2665 = vadd.f32 %v2591, %v2633
        %v2666 = vadd.f32 %v2592, %v2634
        %v2667 = vadd.f32 %v2593, %v2635
        %v2668 = vadd.f32 %v2594, %v2636
        %v2669 = vadd.f32 %v2595, %v2637
        %v2670 = vadd.f32 %v2596, %v2638
        %v2671 = vadd.f32 %v2597, %v2639
        %v2672 = vadd.f32 %v2598, %v2640
        %v2673 = vadd.f32 %v2599, %v2641
        %v2674 = vadd.f32 %v2600, %v2642
        %v2675 = vadd.f32 %v2601, %v2643
        %v2676 = vadd.f32 %v2602, %v2644
        %v2677 = vadd.f32 %v2603, %v2645
        %v2678 = vadd.f32 %v2604, %v2646
        %v2679 = vadd.f32 %v2605, %v2647
        %v2680 = vadd.f32 %v2606, %v2648
        %v2681 = vadd.f32 %v2607, %v2649
        %v2682 = vadd.f32 %v2608, %v2650
        %v2683 = vadd.f32 %v2609, %v2651
        %v2684 = vadd.f32 %v2610, %v2652
        %v2685 = vadd.f32 %v2611, %v2653
        %v2686 = vadd.f32 %v2612, %v2654
        %v2687 = vadd.f32 %v2613, %v2655
        %v2688 = vadd.f32 %v2614, %v2656
        %v2689 = vadd.f32 %v2615, %v2657
        %v2690 = vadd.f32 %v2616, %v2658
        %v2691 = vadd.f32 %v2617, %v2659
        %v2692 = vadd.f32 %v2544, %v2660
        %v2693 = vadd.f32 %v2545, %v2661
        %v2694 = vadd.f32 %v2546, %v2662
        %v2695 = vadd.f32 %v2547, %v2663
        %v2696 = vadd.f32 %v2548, %v2664
        %v2697 = vadd.f32 %v2549, %v2665
        %v2698 = vadd.f32 %v2550, %v2666
        %v2699 = vadd.f32 %v2551, %v2667
        %v2700 = vadd.f32 %v2552, %v2668
        %v2701 = vadd.f32 %v2553, %v2669
        %v2702 = vadd.f32 %v2554, %v2670
        %v2703 = vadd.f32 %v2555, %v2671
        %v2704 = vadd.f32 %v2556, %v2672
        %v2705 = vadd.f32 %v2557, %v2673
        %v2706 = vadd.f32 %v2558, %v2674
        %v2707 = vadd.f32 %v2559, %v2675
        %v2708 = vadd.f32 %v2560, %v2676
        %v2709 = vadd.f32 %v2561, %v2677
        %v2710 = vadd.f32 %v2562, %v2678
        %v2711 = vadd.f32 %v2563, %v2679
        %v2712 = vadd.f32 %v2564, %v2680
        %v2713 = vadd.f32 %v2565, %v2681
        %v2714 = vadd.f32 %v2566, %v2682
        %v2715 = vadd.f32 %v2567, %v2683
        %v2716 = vadd.f32 %v2568, %v2684
        %v2717 = vadd.f32 %v2569, %v2685
        %v2718 = vadd.f32 %v2570, %v2686
        %v2719 = vadd.f32 %v2571, %v2687
        %v2720 = vadd.f32 %v2572, %v2688
        %v2721 = vadd.f32 %v2573, %v2689
        %v2722 = vadd.f32 %v2574, %v2690
        %v2723 = vadd.f32 %v2575, %v2691
        %s2724 = sld [smem:[#allocation2 + $0x200]]
        %v2725 = vstv %s2724
        %v2726 = vmul.f32 %v2725, %v1622
        %v2727 = vmul.f32 %v2725, %v1623
        %v2728 = vmul.f32 %v2725, %v1624
        %v2729 = vmul.f32 %v2725, %v1625
        %v2730 = vmul.f32 %v2725, %v1626
        %v2731 = vmul.f32 %v2725, %v1627
        %v2732 = vmul.f32 %v2725, %v1628
        %v2733 = vmul.f32 %v2725, %v1629
        %v2734 = vmul.f32 %v2725, %v1630
        %v2735 = vmul.f32 %v2725, %v1631
        %v2736 = vmul.f32 %v2725, %v1632
        %v2737 = vmul.f32 %v2725, %v1633
        %v2738 = vmul.f32 %v2725, %v1634
        %v2739 = vmul.f32 %v2725, %v1635
        %v2740 = vmul.f32 %v2725, %v1636
        %v2741 = vmul.f32 %v2725, %v1637
        %v2742 = vmul.f32 %v2725, %v1638
        %v2743 = vmul.f32 %v2725, %v1639
        %v2744 = vmul.f32 %v2725, %v1640
        %v2745 = vmul.f32 %v2725, %v1641
        %v2746 = vmul.f32 %v2725, %v1642
        %v2747 = vmul.f32 %v2725, %v1643
        %v2748 = vmul.f32 %v2725, %v1644
        %v2749 = vmul.f32 %v2725, %v1645
        %v2750 = vmul.f32 %v2725, %v1646
        %v2751 = vmul.f32 %v2725, %v1647
        %v2752 = vmul.f32 %v2725, %v1648
        %v2753 = vmul.f32 %v2725, %v1649
        %v2754 = vmul.f32 %v2725, %v1650
        %v2755 = vmul.f32 %v2725, %v1651
        %v2756 = vmul.f32 %v2725, %v1652
        %v2757 = vmul.f32 %v2725, %v1653
        %s2758 = sld [smem:[#allocation2 + $0x201]]
        %v2759 = vstv %s2758
        %v2760 = vmul.f32 %v2759, %v1656
        %v2761 = vmul.f32 %v2759, %v1659
        %v2762 = vmul.f32 %v2759, %v1662
        %v2763 = vmul.f32 %v2759, %v1665
        %v2764 = vmul.f32 %v2759, %v1668
        %v2765 = vmul.f32 %v2759, %v1671
        %v2766 = vmul.f32 %v2759, %v1674
        %v2767 = vmul.f32 %v2759, %v1677
        %v2768 = vmul.f32 %v2759, %v1680
        %v2769 = vmul.f32 %v2759, %v1683
        %v2770 = vmul.f32 %v2759, %v1686
        %v2771 = vmul.f32 %v2759, %v1689
        %v2772 = vmul.f32 %v2759, %v1692
        %v2773 = vmul.f32 %v2759, %v1695
        %v2774 = vmul.f32 %v2759, %v1698
        %v2775 = vmul.f32 %v2759, %v1701
        %v2776 = vmul.f32 %v2759, %v1704
        %v2777 = vmul.f32 %v2759, %v1707
        %v2778 = vmul.f32 %v2759, %v1710
        %v2779 = vmul.f32 %v2759, %v1713
        %v2780 = vmul.f32 %v2759, %v1716
        %v2781 = vmul.f32 %v2759, %v1719
        %v2782 = vmul.f32 %v2759, %v1722
        %v2783 = vmul.f32 %v2759, %v1725
        %v2784 = vmul.f32 %v2759, %v1728
        %v2785 = vmul.f32 %v2759, %v1731
        %v2786 = vmul.f32 %v2759, %v1734
        %v2787 = vmul.f32 %v2759, %v1737
        %v2788 = vmul.f32 %v2759, %v1740
        %v2789 = vmul.f32 %v2759, %v1743
        %v2790 = vmul.f32 %v2759, %v1746
        %v2791 = vmul.f32 %v2759, %v1749
        %v2792 = vadd.f32 %v2726, %v2760
        %v2793 = vadd.f32 %v2727, %v2761
        %v2794 = vadd.f32 %v2728, %v2762
        %v2795 = vadd.f32 %v2729, %v2763
        %v2796 = vadd.f32 %v2730, %v2764
        %v2797 = vadd.f32 %v2731, %v2765
        %v2798 = vadd.f32 %v2732, %v2766
        %v2799 = vadd.f32 %v2733, %v2767
        %v2800 = vadd.f32 %v2734, %v2768
        %v2801 = vadd.f32 %v2735, %v2769
        %v2802 = vadd.f32 %v2736, %v2770
        %v2803 = vadd.f32 %v2737, %v2771
        %v2804 = vadd.f32 %v2738, %v2772
        %v2805 = vadd.f32 %v2739, %v2773
        %v2806 = vadd.f32 %v2740, %v2774
        %v2807 = vadd.f32 %v2741, %v2775
        %v2808 = vadd.f32 %v2742, %v2776
        %v2809 = vadd.f32 %v2743, %v2777
        %v2810 = vadd.f32 %v2744, %v2778
        %v2811 = vadd.f32 %v2745, %v2779
        %v2812 = vadd.f32 %v2746, %v2780
        %v2813 = vadd.f32 %v2747, %v2781
        %v2814 = vadd.f32 %v2748, %v2782
        %v2815 = vadd.f32 %v2749, %v2783
        %v2816 = vadd.f32 %v2750, %v2784
        %v2817 = vadd.f32 %v2751, %v2785
        %v2818 = vadd.f32 %v2752, %v2786
        %v2819 = vadd.f32 %v2753, %v2787
        %v2820 = vadd.f32 %v2754, %v2788
        %v2821 = vadd.f32 %v2755, %v2789
        %v2822 = vadd.f32 %v2756, %v2790
        %v2823 = vadd.f32 %v2757, %v2791
        %v2824 = vadd.f32 %v2692, %v2792
        %v2825 = vadd.f32 %v2693, %v2793
        %v2826 = vadd.f32 %v2694, %v2794
        %v2827 = vadd.f32 %v2695, %v2795
        %v2828 = vadd.f32 %v2696, %v2796
        %v2829 = vadd.f32 %v2697, %v2797
        %v2830 = vadd.f32 %v2698, %v2798
        %v2831 = vadd.f32 %v2699, %v2799
        %v2832 = vadd.f32 %v2700, %v2800
        %v2833 = vadd.f32 %v2701, %v2801
        %v2834 = vadd.f32 %v2702, %v2802
        %v2835 = vadd.f32 %v2703, %v2803
        %v2836 = vadd.f32 %v2704, %v2804
        %v2837 = vadd.f32 %v2705, %v2805
        %v2838 = vadd.f32 %v2706, %v2806
        %v2839 = vadd.f32 %v2707, %v2807
        %v2840 = vadd.f32 %v2708, %v2808
        %v2841 = vadd.f32 %v2709, %v2809
        %v2842 = vadd.f32 %v2710, %v2810
        %v2843 = vadd.f32 %v2711, %v2811
        %v2844 = vadd.f32 %v2712, %v2812
        %v2845 = vadd.f32 %v2713, %v2813
        %v2846 = vadd.f32 %v2714, %v2814
        %v2847 = vadd.f32 %v2715, %v2815
        %v2848 = vadd.f32 %v2716, %v2816
        %v2849 = vadd.f32 %v2717, %v2817
        %v2850 = vadd.f32 %v2718, %v2818
        %v2851 = vadd.f32 %v2719, %v2819
        %v2852 = vadd.f32 %v2720, %v2820
        %v2853 = vadd.f32 %v2721, %v2821
        %v2854 = vadd.f32 %v2722, %v2822
        %v2855 = vadd.f32 %v2723, %v2823
        %s2856 = sld [smem:[#allocation2 + $0x280]]
        %v2857 = vrot.slane %v1652, 1
        %v2858 = vrot.slane %v1653, 1
        %v2859 = vsel %vm2259, %v2857, %v2858
        %v2862 = vsel %vm2259, %v2858, 0.0
        %v2863 = vstv %s2856
        %v2864 = vmul.f32 %v2863, %v2264
        %v2865 = vmul.f32 %v2863, %v2340
        %v2866 = vmul.f32 %v2863, %v2267
        %v2867 = vmul.f32 %v2863, %v2341
        %v2868 = vmul.f32 %v2863, %v2270
        %v2869 = vmul.f32 %v2863, %v2342
        %v2870 = vmul.f32 %v2863, %v2273
        %v2871 = vmul.f32 %v2863, %v2343
        %v2872 = vmul.f32 %v2863, %v2276
        %v2873 = vmul.f32 %v2863, %v2344
        %v2874 = vmul.f32 %v2863, %v2279
        %v2875 = vmul.f32 %v2863, %v2345
        %v2876 = vmul.f32 %v2863, %v2282
        %v2877 = vmul.f32 %v2863, %v2346
        %v2878 = vmul.f32 %v2863, %v2285
        %v2879 = vmul.f32 %v2863, %v2347
        %v2880 = vmul.f32 %v2863, %v2288
        %v2881 = vmul.f32 %v2863, %v2348
        %v2882 = vmul.f32 %v2863, %v2291
        %v2883 = vmul.f32 %v2863, %v2349
        %v2884 = vmul.f32 %v2863, %v2294
        %v2885 = vmul.f32 %v2863, %v2350
        %v2886 = vmul.f32 %v2863, %v2297
        %v2887 = vmul.f32 %v2863, %v2351
        %v2888 = vmul.f32 %v2863, %v2300
        %v2889 = vmul.f32 %v2863, %v2352
        %v2890 = vmul.f32 %v2863, %v2303
        %v2891 = vmul.f32 %v2863, %v2353
        %v2892 = vmul.f32 %v2863, %v2306
        %v2893 = vmul.f32 %v2863, %v2354
        %v2894 = vmul.f32 %v2863, %v2859
        %v2895 = vmul.f32 %v2863, %v2862
        %s2896 = sld [smem:[#allocation2 + $0x281]]
        %v2897 = vrot.slane %v1746, 1
        %v2898 = vrot.slane %v1749, 1
        %v2899 = vsel %vm2259, %v2897, %v2898
        %v2902 = vsel %vm2259, %v2898, 0.0
        %v2903 = vstv %s2896
        %v2904 = vmul.f32 %v2903, %v2391
        %v2905 = vmul.f32 %v2903, %v2464
        %v2906 = vmul.f32 %v2903, %v2394
        %v2907 = vmul.f32 %v2903, %v2465
        %v2908 = vmul.f32 %v2903, %v2397
        %v2909 = vmul.f32 %v2903, %v2466
        %v2910 = vmul.f32 %v2903, %v2400
        %v2911 = vmul.f32 %v2903, %v2467
        %v2912 = vmul.f32 %v2903, %v2403
        %v2913 = vmul.f32 %v2903, %v2468
        %v2914 = vmul.f32 %v2903, %v2406
        %v2915 = vmul.f32 %v2903, %v2469
        %v2916 = vmul.f32 %v2903, %v2409
        %v2917 = vmul.f32 %v2903, %v2470
        %v2918 = vmul.f32 %v2903, %v2412
        %v2919 = vmul.f32 %v2903, %v2471
        %v2920 = vmul.f32 %v2903, %v2415
        %v2921 = vmul.f32 %v2903, %v2472
        %v2922 = vmul.f32 %v2903, %v2418
        %v2923 = vmul.f32 %v2903, %v2473
        %v2924 = vmul.f32 %v2903, %v2421
        %v2925 = vmul.f32 %v2903, %v2474
        %v2926 = vmul.f32 %v2903, %v2424
        %v2927 = vmul.f32 %v2903, %v2475
        %v2928 = vmul.f32 %v2903, %v2427
        %v2929 = vmul.f32 %v2903, %v2476
        %v2930 = vmul.f32 %v2903, %v2430
        %v2931 = vmul.f32 %v2903, %v2477
        %v2932 = vmul.f32 %v2903, %v2433
        %v2933 = vmul.f32 %v2903, %v2478
        %v2934 = vmul.f32 %v2903, %v2899
        %v2935 = vmul.f32 %v2903, %v2902
        %v2936 = vadd.f32 %v2864, %v2904
        %v2937 = vadd.f32 %v2865, %v2905
        %v2938 = vadd.f32 %v2866, %v2906
        %v2939 = vadd.f32 %v2867, %v2907
        %v2940 = vadd.f32 %v2868, %v2908
        %v2941 = vadd.f32 %v2869, %v2909
        %v2942 = vadd.f32 %v2870, %v2910
        %v2943 = vadd.f32 %v2871, %v2911
        %v2944 = vadd.f32 %v2872, %v2912
        %v2945 = vadd.f32 %v2873, %v2913
        %v2946 = vadd.f32 %v2874, %v2914
        %v2947 = vadd.f32 %v2875, %v2915
        %v2948 = vadd.f32 %v2876, %v2916
        %v2949 = vadd.f32 %v2877, %v2917
        %v2950 = vadd.f32 %v2878, %v2918
        %v2951 = vadd.f32 %v2879, %v2919
        %v2952 = vadd.f32 %v2880, %v2920
        %v2953 = vadd.f32 %v2881, %v2921
        %v2954 = vadd.f32 %v2882, %v2922
        %v2955 = vadd.f32 %v2883, %v2923
        %v2956 = vadd.f32 %v2884, %v2924
        %v2957 = vadd.f32 %v2885, %v2925
        %v2958 = vadd.f32 %v2886, %v2926
        %v2959 = vadd.f32 %v2887, %v2927
        %v2960 = vadd.f32 %v2888, %v2928
        %v2961 = vadd.f32 %v2889, %v2929
        %v2962 = vadd.f32 %v2890, %v2930
        %v2963 = vadd.f32 %v2891, %v2931
        %v2964 = vadd.f32 %v2892, %v2932
        %v2965 = vadd.f32 %v2893, %v2933
        %v2966 = vadd.f32 %v2894, %v2934
        %v2967 = vadd.f32 %v2895, %v2935
        %v2968 = vadd.f32 %v2824, %v2936
        %v2969 = vadd.f32 %v2825, %v2937
        %v2970 = vadd.f32 %v2826, %v2938
        %v2971 = vadd.f32 %v2827, %v2939
        %v2972 = vadd.f32 %v2828, %v2940
        %v2973 = vadd.f32 %v2829, %v2941
        %v2974 = vadd.f32 %v2830, %v2942
        %v2975 = vadd.f32 %v2831, %v2943
        %v2976 = vadd.f32 %v2832, %v2944
        %v2977 = vadd.f32 %v2833, %v2945
        %v2978 = vadd.f32 %v2834, %v2946
        %v2979 = vadd.f32 %v2835, %v2947
        %v2980 = vadd.f32 %v2836, %v2948
        %v2981 = vadd.f32 %v2837, %v2949
        %v2982 = vadd.f32 %v2838, %v2950
        %v2983 = vadd.f32 %v2839, %v2951
        %v2984 = vadd.f32 %v2840, %v2952
        %v2985 = vadd.f32 %v2841, %v2953
        %v2986 = vadd.f32 %v2842, %v2954
        %v2987 = vadd.f32 %v2843, %v2955
        %v2988 = vadd.f32 %v2844, %v2956
        %v2989 = vadd.f32 %v2845, %v2957
        %v2990 = vadd.f32 %v2846, %v2958
        %v2991 = vadd.f32 %v2847, %v2959
        %v2992 = vadd.f32 %v2848, %v2960
        %v2993 = vadd.f32 %v2849, %v2961
        %v2994 = vadd.f32 %v2850, %v2962
        %v2995 = vadd.f32 %v2851, %v2963
        %v2996 = vadd.f32 %v2852, %v2964
        %v2997 = vadd.f32 %v2853, %v2965
        %v2998 = vadd.f32 %v2854, %v2966
        %v2999 = vadd.f32 %v2855, %v2967
        %s3000 = sld [smem:[#allocation2 + $0x300]]
        %v3001 = vstv %s3000
        %v3002 = vmul.f32 %v3001, %v1864
        %v3003 = vmul.f32 %v3001, %v1790
        %v3004 = vmul.f32 %v3001, %v1865
        %v3005 = vmul.f32 %v3001, %v1793
        %v3006 = vmul.f32 %v3001, %v1866
        %v3007 = vmul.f32 %v3001, %v1796
        %v3008 = vmul.f32 %v3001, %v1867
        %v3009 = vmul.f32 %v3001, %v1799
        %v3010 = vmul.f32 %v3001, %v1868
        %v3011 = vmul.f32 %v3001, %v1802
        %v3012 = vmul.f32 %v3001, %v1869
        %v3013 = vmul.f32 %v3001, %v1805
        %v3014 = vmul.f32 %v3001, %v1870
        %v3015 = vmul.f32 %v3001, %v1808
        %v3016 = vmul.f32 %v3001, %v1871
        %v3017 = vmul.f32 %v3001, %v1811
        %v3018 = vmul.f32 %v3001, %v1872
        %v3019 = vmul.f32 %v3001, %v1814
        %v3020 = vmul.f32 %v3001, %v1873
        %v3021 = vmul.f32 %v3001, %v1817
        %v3022 = vmul.f32 %v3001, %v1874
        %v3023 = vmul.f32 %v3001, %v1820
        %v3024 = vmul.f32 %v3001, %v1875
        %v3025 = vmul.f32 %v3001, %v1823
        %v3026 = vmul.f32 %v3001, %v1876
        %v3027 = vmul.f32 %v3001, %v1826
        %v3028 = vmul.f32 %v3001, %v1877
        %v3029 = vmul.f32 %v3001, %v1829
        %v3030 = vmul.f32 %v3001, %v2584
        %v3031 = vmul.f32 %v3001, %v2581
        %v3032 = vmul.f32 %v3001, %v1862
        %v3033 = vmul.f32 %v3001, %v1784
        %s3034 = sld [smem:[#allocation2 + $0x301]]
        %v3035 = vstv %s3034
        %v3036 = vmul.f32 %v3035, %v2018
        %v3037 = vmul.f32 %v3035, %v1947
        %v3038 = vmul.f32 %v3035, %v2019
        %v3039 = vmul.f32 %v3035, %v1950
        %v3040 = vmul.f32 %v3035, %v2020
        %v3041 = vmul.f32 %v3035, %v1953
        %v3042 = vmul.f32 %v3035, %v2021
        %v3043 = vmul.f32 %v3035, %v1956
        %v3044 = vmul.f32 %v3035, %v2022
        %v3045 = vmul.f32 %v3035, %v1959
        %v3046 = vmul.f32 %v3035, %v2023
        %v3047 = vmul.f32 %v3035, %v1962
        %v3048 = vmul.f32 %v3035, %v2024
        %v3049 = vmul.f32 %v3035, %v1965
        %v3050 = vmul.f32 %v3035, %v2025
        %v3051 = vmul.f32 %v3035, %v1968
        %v3052 = vmul.f32 %v3035, %v2026
        %v3053 = vmul.f32 %v3035, %v1971
        %v3054 = vmul.f32 %v3035, %v2027
        %v3055 = vmul.f32 %v3035, %v1974
        %v3056 = vmul.f32 %v3035, %v2028
        %v3057 = vmul.f32 %v3035, %v1977
        %v3058 = vmul.f32 %v3035, %v2029
        %v3059 = vmul.f32 %v3035, %v1980
        %v3060 = vmul.f32 %v3035, %v2030
        %v3061 = vmul.f32 %v3035, %v1983
        %v3062 = vmul.f32 %v3035, %v2031
        %v3063 = vmul.f32 %v3035, %v1986
        %v3064 = vmul.f32 %v3035, %v2626
        %v3065 = vmul.f32 %v3035, %v2623
        %v3066 = vmul.f32 %v3035, %v1862
        %v3067 = vmul.f32 %v3035, %v1784
        %v3068 = vadd.f32 %v3002, %v3036
        %v3069 = vadd.f32 %v3003, %v3037
        %v3070 = vadd.f32 %v3004, %v3038
        %v3071 = vadd.f32 %v3005, %v3039
        %v3072 = vadd.f32 %v3006, %v3040
        %v3073 = vadd.f32 %v3007, %v3041
        %v3074 = vadd.f32 %v3008, %v3042
        %v3075 = vadd.f32 %v3009, %v3043
        %v3076 = vadd.f32 %v3010, %v3044
        %v3077 = vadd.f32 %v3011, %v3045
        %v3078 = vadd.f32 %v3012, %v3046
        %v3079 = vadd.f32 %v3013, %v3047
        %v3080 = vadd.f32 %v3014, %v3048
        %v3081 = vadd.f32 %v3015, %v3049
        %v3082 = vadd.f32 %v3016, %v3050
        %v3083 = vadd.f32 %v3017, %v3051
        %v3084 = vadd.f32 %v3018, %v3052
        %v3085 = vadd.f32 %v3019, %v3053
        %v3086 = vadd.f32 %v3020, %v3054
        %v3087 = vadd.f32 %v3021, %v3055
        %v3088 = vadd.f32 %v3022, %v3056
        %v3089 = vadd.f32 %v3023, %v3057
        %v3090 = vadd.f32 %v3024, %v3058
        %v3091 = vadd.f32 %v3025, %v3059
        %v3092 = vadd.f32 %v3026, %v3060
        %v3093 = vadd.f32 %v3027, %v3061
        %v3094 = vadd.f32 %v3028, %v3062
        %v3095 = vadd.f32 %v3029, %v3063
        %v3096 = vadd.f32 %v3030, %v3064
        %v3097 = vadd.f32 %v3031, %v3065
        %v3098 = vadd.f32 %v3032, %v3066
        %v3099 = vadd.f32 %v3033, %v3067
        %v3100 = vadd.f32 %v2968, %v3068
        %v3101 = vadd.f32 %v2969, %v3069
        %v3102 = vadd.f32 %v2970, %v3070
        %v3103 = vadd.f32 %v2971, %v3071
        %v3104 = vadd.f32 %v2972, %v3072
        %v3105 = vadd.f32 %v2973, %v3073
        %v3106 = vadd.f32 %v2974, %v3074
        %v3107 = vadd.f32 %v2975, %v3075
        %v3108 = vadd.f32 %v2976, %v3076
        %v3109 = vadd.f32 %v2977, %v3077
        %v3110 = vadd.f32 %v2978, %v3078
        %v3111 = vadd.f32 %v2979, %v3079
        %v3112 = vadd.f32 %v2980, %v3080
        %v3113 = vadd.f32 %v2981, %v3081
        %v3114 = vadd.f32 %v2982, %v3082
        %v3115 = vadd.f32 %v2983, %v3083
        %v3116 = vadd.f32 %v2984, %v3084
        %v3117 = vadd.f32 %v2985, %v3085
        %v3118 = vadd.f32 %v2986, %v3086
        %v3119 = vadd.f32 %v2987, %v3087
        %v3120 = vadd.f32 %v2988, %v3088
        %v3121 = vadd.f32 %v2989, %v3089
        %v3122 = vadd.f32 %v2990, %v3090
        %v3123 = vadd.f32 %v2991, %v3091
        %v3124 = vadd.f32 %v2992, %v3092
        %v3125 = vadd.f32 %v2993, %v3093
        %v3126 = vadd.f32 %v2994, %v3094
        %v3127 = vadd.f32 %v2995, %v3095
        %v3128 = vadd.f32 %v2996, %v3096
        %v3129 = vadd.f32 %v2997, %v3097
        %v3130 = vadd.f32 %v2998, %v3098
        %v3131 = vadd.f32 %v2999, %v3099
        %s3132 = sld [smem:[#allocation2 + $0x380]]
        %v3133 = vstv %s3132
        %v3134 = vmul.f32 %v3133, %v1624
        %v3135 = vmul.f32 %v3133, %v1625
        %v3136 = vmul.f32 %v3133, %v1626
        %v3137 = vmul.f32 %v3133, %v1627
        %v3138 = vmul.f32 %v3133, %v1628
        %v3139 = vmul.f32 %v3133, %v1629
        %v3140 = vmul.f32 %v3133, %v1630
        %v3141 = vmul.f32 %v3133, %v1631
        %v3142 = vmul.f32 %v3133, %v1632
        %v3143 = vmul.f32 %v3133, %v1633
        %v3144 = vmul.f32 %v3133, %v1634
        %v3145 = vmul.f32 %v3133, %v1635
        %v3146 = vmul.f32 %v3133, %v1636
        %v3147 = vmul.f32 %v3133, %v1637
        %v3148 = vmul.f32 %v3133, %v1638
        %v3149 = vmul.f32 %v3133, %v1639
        %v3150 = vmul.f32 %v3133, %v1640
        %v3151 = vmul.f32 %v3133, %v1641
        %v3152 = vmul.f32 %v3133, %v1642
        %v3153 = vmul.f32 %v3133, %v1643
        %v3154 = vmul.f32 %v3133, %v1644
        %v3155 = vmul.f32 %v3133, %v1645
        %v3156 = vmul.f32 %v3133, %v1646
        %v3157 = vmul.f32 %v3133, %v1647
        %v3158 = vmul.f32 %v3133, %v1648
        %v3159 = vmul.f32 %v3133, %v1649
        %v3160 = vmul.f32 %v3133, %v1650
        %v3161 = vmul.f32 %v3133, %v1651
        %v3162 = vmul.f32 %v3133, %v1652
        %v3163 = vmul.f32 %v3133, %v1653
        %v3164 = vmul.f32 %v3133, 0.0
        %s3165 = sld [smem:[#allocation2 + $0x381]]
        %v3166 = vstv %s3165
        %v3167 = vmul.f32 %v3166, %v1662
        %v3168 = vmul.f32 %v3166, %v1665
        %v3169 = vmul.f32 %v3166, %v1668
        %v3170 = vmul.f32 %v3166, %v1671
        %v3171 = vmul.f32 %v3166, %v1674
        %v3172 = vmul.f32 %v3166, %v1677
        %v3173 = vmul.f32 %v3166, %v1680
        %v3174 = vmul.f32 %v3166, %v1683
        %v3175 = vmul.f32 %v3166, %v1686
        %v3176 = vmul.f32 %v3166, %v1689
        %v3177 = vmul.f32 %v3166, %v1692
        %v3178 = vmul.f32 %v3166, %v1695
        %v3179 = vmul.f32 %v3166, %v1698
        %v3180 = vmul.f32 %v3166, %v1701
        %v3181 = vmul.f32 %v3166, %v1704
        %v3182 = vmul.f32 %v3166, %v1707
        %v3183 = vmul.f32 %v3166, %v1710
        %v3184 = vmul.f32 %v3166, %v1713
        %v3185 = vmul.f32 %v3166, %v1716
        %v3186 = vmul.f32 %v3166, %v1719
        %v3187 = vmul.f32 %v3166, %v1722
        %v3188 = vmul.f32 %v3166, %v1725
        %v3189 = vmul.f32 %v3166, %v1728
        %v3190 = vmul.f32 %v3166, %v1731
        %v3191 = vmul.f32 %v3166, %v1734
        %v3192 = vmul.f32 %v3166, %v1737
        %v3193 = vmul.f32 %v3166, %v1740
        %v3194 = vmul.f32 %v3166, %v1743
        %v3195 = vmul.f32 %v3166, %v1746
        %v3196 = vmul.f32 %v3166, %v1749
        %v3197 = vmul.f32 %v3166, 0.0
        %v3198 = vadd.f32 %v3134, %v3167
        %v3199 = vadd.f32 %v3135, %v3168
        %v3200 = vadd.f32 %v3136, %v3169
        %v3201 = vadd.f32 %v3137, %v3170
        %v3202 = vadd.f32 %v3138, %v3171
        %v3203 = vadd.f32 %v3139, %v3172
        %v3204 = vadd.f32 %v3140, %v3173
        %v3205 = vadd.f32 %v3141, %v3174
        %v3206 = vadd.f32 %v3142, %v3175
        %v3207 = vadd.f32 %v3143, %v3176
        %v3208 = vadd.f32 %v3144, %v3177
        %v3209 = vadd.f32 %v3145, %v3178
        %v3210 = vadd.f32 %v3146, %v3179
        %v3211 = vadd.f32 %v3147, %v3180
        %v3212 = vadd.f32 %v3148, %v3181
        %v3213 = vadd.f32 %v3149, %v3182
        %v3214 = vadd.f32 %v3150, %v3183
        %v3215 = vadd.f32 %v3151, %v3184
        %v3216 = vadd.f32 %v3152, %v3185
        %v3217 = vadd.f32 %v3153, %v3186
        %v3218 = vadd.f32 %v3154, %v3187
        %v3219 = vadd.f32 %v3155, %v3188
        %v3220 = vadd.f32 %v3156, %v3189
        %v3221 = vadd.f32 %v3157, %v3190
        %v3222 = vadd.f32 %v3158, %v3191
        %v3223 = vadd.f32 %v3159, %v3192
        %v3224 = vadd.f32 %v3160, %v3193
        %v3225 = vadd.f32 %v3161, %v3194
        %v3226 = vadd.f32 %v3162, %v3195
        %v3227 = vadd.f32 %v3163, %v3196
        %v3228 = vadd.f32 %v3164, %v3197
        %v3229 = vadd.f32 %v3100, %v3198
        %v3230 = vadd.f32 %v3101, %v3199
        %v3231 = vadd.f32 %v3102, %v3200
        %v3232 = vadd.f32 %v3103, %v3201
        %v3233 = vadd.f32 %v3104, %v3202
        %v3234 = vadd.f32 %v3105, %v3203
        %v3235 = vadd.f32 %v3106, %v3204
        %v3236 = vadd.f32 %v3107, %v3205
        %v3237 = vadd.f32 %v3108, %v3206
        %v3238 = vadd.f32 %v3109, %v3207
        %v3239 = vadd.f32 %v3110, %v3208
        %v3240 = vadd.f32 %v3111, %v3209
        %v3241 = vadd.f32 %v3112, %v3210
        %v3242 = vadd.f32 %v3113, %v3211
        %v3243 = vadd.f32 %v3114, %v3212
        %v3244 = vadd.f32 %v3115, %v3213
        %v3245 = vadd.f32 %v3116, %v3214
        %v3246 = vadd.f32 %v3117, %v3215
        %v3247 = vadd.f32 %v3118, %v3216
        %v3248 = vadd.f32 %v3119, %v3217
        %v3249 = vadd.f32 %v3120, %v3218
        %v3250 = vadd.f32 %v3121, %v3219
        %v3251 = vadd.f32 %v3122, %v3220
        %v3252 = vadd.f32 %v3123, %v3221
        %v3253 = vadd.f32 %v3124, %v3222
        %v3254 = vadd.f32 %v3125, %v3223
        %v3255 = vadd.f32 %v3126, %v3224
        %v3256 = vadd.f32 %v3127, %v3225
        %v3257 = vadd.f32 %v3128, %v3226
        %v3258 = vadd.f32 %v3129, %v3227
        %v3259 = vadd.f32 %v3130, %v3228
        %v3260 = vadd.f32 %v3131, %v3228
        %s3261 = sld [smem:[#allocation2 + $0x400]]
        %v3262 = vstv %s3261
        %v3263 = vmul.f32 %v3262, %v2267
        %v3264 = vmul.f32 %v3262, %v2341
        %v3265 = vmul.f32 %v3262, %v2270
        %v3266 = vmul.f32 %v3262, %v2342
        %v3267 = vmul.f32 %v3262, %v2273
        %v3268 = vmul.f32 %v3262, %v2343
        %v3269 = vmul.f32 %v3262, %v2276
        %v3270 = vmul.f32 %v3262, %v2344
        %v3271 = vmul.f32 %v3262, %v2279
        %v3272 = vmul.f32 %v3262, %v2345
        %v3273 = vmul.f32 %v3262, %v2282
        %v3274 = vmul.f32 %v3262, %v2346
        %v3275 = vmul.f32 %v3262, %v2285
        %v3276 = vmul.f32 %v3262, %v2347
        %v3277 = vmul.f32 %v3262, %v2288
        %v3278 = vmul.f32 %v3262, %v2348
        %v3279 = vmul.f32 %v3262, %v2291
        %v3280 = vmul.f32 %v3262, %v2349
        %v3281 = vmul.f32 %v3262, %v2294
        %v3282 = vmul.f32 %v3262, %v2350
        %v3283 = vmul.f32 %v3262, %v2297
        %v3284 = vmul.f32 %v3262, %v2351
        %v3285 = vmul.f32 %v3262, %v2300
        %v3286 = vmul.f32 %v3262, %v2352
        %v3287 = vmul.f32 %v3262, %v2303
        %v3288 = vmul.f32 %v3262, %v2353
        %v3289 = vmul.f32 %v3262, %v2306
        %v3290 = vmul.f32 %v3262, %v2354
        %v3291 = vmul.f32 %v3262, %v2859
        %v3292 = vmul.f32 %v3262, %v2862
        %v3293 = vmul.f32 %v3262, %v2261
        %v3294 = vmul.f32 %v3262, %v2339
        %s3295 = sld [smem:[#allocation2 + $0x401]]
        %v3296 = vstv %s3295
        %v3297 = vmul.f32 %v3296, %v2394
        %v3298 = vmul.f32 %v3296, %v2465
        %v3299 = vmul.f32 %v3296, %v2397
        %v3300 = vmul.f32 %v3296, %v2466
        %v3301 = vmul.f32 %v3296, %v2400
        %v3302 = vmul.f32 %v3296, %v2467
        %v3303 = vmul.f32 %v3296, %v2403
        %v3304 = vmul.f32 %v3296, %v2468
        %v3305 = vmul.f32 %v3296, %v2406
        %v3306 = vmul.f32 %v3296, %v2469
        %v3307 = vmul.f32 %v3296, %v2409
        %v3308 = vmul.f32 %v3296, %v2470
        %v3309 = vmul.f32 %v3296, %v2412
        %v3310 = vmul.f32 %v3296, %v2471
        %v3311 = vmul.f32 %v3296, %v2415
        %v3312 = vmul.f32 %v3296, %v2472
        %v3313 = vmul.f32 %v3296, %v2418
        %v3314 = vmul.f32 %v3296, %v2473
        %v3315 = vmul.f32 %v3296, %v2421
        %v3316 = vmul.f32 %v3296, %v2474
        %v3317 = vmul.f32 %v3296, %v2424
        %v3318 = vmul.f32 %v3296, %v2475
        %v3319 = vmul.f32 %v3296, %v2427
        %v3320 = vmul.f32 %v3296, %v2476
        %v3321 = vmul.f32 %v3296, %v2430
        %v3322 = vmul.f32 %v3296, %v2477
        %v3323 = vmul.f32 %v3296, %v2433
        %v3324 = vmul.f32 %v3296, %v2478
        %v3325 = vmul.f32 %v3296, %v2899
        %v3326 = vmul.f32 %v3296, %v2902
        %v3327 = vmul.f32 %v3296, %v2261
        %v3328 = vmul.f32 %v3296, %v2339
        %v3329 = vadd.f32 %v3263, %v3297
        %v3330 = vadd.f32 %v3264, %v3298
        %v3331 = vadd.f32 %v3265, %v3299
        %v3332 = vadd.f32 %v3266, %v3300
        %v3333 = vadd.f32 %v3267, %v3301
        %v3334 = vadd.f32 %v3268, %v3302
        %v3335 = vadd.f32 %v3269, %v3303
        %v3336 = vadd.f32 %v3270, %v3304
        %v3337 = vadd.f32 %v3271, %v3305
        %v3338 = vadd.f32 %v3272, %v3306
        %v3339 = vadd.f32 %v3273, %v3307
        %v3340 = vadd.f32 %v3274, %v3308
        %v3341 = vadd.f32 %v3275, %v3309
        %v3342 = vadd.f32 %v3276, %v3310
        %v3343 = vadd.f32 %v3277, %v3311
        %v3344 = vadd.f32 %v3278, %v3312
        %v3345 = vadd.f32 %v3279, %v3313
        %v3346 = vadd.f32 %v3280, %v3314
        %v3347 = vadd.f32 %v3281, %v3315
        %v3348 = vadd.f32 %v3282, %v3316
        %v3349 = vadd.f32 %v3283, %v3317
        %v3350 = vadd.f32 %v3284, %v3318
        %v3351 = vadd.f32 %v3285, %v3319
        %v3352 = vadd.f32 %v3286, %v3320
        %v3353 = vadd.f32 %v3287, %v3321
        %v3354 = vadd.f32 %v3288, %v3322
        %v3355 = vadd.f32 %v3289, %v3323
        %v3356 = vadd.f32 %v3290, %v3324
        %v3357 = vadd.f32 %v3291, %v3325
        %v3358 = vadd.f32 %v3292, %v3326
        %v3359 = vadd.f32 %v3293, %v3327
        %v3360 = vadd.f32 %v3294, %v3328
        %v3361 = vadd.f32 %v3229, %v3329
        %v3362 = vadd.f32 %v3230, %v3330
        %v3363 = vadd.f32 %v3231, %v3331
        %v3364 = vadd.f32 %v3232, %v3332
        %v3365 = vadd.f32 %v3233, %v3333
        %v3366 = vadd.f32 %v3234, %v3334
        %v3367 = vadd.f32 %v3235, %v3335
        %v3368 = vadd.f32 %v3236, %v3336
        %v3369 = vadd.f32 %v3237, %v3337
        %v3370 = vadd.f32 %v3238, %v3338
        %v3371 = vadd.f32 %v3239, %v3339
        %v3372 = vadd.f32 %v3240, %v3340
        %v3373 = vadd.f32 %v3241, %v3341
        %v3374 = vadd.f32 %v3242, %v3342
        %v3375 = vadd.f32 %v3243, %v3343
        %v3376 = vadd.f32 %v3244, %v3344
        %v3377 = vadd.f32 %v3245, %v3345
        %v3378 = vadd.f32 %v3246, %v3346
        %v3379 = vadd.f32 %v3247, %v3347
        %v3380 = vadd.f32 %v3248, %v3348
        %v3381 = vadd.f32 %v3249, %v3349
        %v3382 = vadd.f32 %v3250, %v3350
        %v3383 = vadd.f32 %v3251, %v3351
        %v3384 = vadd.f32 %v3252, %v3352
        %v3385 = vadd.f32 %v3253, %v3353
        %v3386 = vadd.f32 %v3254, %v3354
        %v3387 = vadd.f32 %v3255, %v3355
        %v3388 = vadd.f32 %v3256, %v3356
        %v3389 = vadd.f32 %v3257, %v3357
        %v3390 = vadd.f32 %v3258, %v3358
        %v3391 = vadd.f32 %v3259, %v3359
        %v3392 = vadd.f32 %v3260, %v3360
        %v3393 = vsub.f32 0.0, %v3361
        %v3394 = vsub.f32 0.0, %v3362
        %v3395 = vsub.f32 0.0, %v3363
        %v3396 = vsub.f32 0.0, %v3364
        %v3397 = vsub.f32 0.0, %v3365
        %v3398 = vsub.f32 0.0, %v3366
        %v3399 = vsub.f32 0.0, %v3367
        %v3400 = vsub.f32 0.0, %v3368
        %v3401 = vsub.f32 0.0, %v3369
        %v3402 = vsub.f32 0.0, %v3370
        %v3403 = vsub.f32 0.0, %v3371
        %v3404 = vsub.f32 0.0, %v3372
        %v3405 = vsub.f32 0.0, %v3373
        %v3406 = vsub.f32 0.0, %v3374
        %v3407 = vsub.f32 0.0, %v3375
        %v3408 = vsub.f32 0.0, %v3376
        %v3409 = vsub.f32 0.0, %v3377
        %v3410 = vsub.f32 0.0, %v3378
        %v3411 = vsub.f32 0.0, %v3379
        %v3412 = vsub.f32 0.0, %v3380
        %v3413 = vsub.f32 0.0, %v3381
        %v3414 = vsub.f32 0.0, %v3382
        %v3415 = vsub.f32 0.0, %v3383
        %v3416 = vsub.f32 0.0, %v3384
        %v3417 = vsub.f32 0.0, %v3385
        %v3418 = vsub.f32 0.0, %v3386
        %v3419 = vsub.f32 0.0, %v3387
        %v3420 = vsub.f32 0.0, %v3388
        %v3421 = vsub.f32 0.0, %v3389
        %v3422 = vsub.f32 0.0, %v3390
        %v3423 = vsub.f32 0.0, %v3391
        %v3424 = vsub.f32 0.0, %v3392
        %v3425 = vmul.f32 %v3393, 1.442695
        %v3426 = vpow.pop %v3425
        %v3427 = vmul.f32 %v3394, 1.442695
        %v3428 = vpow.pop %v3427
        %v3429 = vmul.f32 %v3395, 1.442695
        %v3430 = vpow.pop %v3429
        %v3431 = vmul.f32 %v3396, 1.442695
        %v3432 = vpow.pop %v3431
        %v3433 = vmul.f32 %v3397, 1.442695
        %v3434 = vpow.pop %v3433
        %v3435 = vmul.f32 %v3398, 1.442695
        %v3436 = vpow.pop %v3435
        %v3437 = vmul.f32 %v3399, 1.442695
        %v3438 = vpow.pop %v3437
        %v3439 = vmul.f32 %v3400, 1.442695
        %v3440 = vpow.pop %v3439
        %v3441 = vmul.f32 %v3401, 1.442695
        %v3442 = vpow.pop %v3441
        %v3443 = vmul.f32 %v3402, 1.442695
        %v3444 = vpow.pop %v3443
        %v3445 = vmul.f32 %v3403, 1.442695
        %v3446 = vpow.pop %v3445
        %v3447 = vmul.f32 %v3404, 1.442695
        %v3448 = vpow.pop %v3447
        %v3449 = vmul.f32 %v3405, 1.442695
        %v3450 = vpow.pop %v3449
        %v3451 = vmul.f32 %v3406, 1.442695
        %v3452 = vpow.pop %v3451
        %v3453 = vmul.f32 %v3407, 1.442695
        %v3454 = vpow.pop %v3453
        %v3455 = vmul.f32 %v3408, 1.442695
        %v3456 = vpow.pop %v3455
        %v3457 = vmul.f32 %v3409, 1.442695
        %v3458 = vpow.pop %v3457
        %v3459 = vmul.f32 %v3410, 1.442695
        %v3460 = vpow.pop %v3459
        %v3461 = vmul.f32 %v3411, 1.442695
        %v3462 = vpow.pop %v3461
        %v3463 = vmul.f32 %v3412, 1.442695
        %v3464 = vpow.pop %v3463
        %v3465 = vmul.f32 %v3413, 1.442695
        %v3466 = vpow.pop %v3465
        %v3467 = vmul.f32 %v3414, 1.442695
        %v3468 = vpow.pop %v3467
        %v3469 = vmul.f32 %v3415, 1.442695
        %v3470 = vpow.pop %v3469
        %v3471 = vmul.f32 %v3416, 1.442695
        %v3472 = vpow.pop %v3471
        %v3473 = vmul.f32 %v3417, 1.442695
        %v3474 = vpow.pop %v3473
        %v3475 = vmul.f32 %v3418, 1.442695
        %v3476 = vpow.pop %v3475
        %v3477 = vmul.f32 %v3419, 1.442695
        %v3478 = vpow.pop %v3477
        %v3479 = vmul.f32 %v3420, 1.442695
        %v3480 = vpow.pop %v3479
        %v3481 = vmul.f32 %v3421, 1.442695
        %v3482 = vpow.pop %v3481
        %v3483 = vmul.f32 %v3422, 1.442695
        %v3484 = vpow.pop %v3483
        %v3485 = vmul.f32 %v3423, 1.442695
        %v3486 = vpow.pop %v3485
        %v3487 = vmul.f32 %v3424, 1.442695
        %v3488 = vpow.pop %v3487
        %v3489 = vadd.f32 %v3426, 1.0
        %v3490 = vadd.f32 %v3428, 1.0
        %v3491 = vadd.f32 %v3430, 1.0
        %v3492 = vadd.f32 %v3432, 1.0
        %v3493 = vadd.f32 %v3434, 1.0
        %v3494 = vadd.f32 %v3436, 1.0
        %v3495 = vadd.f32 %v3438, 1.0
        %v3496 = vadd.f32 %v3440, 1.0
        %v3497 = vadd.f32 %v3442, 1.0
        %v3498 = vadd.f32 %v3444, 1.0
        %v3499 = vadd.f32 %v3446, 1.0
        %v3500 = vadd.f32 %v3448, 1.0
        %v3501 = vadd.f32 %v3450, 1.0
        %v3502 = vadd.f32 %v3452, 1.0
        %v3503 = vadd.f32 %v3454, 1.0
        %v3504 = vadd.f32 %v3456, 1.0
        %v3505 = vadd.f32 %v3458, 1.0
        %v3506 = vadd.f32 %v3460, 1.0
        %v3507 = vadd.f32 %v3462, 1.0
        %v3508 = vadd.f32 %v3464, 1.0
        %v3509 = vadd.f32 %v3466, 1.0
        %v3510 = vadd.f32 %v3468, 1.0
        %v3511 = vadd.f32 %v3470, 1.0
        %v3512 = vadd.f32 %v3472, 1.0
        %v3513 = vadd.f32 %v3474, 1.0
        %v3514 = vadd.f32 %v3476, 1.0
        %v3515 = vadd.f32 %v3478, 1.0
        %v3516 = vadd.f32 %v3480, 1.0
        %v3517 = vadd.f32 %v3482, 1.0
        %v3518 = vadd.f32 %v3484, 1.0
        %v3519 = vadd.f32 %v3486, 1.0
        %v3520 = vadd.f32 %v3488, 1.0
        %v3521 = vrcp.pop %v3489
        %v3522 = vmul.f32 1.0, %v3521
        %v3523 = vrcp.pop %v3490
        %v3524 = vmul.f32 1.0, %v3523
        %v3525 = vrcp.pop %v3491
        %v3526 = vmul.f32 1.0, %v3525
        %v3527 = vrcp.pop %v3492
        %v3528 = vmul.f32 1.0, %v3527
        %v3529 = vrcp.pop %v3493
        %v3530 = vmul.f32 1.0, %v3529
        %v3531 = vrcp.pop %v3494
        %v3532 = vmul.f32 1.0, %v3531
        %v3533 = vrcp.pop %v3495
        %v3534 = vmul.f32 1.0, %v3533
        %v3535 = vrcp.pop %v3496
        %v3536 = vmul.f32 1.0, %v3535
        %v3537 = vrcp.pop %v3497
        %v3538 = vmul.f32 1.0, %v3537
        %v3539 = vrcp.pop %v3498
        %v3540 = vmul.f32 1.0, %v3539
        %v3541 = vrcp.pop %v3499
        %v3542 = vmul.f32 1.0, %v3541
        %v3543 = vrcp.pop %v3500
        %v3544 = vmul.f32 1.0, %v3543
        %v3545 = vrcp.pop %v3501
        %v3546 = vmul.f32 1.0, %v3545
        %v3547 = vrcp.pop %v3502
        %v3548 = vmul.f32 1.0, %v3547
        %v3549 = vrcp.pop %v3503
        %v3550 = vmul.f32 1.0, %v3549
        %v3551 = vrcp.pop %v3504
        %v3552 = vmul.f32 1.0, %v3551
        %v3553 = vrcp.pop %v3505
        %v3554 = vmul.f32 1.0, %v3553
        %v3555 = vrcp.pop %v3506
        %v3556 = vmul.f32 1.0, %v3555
        %v3557 = vrcp.pop %v3507
        %v3558 = vmul.f32 1.0, %v3557
        %v3559 = vrcp.pop %v3508
        %v3560 = vmul.f32 1.0, %v3559
        %v3561 = vrcp.pop %v3509
        %v3562 = vmul.f32 1.0, %v3561
        %v3563 = vrcp.pop %v3510
        %v3564 = vmul.f32 1.0, %v3563
        %v3565 = vrcp.pop %v3511
        %v3566 = vmul.f32 1.0, %v3565
        %v3567 = vrcp.pop %v3512
        %v3568 = vmul.f32 1.0, %v3567
        %v3569 = vrcp.pop %v3513
        %v3570 = vmul.f32 1.0, %v3569
        %v3571 = vrcp.pop %v3514
        %v3572 = vmul.f32 1.0, %v3571
        %v3573 = vrcp.pop %v3515
        %v3574 = vmul.f32 1.0, %v3573
        %v3575 = vrcp.pop %v3516
        %v3576 = vmul.f32 1.0, %v3575
        %v3577 = vrcp.pop %v3517
        %v3578 = vmul.f32 1.0, %v3577
        %v3579 = vrcp.pop %v3518
        %v3580 = vmul.f32 1.0, %v3579
        %v3581 = vrcp.pop %v3519
        %v3582 = vmul.f32 1.0, %v3581
        %v3583 = vrcp.pop %v3520
        %v3584 = vmul.f32 1.0, %v3583
        %3586 = vset.pattern.permute.xlu0 0
        %3587 = vperm.xlu0 %3586, %v3522
        %v3588 = vpop.permute.xlu0 %3587
        %3591 = vset.pattern.permute.xlu0 0
        %3592 = vperm.xlu0 %3591, %v3524
        %v3593 = vpop.permute.xlu0 %3592
        %3596 = vset.pattern.permute.xlu0 0
        %3597 = vperm.xlu0 %3596, %v3526
        %v3598 = vpop.permute.xlu0 %3597
        %3601 = vset.pattern.permute.xlu0 0
        %3602 = vperm.xlu0 %3601, %v3528
        %v3603 = vpop.permute.xlu0 %3602
        %3606 = vset.pattern.permute.xlu0 0
        %3607 = vperm.xlu0 %3606, %v3530
        %v3608 = vpop.permute.xlu0 %3607
        %3611 = vset.pattern.permute.xlu0 0
        %3612 = vperm.xlu0 %3611, %v3532
        %v3613 = vpop.permute.xlu0 %3612
        %3616 = vset.pattern.permute.xlu0 0
        %3617 = vperm.xlu0 %3616, %v3534
        %v3618 = vpop.permute.xlu0 %3617
        %3621 = vset.pattern.permute.xlu0 0
        %3622 = vperm.xlu0 %3621, %v3536
        %v3623 = vpop.permute.xlu0 %3622
        %3626 = vset.pattern.permute.xlu0 0
        %3627 = vperm.xlu0 %3626, %v3538
        %v3628 = vpop.permute.xlu0 %3627
        %3631 = vset.pattern.permute.xlu0 0
        %3632 = vperm.xlu0 %3631, %v3540
        %v3633 = vpop.permute.xlu0 %3632
        %3636 = vset.pattern.permute.xlu0 0
        %3637 = vperm.xlu0 %3636, %v3542
        %v3638 = vpop.permute.xlu0 %3637
        %3641 = vset.pattern.permute.xlu0 0
        %3642 = vperm.xlu0 %3641, %v3544
        %v3643 = vpop.permute.xlu0 %3642
        %3646 = vset.pattern.permute.xlu0 0
        %3647 = vperm.xlu0 %3646, %v3546
        %v3648 = vpop.permute.xlu0 %3647
        %3651 = vset.pattern.permute.xlu0 0
        %3652 = vperm.xlu0 %3651, %v3548
        %v3653 = vpop.permute.xlu0 %3652
        %3656 = vset.pattern.permute.xlu0 0
        %3657 = vperm.xlu0 %3656, %v3550
        %v3658 = vpop.permute.xlu0 %3657
        %3661 = vset.pattern.permute.xlu0 0
        %3662 = vperm.xlu0 %3661, %v3552
        %v3663 = vpop.permute.xlu0 %3662
        %3666 = vset.pattern.permute.xlu0 0
        %3667 = vperm.xlu0 %3666, %v3554
        %v3668 = vpop.permute.xlu0 %3667
        %3671 = vset.pattern.permute.xlu0 0
        %3672 = vperm.xlu0 %3671, %v3556
        %v3673 = vpop.permute.xlu0 %3672
        %3676 = vset.pattern.permute.xlu0 0
        %3677 = vperm.xlu0 %3676, %v3558
        %v3678 = vpop.permute.xlu0 %3677
        %3681 = vset.pattern.permute.xlu0 0
        %3682 = vperm.xlu0 %3681, %v3560
        %v3683 = vpop.permute.xlu0 %3682
        %3686 = vset.pattern.permute.xlu0 0
        %3687 = vperm.xlu0 %3686, %v3562
        %v3688 = vpop.permute.xlu0 %3687
        %3691 = vset.pattern.permute.xlu0 0
        %3692 = vperm.xlu0 %3691, %v3564
        %v3693 = vpop.permute.xlu0 %3692
        %3696 = vset.pattern.permute.xlu0 0
        %3697 = vperm.xlu0 %3696, %v3566
        %v3698 = vpop.permute.xlu0 %3697
        %3701 = vset.pattern.permute.xlu0 0
        %3702 = vperm.xlu0 %3701, %v3568
        %v3703 = vpop.permute.xlu0 %3702
        %3706 = vset.pattern.permute.xlu0 0
        %3707 = vperm.xlu0 %3706, %v3570
        %v3708 = vpop.permute.xlu0 %3707
        %3711 = vset.pattern.permute.xlu0 0
        %3712 = vperm.xlu0 %3711, %v3572
        %v3713 = vpop.permute.xlu0 %3712
        %3716 = vset.pattern.permute.xlu0 0
        %3717 = vperm.xlu0 %3716, %v3574
        %v3718 = vpop.permute.xlu0 %3717
        %3721 = vset.pattern.permute.xlu0 0
        %3722 = vperm.xlu0 %3721, %v3576
        %v3723 = vpop.permute.xlu0 %3722
        %3726 = vset.pattern.permute.xlu0 0
        %3727 = vperm.xlu0 %3726, %v3578
        %v3728 = vpop.permute.xlu0 %3727
        %3731 = vset.pattern.permute.xlu0 0
        %3732 = vperm.xlu0 %3731, %v3580
        %v3733 = vpop.permute.xlu0 %3732
        %3736 = vset.pattern.permute.xlu0 0
        %3737 = vperm.xlu0 %3736, %v3582
        %v3738 = vpop.permute.xlu0 %3737
        %3741 = vset.pattern.permute.xlu0 0
        %3742 = vperm.xlu0 %3741, %v3584
        %v3743 = vpop.permute.xlu0 %3742
        %v3745 = vmul.f32 %v1492, %v3588
        %v3746 = vmul.f32 %v1493, %v3593
        %v3747 = vmul.f32 %v1494, %v3598
        %v3748 = vmul.f32 %v1495, %v3603
        %v3749 = vmul.f32 %v1496, %v3608
        %v3750 = vmul.f32 %v1497, %v3613
        %v3751 = vmul.f32 %v1498, %v3618
        %v3752 = vmul.f32 %v1499, %v3623
        %v3753 = vmul.f32 %v1500, %v3628
        %v3754 = vmul.f32 %v1501, %v3633
        %v3755 = vmul.f32 %v1502, %v3638
        %v3756 = vmul.f32 %v1503, %v3643
        %v3757 = vmul.f32 %v1504, %v3648
        %v3758 = vmul.f32 %v1505, %v3653
        %v3759 = vmul.f32 %v1506, %v3658
        %v3760 = vmul.f32 %v1507, %v3663
        %v3761 = vmul.f32 %v1508, %v3668
        %v3762 = vmul.f32 %v1509, %v3673
        %v3763 = vmul.f32 %v1510, %v3678
        %v3764 = vmul.f32 %v1511, %v3683
        %v3765 = vmul.f32 %v1512, %v3688
        %v3766 = vmul.f32 %v1513, %v3693
        %v3767 = vmul.f32 %v1514, %v3698
        %v3768 = vmul.f32 %v1515, %v3703
        %v3769 = vmul.f32 %v1516, %v3708
        %v3770 = vmul.f32 %v1517, %v3713
        %v3771 = vmul.f32 %v1518, %v3718
        %v3772 = vmul.f32 %v1519, %v3723
        %v3773 = vmul.f32 %v1520, %v3728
        %v3774 = vmul.f32 %v1521, %v3733
        %v3775 = vmul.f32 %v1522, %v3738
        %v3776 = vmul.f32 %v1523, %v3743
        %v3777 = vpack.c.bf16 %v3746, %v3745
        %v3778 = vpack.c.bf16 %v3748, %v3747
        %v3779 = vpack.c.bf16 %v3750, %v3749
        %v3780 = vpack.c.bf16 %v3752, %v3751
        %v3781 = vpack.c.bf16 %v3754, %v3753
        %v3782 = vpack.c.bf16 %v3756, %v3755
        %v3783 = vpack.c.bf16 %v3758, %v3757
        %v3784 = vpack.c.bf16 %v3760, %v3759
        %v3785 = vpack.c.bf16 %v3762, %v3761
        %v3786 = vpack.c.bf16 %v3764, %v3763
        %v3787 = vpack.c.bf16 %v3766, %v3765
        %v3788 = vpack.c.bf16 %v3768, %v3767
        %v3789 = vpack.c.bf16 %v3770, %v3769
        %v3790 = vpack.c.bf16 %v3772, %v3771
        %v3791 = vpack.c.bf16 %v3774, %v3773
        %v3792 = vpack.c.bf16 %v3776, %v3775
        %v3794 = vshrl.u32 %v3777, 16
        %v3796 = vrot.slane %v3794, 7
        %v3797 = vshll.u32 %v3777, 16
        %v3799 = vor.u32 %v3796, %v3797
        %v3801 = vshrl.u32 %v3778, 16
        %v3803 = vrot.slane %v3801, 7
        %v3804 = vshll.u32 %v3778, 16
        %v3806 = vor.u32 %v3803, %v3804
        %v3808 = vshrl.u32 %v3779, 16
        %v3810 = vrot.slane %v3808, 7
        %v3811 = vshll.u32 %v3779, 16
        %v3813 = vor.u32 %v3810, %v3811
        %v3815 = vshrl.u32 %v3780, 16
        %v3817 = vrot.slane %v3815, 7
        %v3818 = vshll.u32 %v3780, 16
        %v3820 = vor.u32 %v3817, %v3818
        %v3822 = vshrl.u32 %v3781, 16
        %v3824 = vrot.slane %v3822, 7
        %v3825 = vshll.u32 %v3781, 16
        %v3827 = vor.u32 %v3824, %v3825
        %v3829 = vshrl.u32 %v3782, 16
        %v3831 = vrot.slane %v3829, 7
        %v3832 = vshll.u32 %v3782, 16
        %v3834 = vor.u32 %v3831, %v3832
        %v3836 = vshrl.u32 %v3783, 16
        %v3838 = vrot.slane %v3836, 7
        %v3839 = vshll.u32 %v3783, 16
        %v3841 = vor.u32 %v3838, %v3839
        %v3843 = vshrl.u32 %v3784, 16
        %v3845 = vrot.slane %v3843, 7
        %v3846 = vshll.u32 %v3784, 16
        %v3848 = vor.u32 %v3845, %v3846
        %v3850 = vshrl.u32 %v3785, 16
        %v3852 = vrot.slane %v3850, 7
        %v3853 = vshll.u32 %v3785, 16
        %v3855 = vor.u32 %v3852, %v3853
        %v3857 = vshrl.u32 %v3786, 16
        %v3859 = vrot.slane %v3857, 7
        %v3860 = vshll.u32 %v3786, 16
        %v3862 = vor.u32 %v3859, %v3860
        %v3864 = vshrl.u32 %v3787, 16
        %v3866 = vrot.slane %v3864, 7
        %v3867 = vshll.u32 %v3787, 16
        %v3869 = vor.u32 %v3866, %v3867
        %v3871 = vshrl.u32 %v3788, 16
        %v3873 = vrot.slane %v3871, 7
        %v3874 = vshll.u32 %v3788, 16
        %v3876 = vor.u32 %v3873, %v3874
        %v3878 = vshrl.u32 %v3789, 16
        %v3880 = vrot.slane %v3878, 7
        %v3881 = vshll.u32 %v3789, 16
        %v3883 = vor.u32 %v3880, %v3881
        %v3885 = vshrl.u32 %v3790, 16
        %v3887 = vrot.slane %v3885, 7
        %v3888 = vshll.u32 %v3790, 16
        %v3890 = vor.u32 %v3887, %v3888
        %v3892 = vshrl.u32 %v3791, 16
        %v3894 = vrot.slane %v3892, 7
        %v3895 = vshll.u32 %v3791, 16
        %v3897 = vor.u32 %v3894, %v3895
        %v3913 = vsel %vm506, 0, %v3799
        %v3914 = vsel %vm506, 0, %v3806
        %v3915 = vsel %vm506, 0, %v3813
        %v3916 = vsel %vm506, 0, %v3820
        %v3917 = vsel %vm506, 0, %v3827
        %v3918 = vsel %vm506, 0, %v3834
        %v3919 = vsel %vm506, 0, %v3841
        %v3920 = vsel %vm506, 0, %v3848
        %v3921 = vsel %vm506, 0, %v3855
        %v3922 = vsel %vm506, 0, %v3862
        %v3923 = vsel %vm506, 0, %v3869
        %v3924 = vsel %vm506, 0, %v3876
        %v3925 = vsel %vm506, 0, %v3883
        %v3926 = vsel %vm506, 0, %v3890
        %v3927 = vsel %vm506, 0, %v3897
        %v3928 = vrot.slane %v3797, 1
        %v3929 = vor.u32 %v3794, %v3928
        %v3930 = vrot.slane %v3804, 1
        %v3931 = vor.u32 %v3801, %v3930
        %v3932 = vrot.slane %v3811, 1
        %v3933 = vor.u32 %v3808, %v3932
        %v3934 = vrot.slane %v3818, 1
        %v3935 = vor.u32 %v3815, %v3934
        %v3936 = vrot.slane %v3825, 1
        %v3937 = vor.u32 %v3822, %v3936
        %v3938 = vrot.slane %v3832, 1
        %v3939 = vor.u32 %v3829, %v3938
        %v3940 = vrot.slane %v3839, 1
        %v3941 = vor.u32 %v3836, %v3940
        %v3942 = vrot.slane %v3846, 1
        %v3943 = vor.u32 %v3843, %v3942
        %v3944 = vrot.slane %v3853, 1
        %v3945 = vor.u32 %v3850, %v3944
        %v3946 = vrot.slane %v3860, 1
        %v3947 = vor.u32 %v3857, %v3946
        %v3948 = vrot.slane %v3867, 1
        %v3949 = vor.u32 %v3864, %v3948
        %v3950 = vrot.slane %v3874, 1
        %v3951 = vor.u32 %v3871, %v3950
        %v3952 = vrot.slane %v3881, 1
        %v3953 = vor.u32 %v3878, %v3952
        %v3954 = vrot.slane %v3888, 1
        %v3955 = vor.u32 %v3885, %v3954
        %v3956 = vrot.slane %v3895, 1
        %v3957 = vor.u32 %v3892, %v3956
        %v3973 = vsel %vm573, %v3929, 0
        %v3974 = vsel %vm573, %v3931, 0
        %v3975 = vsel %vm573, %v3933, 0
        %v3976 = vsel %vm573, %v3935, 0
        %v3977 = vsel %vm573, %v3937, 0
        %v3978 = vsel %vm573, %v3939, 0
        %v3979 = vsel %vm573, %v3941, 0
        %v3980 = vsel %vm573, %v3943, 0
        %v3981 = vsel %vm573, %v3945, 0
        %v3982 = vsel %vm573, %v3947, 0
        %v3983 = vsel %vm573, %v3949, 0
        %v3984 = vsel %vm573, %v3951, 0
        %v3985 = vsel %vm573, %v3953, 0
        %v3986 = vsel %vm573, %v3955, 0
        %v3987 = vsel %vm573, %v3957, 0
        %v3989 = vshrl.u32 %v3792, 16
        %v3991 = vrot.slane %v3989, 7
        %v3992 = vshll.u32 %v3792, 16
        %v3994 = vor.u32 %v3991, %v3992
        %v3996 = vsel %vm506, 0, %v3994
        %v3997 = vrot.slane %v3992, 1
        %v3998 = vor.u32 %v3989, %v3997
        %v4000 = vsel %vm573, %v3998, 0
        %4016 = vrot.lane.b32.xlu0 0, 16
        %v4017 = vpop.permute.xlu0 %4016
        %4018 = vrot.lane.b32.xlu0 %v3777, 16
        %v4019 = vpop.permute.xlu0 %4018
        %4020 = vrot.lane.b32.xlu0 %v3778, 16
        %v4021 = vpop.permute.xlu0 %4020
        %4022 = vrot.lane.b32.xlu0 %v3779, 16
        %v4023 = vpop.permute.xlu0 %4022
        %4024 = vrot.lane.b32.xlu0 %v3780, 16
        %v4025 = vpop.permute.xlu0 %4024
        %4026 = vrot.lane.b32.xlu0 %v3781, 16
        %v4027 = vpop.permute.xlu0 %4026
        %4028 = vrot.lane.b32.xlu0 %v3782, 16
        %v4029 = vpop.permute.xlu0 %4028
        %4030 = vrot.lane.b32.xlu0 %v3783, 16
        %v4031 = vpop.permute.xlu0 %4030
        %4032 = vrot.lane.b32.xlu0 %v3784, 16
        %v4033 = vpop.permute.xlu0 %4032
        %4034 = vrot.lane.b32.xlu0 %v3785, 16
        %v4035 = vpop.permute.xlu0 %4034
        %4036 = vrot.lane.b32.xlu0 %v3786, 16
        %v4037 = vpop.permute.xlu0 %4036
        %4038 = vrot.lane.b32.xlu0 %v3787, 16
        %v4039 = vpop.permute.xlu0 %4038
        %4040 = vrot.lane.b32.xlu0 %v3788, 16
        %v4041 = vpop.permute.xlu0 %4040
        %4042 = vrot.lane.b32.xlu0 %v3789, 16
        %v4043 = vpop.permute.xlu0 %4042
        %4044 = vrot.lane.b32.xlu0 %v3790, 16
        %v4045 = vpop.permute.xlu0 %4044
        %4046 = vrot.lane.b32.xlu0 %v3791, 16
        %v4047 = vpop.permute.xlu0 %4046
        %4063 = vrot.lane.b32.xlu0 %v574, 32
        %v4064 = vpop.permute.xlu0 %4063
        %4065 = vrot.lane.b32.xlu0 %v3973, 32
        %v4066 = vpop.permute.xlu0 %4065
        %4067 = vrot.lane.b32.xlu0 %v3974, 32
        %v4068 = vpop.permute.xlu0 %4067
        %4069 = vrot.lane.b32.xlu0 %v3975, 32
        %v4070 = vpop.permute.xlu0 %4069
        %4071 = vrot.lane.b32.xlu0 %v3976, 32
        %v4072 = vpop.permute.xlu0 %4071
        %4073 = vrot.lane.b32.xlu0 %v3977, 32
        %v4074 = vpop.permute.xlu0 %4073
        %4075 = vrot.lane.b32.xlu0 %v3978, 32
        %v4076 = vpop.permute.xlu0 %4075
        %4077 = vrot.lane.b32.xlu0 %v3979, 32
        %v4078 = vpop.permute.xlu0 %4077
        %4079 = vrot.lane.b32.xlu0 %v3980, 32
        %v4080 = vpop.permute.xlu0 %4079
        %4081 = vrot.lane.b32.xlu0 %v3981, 32
        %v4082 = vpop.permute.xlu0 %4081
        %4083 = vrot.lane.b32.xlu0 %v3982, 32
        %v4084 = vpop.permute.xlu0 %4083
        %4085 = vrot.lane.b32.xlu0 %v3983, 32
        %v4086 = vpop.permute.xlu0 %4085
        %4087 = vrot.lane.b32.xlu0 %v3984, 32
        %v4088 = vpop.permute.xlu0 %4087
        %4089 = vrot.lane.b32.xlu0 %v3985, 32
        %v4090 = vpop.permute.xlu0 %4089
        %4091 = vrot.lane.b32.xlu0 %v3986, 32
        %v4092 = vpop.permute.xlu0 %4091
        %4093 = vrot.lane.b32.xlu0 %v3987, 32
        %v4094 = vpop.permute.xlu0 %4093
        %4111 = vrot.lane.b32.xlu0 %v3913, 48
        %v4112 = vpop.permute.xlu0 %4111
        %4113 = vrot.lane.b32.xlu0 %v3914, 48
        %v4114 = vpop.permute.xlu0 %4113
        %4115 = vrot.lane.b32.xlu0 %v3915, 48
        %v4116 = vpop.permute.xlu0 %4115
        %4117 = vrot.lane.b32.xlu0 %v3916, 48
        %v4118 = vpop.permute.xlu0 %4117
        %4119 = vrot.lane.b32.xlu0 %v3917, 48
        %v4120 = vpop.permute.xlu0 %4119
        %4121 = vrot.lane.b32.xlu0 %v3918, 48
        %v4122 = vpop.permute.xlu0 %4121
        %4123 = vrot.lane.b32.xlu0 %v3919, 48
        %v4124 = vpop.permute.xlu0 %4123
        %4125 = vrot.lane.b32.xlu0 %v3920, 48
        %v4126 = vpop.permute.xlu0 %4125
        %4127 = vrot.lane.b32.xlu0 %v3921, 48
        %v4128 = vpop.permute.xlu0 %4127
        %4129 = vrot.lane.b32.xlu0 %v3922, 48
        %v4130 = vpop.permute.xlu0 %4129
        %4131 = vrot.lane.b32.xlu0 %v3923, 48
        %v4132 = vpop.permute.xlu0 %4131
        %4133 = vrot.lane.b32.xlu0 %v3924, 48
        %v4134 = vpop.permute.xlu0 %4133
        %4135 = vrot.lane.b32.xlu0 %v3925, 48
        %v4136 = vpop.permute.xlu0 %4135
        %4137 = vrot.lane.b32.xlu0 %v3926, 48
        %v4138 = vpop.permute.xlu0 %4137
        %4139 = vrot.lane.b32.xlu0 %v3927, 48
        %v4140 = vpop.permute.xlu0 %4139
        %4141 = vrot.lane.b32.xlu0 %v3996, 48
        %v4142 = vpop.permute.xlu0 %4141
        %4144 = vrot.lane.b32.xlu0 %v3777, 64
        %v4145 = vpop.permute.xlu0 %4144
        %4146 = vrot.lane.b32.xlu0 %v3778, 64
        %v4147 = vpop.permute.xlu0 %4146
        %4148 = vrot.lane.b32.xlu0 %v3779, 64
        %v4149 = vpop.permute.xlu0 %4148
        %4150 = vrot.lane.b32.xlu0 %v3780, 64
        %v4151 = vpop.permute.xlu0 %4150
        %4152 = vrot.lane.b32.xlu0 %v3781, 64
        %v4153 = vpop.permute.xlu0 %4152
        %4154 = vrot.lane.b32.xlu0 %v3782, 64
        %v4155 = vpop.permute.xlu0 %4154
        %4156 = vrot.lane.b32.xlu0 %v3783, 64
        %v4157 = vpop.permute.xlu0 %4156
        %4158 = vrot.lane.b32.xlu0 %v3784, 64
        %v4159 = vpop.permute.xlu0 %4158
        %4160 = vrot.lane.b32.xlu0 %v3785, 64
        %v4161 = vpop.permute.xlu0 %4160
        %4162 = vrot.lane.b32.xlu0 %v3786, 64
        %v4163 = vpop.permute.xlu0 %4162
        %4164 = vrot.lane.b32.xlu0 %v3787, 64
        %v4165 = vpop.permute.xlu0 %4164
        %4166 = vrot.lane.b32.xlu0 %v3788, 64
        %v4167 = vpop.permute.xlu0 %4166
        %4168 = vrot.lane.b32.xlu0 %v3789, 64
        %v4169 = vpop.permute.xlu0 %4168
        %4170 = vrot.lane.b32.xlu0 %v3790, 64
        %v4171 = vpop.permute.xlu0 %4170
        %4172 = vrot.lane.b32.xlu0 %v3791, 64
        %v4173 = vpop.permute.xlu0 %4172
        %4174 = vrot.lane.b32.xlu0 %v3792, 64
        %v4175 = vpop.permute.xlu0 %4174
        %4177 = vrot.lane.b32.xlu0 %v3973, 80
        %v4178 = vpop.permute.xlu0 %4177
        %4179 = vrot.lane.b32.xlu0 %v3974, 80
        %v4180 = vpop.permute.xlu0 %4179
        %4181 = vrot.lane.b32.xlu0 %v3975, 80
        %v4182 = vpop.permute.xlu0 %4181
        %4183 = vrot.lane.b32.xlu0 %v3976, 80
        %v4184 = vpop.permute.xlu0 %4183
        %4185 = vrot.lane.b32.xlu0 %v3977, 80
        %v4186 = vpop.permute.xlu0 %4185
        %4187 = vrot.lane.b32.xlu0 %v3978, 80
        %v4188 = vpop.permute.xlu0 %4187
        %4189 = vrot.lane.b32.xlu0 %v3979, 80
        %v4190 = vpop.permute.xlu0 %4189
        %4191 = vrot.lane.b32.xlu0 %v3980, 80
        %v4192 = vpop.permute.xlu0 %4191
        %4193 = vrot.lane.b32.xlu0 %v3981, 80
        %v4194 = vpop.permute.xlu0 %4193
        %4195 = vrot.lane.b32.xlu0 %v3982, 80
        %v4196 = vpop.permute.xlu0 %4195
        %4197 = vrot.lane.b32.xlu0 %v3983, 80
        %v4198 = vpop.permute.xlu0 %4197
        %4199 = vrot.lane.b32.xlu0 %v3984, 80
        %v4200 = vpop.permute.xlu0 %4199
        %4201 = vrot.lane.b32.xlu0 %v3985, 80
        %v4202 = vpop.permute.xlu0 %4201
        %4203 = vrot.lane.b32.xlu0 %v3986, 80
        %v4204 = vpop.permute.xlu0 %4203
        %4205 = vrot.lane.b32.xlu0 %v3987, 80
        %v4206 = vpop.permute.xlu0 %4205
        %4207 = vrot.lane.b32.xlu0 %v4000, 80
        %v4208 = vpop.permute.xlu0 %4207
        %4210 = vrot.lane.b32.xlu0 %v3914, 96
        %v4211 = vpop.permute.xlu0 %4210
        %4212 = vrot.lane.b32.xlu0 %v3915, 96
        %v4213 = vpop.permute.xlu0 %4212
        %4214 = vrot.lane.b32.xlu0 %v3916, 96
        %v4215 = vpop.permute.xlu0 %4214
        %4216 = vrot.lane.b32.xlu0 %v3917, 96
        %v4217 = vpop.permute.xlu0 %4216
        %4218 = vrot.lane.b32.xlu0 %v3918, 96
        %v4219 = vpop.permute.xlu0 %4218
        %4220 = vrot.lane.b32.xlu0 %v3919, 96
        %v4221 = vpop.permute.xlu0 %4220
        %4222 = vrot.lane.b32.xlu0 %v3920, 96
        %v4223 = vpop.permute.xlu0 %4222
        %4224 = vrot.lane.b32.xlu0 %v3921, 96
        %v4225 = vpop.permute.xlu0 %4224
        %4226 = vrot.lane.b32.xlu0 %v3922, 96
        %v4227 = vpop.permute.xlu0 %4226
        %4228 = vrot.lane.b32.xlu0 %v3923, 96
        %v4229 = vpop.permute.xlu0 %4228
        %4230 = vrot.lane.b32.xlu0 %v3924, 96
        %v4231 = vpop.permute.xlu0 %4230
        %4232 = vrot.lane.b32.xlu0 %v3925, 96
        %v4233 = vpop.permute.xlu0 %4232
        %4234 = vrot.lane.b32.xlu0 %v3926, 96
        %v4235 = vpop.permute.xlu0 %4234
        %4236 = vrot.lane.b32.xlu0 %v3927, 96
        %v4237 = vpop.permute.xlu0 %4236
        %4238 = vrot.lane.b32.xlu0 %v3996, 96
        %v4239 = vpop.permute.xlu0 %4238
        %4240 = vrot.lane.b32.xlu0 %v507, 96
        %v4241 = vpop.permute.xlu0 %4240
        %4242 = vrot.lane.b32.xlu0 %v3778, 112
        %v4243 = vpop.permute.xlu0 %4242
        %4244 = vrot.lane.b32.xlu0 %v3779, 112
        %v4245 = vpop.permute.xlu0 %4244
        %4246 = vrot.lane.b32.xlu0 %v3780, 112
        %v4247 = vpop.permute.xlu0 %4246
        %4248 = vrot.lane.b32.xlu0 %v3781, 112
        %v4249 = vpop.permute.xlu0 %4248
        %4250 = vrot.lane.b32.xlu0 %v3782, 112
        %v4251 = vpop.permute.xlu0 %4250
        %4252 = vrot.lane.b32.xlu0 %v3783, 112
        %v4253 = vpop.permute.xlu0 %4252
        %4254 = vrot.lane.b32.xlu0 %v3784, 112
        %v4255 = vpop.permute.xlu0 %4254
        %4256 = vrot.lane.b32.xlu0 %v3785, 112
        %v4257 = vpop.permute.xlu0 %4256
        %4258 = vrot.lane.b32.xlu0 %v3786, 112
        %v4259 = vpop.permute.xlu0 %4258
        %4260 = vrot.lane.b32.xlu0 %v3787, 112
        %v4261 = vpop.permute.xlu0 %4260
        %4262 = vrot.lane.b32.xlu0 %v3788, 112
        %v4263 = vpop.permute.xlu0 %4262
        %4264 = vrot.lane.b32.xlu0 %v3789, 112
        %v4265 = vpop.permute.xlu0 %4264
        %4266 = vrot.lane.b32.xlu0 %v3790, 112
        %v4267 = vpop.permute.xlu0 %4266
        %4268 = vrot.lane.b32.xlu0 %v3791, 112
        %v4269 = vpop.permute.xlu0 %4268
        %4270 = vrot.lane.b32.xlu0 %v3792, 112
        %v4271 = vpop.permute.xlu0 %4270
        %4272 = vrot.lane.b32.xlu0 0, 112
        %v4273 = vpop.permute.xlu0 %4272
        %v4275 = vsel %vm1524, %v507, %v4017
        %v4278 = vsel %vm1524, %v3913, %v4019
        %v4281 = vsel %vm1524, %v3914, %v4021
        %v4284 = vsel %vm1524, %v3915, %v4023
        %v4287 = vsel %vm1524, %v3916, %v4025
        %v4290 = vsel %vm1524, %v3917, %v4027
        %v4293 = vsel %vm1524, %v3918, %v4029
        %v4296 = vsel %vm1524, %v3919, %v4031
        %v4299 = vsel %vm1524, %v3920, %v4033
        %v4302 = vsel %vm1524, %v3921, %v4035
        %v4305 = vsel %vm1524, %v3922, %v4037
        %v4308 = vsel %vm1524, %v3923, %v4039
        %v4311 = vsel %vm1524, %v3924, %v4041
        %v4314 = vsel %vm1524, %v3925, %v4043
        %v4317 = vsel %vm1524, %v3926, %v4045
        %v4320 = vsel %vm1524, %v3927, %v4047
        %vm4321 = vcmask 261120
        %v4323 = vsel %vm4321, %v4275, %v4064
        %v4325 = vsel %vm4321, %v4278, %v4066
        %v4327 = vsel %vm4321, %v4281, %v4068
        %v4329 = vsel %vm4321, %v4284, %v4070
        %v4331 = vsel %vm4321, %v4287, %v4072
        %v4333 = vsel %vm4321, %v4290, %v4074
        %v4335 = vsel %vm4321, %v4293, %v4076
        %v4337 = vsel %vm4321, %v4296, %v4078
        %v4339 = vsel %vm4321, %v4299, %v4080
        %v4341 = vsel %vm4321, %v4302, %v4082
        %v4343 = vsel %vm4321, %v4305, %v4084
        %v4345 = vsel %vm4321, %v4308, %v4086
        %v4347 = vsel %vm4321, %v4311, %v4088
        %v4349 = vsel %vm4321, %v4314, %v4090
        %v4351 = vsel %vm4321, %v4317, %v4092
        %v4353 = vsel %vm4321, %v4320, %v4094
        %v4355 = vsel %vm1162, %v4323, %v4112
        %v4357 = vsel %vm1162, %v4325, %v4114
        %v4359 = vsel %vm1162, %v4327, %v4116
        %v4361 = vsel %vm1162, %v4329, %v4118
        %v4363 = vsel %vm1162, %v4331, %v4120
        %v4365 = vsel %vm1162, %v4333, %v4122
        %v4367 = vsel %vm1162, %v4335, %v4124
        %v4369 = vsel %vm1162, %v4337, %v4126
        %v4371 = vsel %vm1162, %v4339, %v4128
        %v4373 = vsel %vm1162, %v4341, %v4130
        %v4375 = vsel %vm1162, %v4343, %v4132
        %v4377 = vsel %vm1162, %v4345, %v4134
        %v4379 = vsel %vm1162, %v4347, %v4136
        %v4381 = vsel %vm1162, %v4349, %v4138
        %v4383 = vsel %vm1162, %v4351, %v4140
        %v4385 = vsel %vm1162, %v4353, %v4142
        %vm4386 = vcmask 523264
        %v4388 = vsel %vm4386, %v4355, %v4145
        %v4390 = vsel %vm4386, %v4357, %v4147
        %v4392 = vsel %vm4386, %v4359, %v4149
        %v4394 = vsel %vm4386, %v4361, %v4151
        %v4396 = vsel %vm4386, %v4363, %v4153
        %v4398 = vsel %vm4386, %v4365, %v4155
        %v4400 = vsel %vm4386, %v4367, %v4157
        %v4402 = vsel %vm4386, %v4369, %v4159
        %v4404 = vsel %vm4386, %v4371, %v4161
        %v4406 = vsel %vm4386, %v4373, %v4163
        %v4408 = vsel %vm4386, %v4375, %v4165
        %v4410 = vsel %vm4386, %v4377, %v4167
        %v4412 = vsel %vm4386, %v4379, %v4169
        %v4414 = vsel %vm4386, %v4381, %v4171
        %v4416 = vsel %vm4386, %v4383, %v4173
        %v4418 = vsel %vm4386, %v4385, %v4175
        %vm4419 = vcmask 654336
        %v4421 = vsel %vm4419, %v4388, %v4178
        %v4423 = vsel %vm4419, %v4390, %v4180
        %v4425 = vsel %vm4419, %v4392, %v4182
        %v4427 = vsel %vm4419, %v4394, %v4184
        %v4429 = vsel %vm4419, %v4396, %v4186
        %v4431 = vsel %vm4419, %v4398, %v4188
        %v4433 = vsel %vm4419, %v4400, %v4190
        %v4435 = vsel %vm4419, %v4402, %v4192
        %v4437 = vsel %vm4419, %v4404, %v4194
        %v4439 = vsel %vm4419, %v4406, %v4196
        %v4441 = vsel %vm4419, %v4408, %v4198
        %v4443 = vsel %vm4419, %v4410, %v4200
        %v4445 = vsel %vm4419, %v4412, %v4202
        %v4447 = vsel %vm4419, %v4414, %v4204
        %v4449 = vsel %vm4419, %v4416, %v4206
        %v4451 = vsel %vm4419, %v4418, %v4208
        %vm4452 = vcmask 785408
        %v4454 = vsel %vm4452, %v4421, %v4211
        %v4456 = vsel %vm4452, %v4423, %v4213
        %v4458 = vsel %vm4452, %v4425, %v4215
        %v4460 = vsel %vm4452, %v4427, %v4217
        %v4462 = vsel %vm4452, %v4429, %v4219
        %v4464 = vsel %vm4452, %v4431, %v4221
        %v4466 = vsel %vm4452, %v4433, %v4223
        %v4468 = vsel %vm4452, %v4435, %v4225
        %v4470 = vsel %vm4452, %v4437, %v4227
        %v4472 = vsel %vm4452, %v4439, %v4229
        %v4474 = vsel %vm4452, %v4441, %v4231
        %v4476 = vsel %vm4452, %v4443, %v4233
        %v4478 = vsel %vm4452, %v4445, %v4235
        %v4480 = vsel %vm4452, %v4447, %v4237
        %v4482 = vsel %vm4452, %v4449, %v4239
        %v4484 = vsel %vm4452, %v4451, %v4241
        %vm4485 = vcmask 916480
        %v4487 = vsel %vm4485, %v4454, %v4243
        %v4490 = vsel %vm4485, %v4456, %v4245
        %v4493 = vsel %vm4485, %v4458, %v4247
        %v4496 = vsel %vm4485, %v4460, %v4249
        %v4499 = vsel %vm4485, %v4462, %v4251
        %v4502 = vsel %vm4485, %v4464, %v4253
        %v4505 = vsel %vm4485, %v4466, %v4255
        %v4508 = vsel %vm4485, %v4468, %v4257
        %v4511 = vsel %vm4485, %v4470, %v4259
        %v4514 = vsel %vm4485, %v4472, %v4261
        %v4517 = vsel %vm4485, %v4474, %v4263
        %v4520 = vsel %vm4485, %v4476, %v4265
        %v4523 = vsel %vm4485, %v4478, %v4267
        %v4526 = vsel %vm4485, %v4480, %v4269
        %v4529 = vsel %vm4485, %v4482, %v4271
        %v4532 = vsel %vm4485, %v4484, %v4273
        %v4534 = vld [vmem:[%s4] sm:$0xf]
        %v4535 = vld [vmem:[%s4 + $0x4] sm:$0xf]
        %v4536 = vld [vmem:[%s4 + $0x8] sm:$0xf]
        %v4537 = vld [vmem:[%s4 + $0xc] sm:$0xf]
        %v4538 = vld [vmem:[%s4 + $0x10] sm:$0xf]
        %v4539 = vld [vmem:[%s4 + $0x14] sm:$0xf]
        %v4540 = vld [vmem:[%s4 + $0x18] sm:$0xf]
        %v4541 = vld [vmem:[%s4 + $0x1c] sm:$0xf]
        %v4542 = vld [vmem:[%s4 + $0x20] sm:$0xf]
        %v4543 = vld [vmem:[%s4 + $0x24] sm:$0xf]
        %v4544 = vld [vmem:[%s4 + $0x28] sm:$0xf]
        %v4545 = vld [vmem:[%s4 + $0x2c] sm:$0xf]
        %v4546 = vld [vmem:[%s4 + $0x30] sm:$0xf]
        %v4547 = vld [vmem:[%s4 + $0x34] sm:$0xf]
        %v4548 = vld [vmem:[%s4 + $0x38] sm:$0xf]
        %v4549 = vld [vmem:[%s4 + $0x3c] sm:$0xf]
        %v4550 = vld [vmem:[%s4 + $0x40] sm:$0xf]
        %v4551 = vld [vmem:[%s4 + $0x44] sm:$0xf]
        %v4552 = vld [vmem:[%s5] sm:$0x1]
        %v4554 = vlaneseq
        %v4555 = vshrl.u32 %v4554, 7
        %v4556 = vsub.s32 0, %v4555
        %v4557 = vrot.slane %v4552, %v4556
        %v4577 = vunpack.c.l.b16 %v4534
        %v4578 = vunpack.c.l.b16 %v4535
        %v4579 = vunpack.c.l.b16 %v4536
        %v4580 = vunpack.c.l.b16 %v4537
        %v4581 = vunpack.c.l.b16 %v4538
        %v4582 = vunpack.c.l.b16 %v4539
        %v4583 = vunpack.c.l.b16 %v4540
        %v4584 = vunpack.c.l.b16 %v4541
        %v4585 = vunpack.c.l.b16 %v4542
        %v4586 = vunpack.c.l.b16 %v4543
        %v4587 = vunpack.c.l.b16 %v4544
        %v4588 = vunpack.c.l.b16 %v4545
        %v4589 = vunpack.c.l.b16 %v4546
        %v4590 = vunpack.c.l.b16 %v4547
        %v4591 = vunpack.c.l.b16 %v4548
        %v4592 = vunpack.c.l.b16 %v4549
        %v4593 = vunpack.c.l.b16 %v4550
        %v4594 = vunpack.c.l.b16 %v4551
        %v4595 = vpack.c.b16 %v4578, %v4577
        %v4596 = vpack.c.b16 %v4580, %v4579
        %v4597 = vpack.c.b16 %v4582, %v4581
        %v4598 = vpack.c.b16 %v4584, %v4583
        %v4599 = vpack.c.b16 %v4586, %v4585
        %v4600 = vpack.c.b16 %v4588, %v4587
        %v4601 = vpack.c.b16 %v4590, %v4589
        %v4602 = vpack.c.b16 %v4592, %v4591
        %v4603 = vpack.c.b16 %v4594, %v4593
        %v4614 = vsel %vm1524, %v3974, 0
        %v4617 = vsel %vm1524, %v3975, 0
        %v4620 = vsel %vm1524, %v3976, 0
        %v4623 = vsel %vm1524, %v3977, 0
        %v4626 = vsel %vm1524, %v3978, 0
        %v4629 = vsel %vm1524, %v3979, 0
        %v4632 = vsel %vm1524, %v3980, 0
        %v4635 = vsel %vm1524, %v3981, 0
        %v4638 = vsel %vm1524, %v3982, 0
        %v4641 = vsel %vm1524, %v3983, 0
        %v4644 = vsel %vm1524, %v3984, 0
        %v4647 = vsel %vm1524, %v3985, 0
        %v4650 = vsel %vm1524, %v3986, 0
        %v4653 = vsel %vm1524, %v3987, 0
        %v4656 = vsel %vm1524, %v4000, 0
        %v4659 = vsel %vm1524, %v574, 0
        %4661 = vmatprep.subr.bf16.mxu0 0
        %4662 = vmatpush1.bf16.msra.mxu0 %v4595
        %4663 = vmatprep.subr.bf16.mxu0 0
        %4664 = vmatpush1.bf16.msra.mxu0 %v4596
        %4665 = vmatprep.subr.bf16.mxu0 0
        %4666 = vmatpush1.bf16.msra.mxu0 %v4597
        %4667 = vmatprep.subr.bf16.mxu0 0
        %4668 = vmatpush1.bf16.msra.mxu0 %v4598
        %4669 = vmatprep.subr.bf16.mxu0 0
        %4670 = vmatpush1.bf16.msra.mxu0 %v4599
        %4671 = vmatprep.subr.bf16.mxu0 0
        %4672 = vmatpush1.bf16.msra.mxu0 %v4600
        %4673 = vmatprep.subr.bf16.mxu0 0
        %4674 = vmatpush1.bf16.msra.mxu0 %v4601
        %4675 = vmatprep.subr.bf16.mxu0 0
        %4676 = vmatpush1.bf16.msra.mxu0 %v4602
        %4677 = vmatprep.subr.bf16.mxu0 0
        %4678 = vmatpush1.bf16.msra.mxu0 %v4603
        %4679 = vmatprep.subr.bf16.mxu0 0
        %4680 = vmatpush1.bf16.msra.mxu0 0
        %4681 = vmatprep.subr.bf16.mxu0 0
        %4682 = vmatpush1.bf16.msra.mxu0 0
        %4683 = vmatprep.subr.bf16.mxu0 0
        %4684 = vmatpush1.bf16.msra.mxu0 0
        %4685 = vmatprep.subr.bf16.mxu0 0
        %4686 = vmatpush1.bf16.msra.mxu0 0
        %4687 = vmatprep.subr.bf16.mxu0 0
        %4688 = vmatpush1.bf16.msra.mxu0 0
        %4689 = vmatprep.subr.bf16.mxu0 0
        %4690 = vmatpush1.bf16.msra.mxu0 0
        %4691 = vmatprep.subr.bf16.mxu0 0
        %4692 = vmatpush1.bf16.msra.mxu0 0
        %4693 = vmatprep.mubr.bf16.mxu0 %v4614
        %4694 = vmatmul.mubr.bf16.gmra.mrb[0].mxu0 %v4487
        %v4695 = vpop.f32.mrb[0].mxu0
        %v4696 = vadd.f32 %v4557, %v4695
        %v4697 = vpop.f32.mrb[0].mxu0
        %v4698 = vpop.f32.mrb[0].mxu0
        %v4699 = vadd.f32 %v4557, %v4698
        %v4700 = vpop.f32.mrb[0].mxu0
        %4701 = vmatprep.mubr.bf16.mxu0 %v4617
        %4702 = vmatmul.mubr.bf16.gmra.mrb[0].mxu0 %v4490
        %v4703 = vpop.f32.mrb[0].mxu0
        %v4704 = vadd.f32 %v4557, %v4703
        %v4705 = vpop.f32.mrb[0].mxu0
        %v4706 = vpop.f32.mrb[0].mxu0
        %v4707 = vadd.f32 %v4557, %v4706
        %v4708 = vpop.f32.mrb[0].mxu0
        %4709 = vmatprep.mubr.bf16.mxu0 %v4620
        %4710 = vmatmul.mubr.bf16.gmra.mrb[0].mxu0 %v4493
        %v4711 = vpop.f32.mrb[0].mxu0
        %v4712 = vadd.f32 %v4557, %v4711
        %v4713 = vpop.f32.mrb[0].mxu0
        %v4714 = vpop.f32.mrb[0].mxu0
        %v4715 = vadd.f32 %v4557, %v4714
        %v4716 = vpop.f32.mrb[0].mxu0
        %4717 = vmatprep.mubr.bf16.mxu0 %v4623
        %4718 = vmatmul.mubr.bf16.gmra.mrb[0].mxu0 %v4496
        %v4719 = vpop.f32.mrb[0].mxu0
        %v4720 = vadd.f32 %v4557, %v4719
        %v4721 = vpop.f32.mrb[0].mxu0
        %v4722 = vpop.f32.mrb[0].mxu0
        %v4723 = vadd.f32 %v4557, %v4722
        %v4724 = vpop.f32.mrb[0].mxu0
        %4725 = vmatprep.mubr.bf16.mxu0 %v4626
        %4726 = vmatmul.mubr.bf16.gmra.mrb[0].mxu0 %v4499
        %v4727 = vpop.f32.mrb[0].mxu0
        %v4728 = vadd.f32 %v4557, %v4727
        %v4729 = vpop.f32.mrb[0].mxu0
        %v4730 = vpop.f32.mrb[0].mxu0
        %v4731 = vadd.f32 %v4557, %v4730
        %v4732 = vpop.f32.mrb[0].mxu0
        %4733 = vmatprep.mubr.bf16.mxu0 %v4629
        %4734 = vmatmul.mubr.bf16.gmra.mrb[0].mxu0 %v4502
        %v4735 = vpop.f32.mrb[0].mxu0
        %v4736 = vadd.f32 %v4557, %v4735
        %v4737 = vpop.f32.mrb[0].mxu0
        %v4738 = vpop.f32.mrb[0].mxu0
        %v4739 = vadd.f32 %v4557, %v4738
        %v4740 = vpop.f32.mrb[0].mxu0
        %4741 = vmatprep.mubr.bf16.mxu0 %v4632
        %4742 = vmatmul.mubr.bf16.gmra.mrb[0].mxu0 %v4505
        %v4743 = vpop.f32.mrb[0].mxu0
        %v4744 = vadd.f32 %v4557, %v4743
        %v4745 = vpop.f32.mrb[0].mxu0
        %v4746 = vpop.f32.mrb[0].mxu0
        %v4747 = vadd.f32 %v4557, %v4746
        %v4748 = vpop.f32.mrb[0].mxu0
        %4749 = vmatprep.mubr.bf16.mxu0 %v4635
        %4750 = vmatmul.mubr.bf16.gmra.mrb[0].mxu0 %v4508
        %v4751 = vpop.f32.mrb[0].mxu0
        %v4752 = vadd.f32 %v4557, %v4751
        %v4753 = vpop.f32.mrb[0].mxu0
        %v4754 = vpop.f32.mrb[0].mxu0
        %v4755 = vadd.f32 %v4557, %v4754
        %v4756 = vpop.f32.mrb[0].mxu0
        %4757 = vmatprep.mubr.bf16.mxu0 %v4638
        %4758 = vmatmul.mubr.bf16.gmra.mrb[0].mxu0 %v4511
        %v4759 = vpop.f32.mrb[0].mxu0
        %v4760 = vadd.f32 %v4557, %v4759
        %v4761 = vpop.f32.mrb[0].mxu0
        %v4762 = vpop.f32.mrb[0].mxu0
        %v4763 = vadd.f32 %v4557, %v4762
        %v4764 = vpop.f32.mrb[0].mxu0
        %4765 = vmatprep.mubr.bf16.mxu0 %v4641
        %4766 = vmatmul.mubr.bf16.gmra.mrb[0].mxu0 %v4514
        %v4767 = vpop.f32.mrb[0].mxu0
        %v4768 = vadd.f32 %v4557, %v4767
        %v4769 = vpop.f32.mrb[0].mxu0
        %v4770 = vpop.f32.mrb[0].mxu0
        %v4771 = vadd.f32 %v4557, %v4770
        %v4772 = vpop.f32.mrb[0].mxu0
        %4773 = vmatprep.mubr.bf16.mxu0 %v4644
        %4774 = vmatmul.mubr.bf16.gmra.mrb[0].mxu0 %v4517
        %v4775 = vpop.f32.mrb[0].mxu0
        %v4776 = vadd.f32 %v4557, %v4775
        %v4777 = vpop.f32.mrb[0].mxu0
        %v4778 = vpop.f32.mrb[0].mxu0
        %v4779 = vadd.f32 %v4557, %v4778
        %v4780 = vpop.f32.mrb[0].mxu0
        %4781 = vmatprep.mubr.bf16.mxu0 %v4647
        %4782 = vmatmul.mubr.bf16.gmra.mrb[0].mxu0 %v4520
        %v4783 = vpop.f32.mrb[0].mxu0
        %v4784 = vadd.f32 %v4557, %v4783
        %v4785 = vpop.f32.mrb[0].mxu0
        %v4786 = vpop.f32.mrb[0].mxu0
        %v4787 = vadd.f32 %v4557, %v4786
        %v4788 = vpop.f32.mrb[0].mxu0
        %4789 = vmatprep.mubr.bf16.mxu0 %v4650
        %4790 = vmatmul.mubr.bf16.gmra.mrb[0].mxu0 %v4523
        %v4791 = vpop.f32.mrb[0].mxu0
        %v4792 = vadd.f32 %v4557, %v4791
        %v4793 = vpop.f32.mrb[0].mxu0
        %v4794 = vpop.f32.mrb[0].mxu0
        %v4795 = vadd.f32 %v4557, %v4794
        %v4796 = vpop.f32.mrb[0].mxu0
        %4797 = vmatprep.mubr.bf16.mxu0 %v4653
        %4798 = vmatmul.mubr.bf16.gmra.mrb[0].mxu0 %v4526
        %v4799 = vpop.f32.mrb[0].mxu0
        %v4800 = vadd.f32 %v4557, %v4799
        %v4801 = vpop.f32.mrb[0].mxu0
        %v4802 = vpop.f32.mrb[0].mxu0
        %v4803 = vadd.f32 %v4557, %v4802
        %v4804 = vpop.f32.mrb[0].mxu0
        %4805 = vmatprep.mubr.bf16.mxu0 %v4656
        %4806 = vmatmul.mubr.bf16.gmra.mrb[0].mxu0 %v4529
        %v4807 = vpop.f32.mrb[0].mxu0
        %v4808 = vadd.f32 %v4557, %v4807
        %v4809 = vpop.f32.mrb[0].mxu0
        %v4810 = vpop.f32.mrb[0].mxu0
        %v4811 = vadd.f32 %v4557, %v4810
        %v4812 = vpop.f32.mrb[0].mxu0
        %4813 = vmatprep.mubr.bf16.mxu0 %v4659
        %4814 = vmatmul.mubr.bf16.gmra.mrb[0].mxu0 %v4532
        %v4815 = vpop.f32.mrb[0].mxu0
        %v4816 = vadd.f32 %v4557, %v4815
        %v4817 = vpop.f32.mrb[0].mxu0
        %v4818 = vpop.f32.mrb[0].mxu0
        %v4819 = vadd.f32 %v4557, %v4818
        %v4820 = vpop.f32.mrb[0].mxu0
        %4821 = vdwg.mxu0
        %vm4822 = vcmask 23552
        %4823 = vst.msk [vmem:[%s267] sm:$0xff] %vm4822, %v4696
        %4824 = vst.msk [vmem:[%s267 + $0x8] sm:$0xff] %vm4822, %v4699
        %4825 = vst.msk [vmem:[%s267 + $0x10] sm:$0xff] %vm4822, %v4704
        %4826 = vst.msk [vmem:[%s267 + $0x18] sm:$0xff] %vm4822, %v4707
        %4827 = vst.msk [vmem:[%s267 + $0x20] sm:$0xff] %vm4822, %v4712
        %4828 = vst.msk [vmem:[%s267 + $0x28] sm:$0xff] %vm4822, %v4715
        %4829 = vst.msk [vmem:[%s267 + $0x30] sm:$0xff] %vm4822, %v4720
        %4830 = vst.msk [vmem:[%s267 + $0x38] sm:$0xff] %vm4822, %v4723
        %4831 = vst.msk [vmem:[%s267 + $0x40] sm:$0xff] %vm4822, %v4728
        %4832 = vst.msk [vmem:[%s267 + $0x48] sm:$0xff] %vm4822, %v4731
        %4833 = vst.msk [vmem:[%s267 + $0x50] sm:$0xff] %vm4822, %v4736
        %4834 = vst.msk [vmem:[%s267 + $0x58] sm:$0xff] %vm4822, %v4739
        %4835 = vst.msk [vmem:[%s267 + $0x60] sm:$0xff] %vm4822, %v4744
        %4836 = vst.msk [vmem:[%s267 + $0x68] sm:$0xff] %vm4822, %v4747
        %4837 = vst.msk [vmem:[%s267 + $0x70] sm:$0xff] %vm4822, %v4752
        %4838 = vst.msk [vmem:[%s267 + $0x78] sm:$0xff] %vm4822, %v4755
        %4839 = vst.msk [vmem:[%s267 + $0x80] sm:$0xff] %vm4822, %v4760
        %4840 = vst.msk [vmem:[%s267 + $0x88] sm:$0xff] %vm4822, %v4763
        %4841 = vst.msk [vmem:[%s267 + $0x90] sm:$0xff] %vm4822, %v4768
        %4842 = vst.msk [vmem:[%s267 + $0x98] sm:$0xff] %vm4822, %v4771
        %4843 = vst.msk [vmem:[%s267 + $0xa0] sm:$0xff] %vm4822, %v4776
        %4844 = vst.msk [vmem:[%s267 + $0xa8] sm:$0xff] %vm4822, %v4779
        %4845 = vst.msk [vmem:[%s267 + $0xb0] sm:$0xff] %vm4822, %v4784
        %4846 = vst.msk [vmem:[%s267 + $0xb8] sm:$0xff] %vm4822, %v4787
        %4847 = vst.msk [vmem:[%s267 + $0xc0] sm:$0xff] %vm4822, %v4792
        %4848 = vst.msk [vmem:[%s267 + $0xc8] sm:$0xff] %vm4822, %v4795
        %4849 = vst.msk [vmem:[%s267 + $0xd0] sm:$0xff] %vm4822, %v4800
        %4850 = vst.msk [vmem:[%s267 + $0xd8] sm:$0xff] %vm4822, %v4803
        %4851 = vst.msk [vmem:[%s267 + $0xe0] sm:$0xff] %vm4822, %v4808
        %4852 = vst.msk [vmem:[%s267 + $0xe8] sm:$0xff] %vm4822, %v4811
        %4853 = vst.msk [vmem:[%s267 + $0xf0] sm:$0xff] %vm4822, %v4816
        %4854 = vst.msk [vmem:[%s267 + $0xf8] sm:$0xff] %vm4822, %v4819
        %p4855 = scmp.lt.s32.totalorder %s18, 1
        %s4856 = scalar_select %p4855, %s18, 1
        %s4857 = smul.addr %s4856, 32
        %s4858 = smul.addr %s4857, 8
        %s4859 = scalar_lea.vmem %s6, %s4858
        // Predicated region
        $region49: #{tpu_custom_call.1} parent=43 // pred_check
          %p4860 = pneg %p167
        $region50: #{tpu_custom_call.1} parent=43 // pred_check_branch
          %4862 = sbr.rel (%p4860) target = $region52
        $region51: #{tpu_custom_call.1} parent=43 // pred_region
          _
        $region52: #{tpu_custom_call.1} parent=43 // pred_fallthru
          _
      $region44: #{tpu_custom_call.1} parent=5 // pred_fallthru
        _
      %p4863 = scmp.le.s32.totalorder 2, %s13
      // Predicated region
      $region53: #{tpu_custom_call.1} parent=5 // pred_check
        %p4864 = pneg %p4863
      $region54: #{tpu_custom_call.1} parent=5 // pred_check_branch
        %4866 = sbr.rel (%p4864) target = $region56
      $region55: #{tpu_custom_call.1} parent=5 // pred_region
        %s4867 = ssub.s32 %s13, 2
        // Predicated region
        $region57: #{tpu_custom_call.1} parent=55 // pred_check
          %p4868 = pneg %p173
        $region58: #{tpu_custom_call.1} parent=55 // pred_check_branch
          %4870 = sbr.rel (%p4868) target = $region60
        $region59: #{tpu_custom_call.1} parent=55 // pred_region
          %p4871 = scmp.lt.s32.totalorder %s19, 1
          %s4872 = scalar_select %p4871, %s19, 1
          %s4873 = smul.addr %s4872, 32
          %s4874 = smul.addr %s4873, 8
          %s4875 = scalar_lea.vmem %s6, %s4874
        $region60: #{tpu_custom_call.1} parent=55 // pred_fallthru
          _
      $region56: #{tpu_custom_call.1} parent=5 // pred_fallthru
        _
    $region6: #{tpu_custom_call.1} parent=1 // loop_footer
      %s17 = sadd.s32 1, %s13
    $region7: #{tpu_custom_call.1} parent=1 // loop_footer_branch
      %12 = sbr.rel target = $region3
    $region8: #{tpu_custom_call.1} parent=1 // loop_exit
      _
    %4876 = vsyncpa [#allocation3], 1
    %s4877 = scalar_lea.sflag [#allocation3], 1
    %4878 = vsyncpa %s4877, 1

</llo_original>
